<compile_context>
chip_gen: v5e
topology: v5e:2x2
jax: 0.10.0
libtpu: 0.0.40
codegen_flags: <defaults>
</compile_context>

<pallas_src>
import math
import numpy as np

import jax
import jax.numpy as jnp
from jax.experimental import pallas as pl
from jax.experimental.pallas import tpu as pltpu


# ---------------------------------------------------------------------------
# Static 0/1 gather matrix for a 3x3 / stride-2 / pad-1 conv (k-major rows).
# Row index = k * (h_out*w_out) + (oh*w_out + ow), k = kh*3 + kw.
# Rows whose tap lands in the zero-padding region are all-zero.
# ---------------------------------------------------------------------------
def _gather_matrix(h_in, w_in, ksize=3, stride=2, pad=1):
    h_out = (h_in + 2 * pad - ksize) // stride + 1
    w_out = (w_in + 2 * pad - ksize) // stride + 1
    r_out = h_out * w_out
    g = np.zeros((ksize * ksize * r_out, h_in * w_in), np.float32)
    for kh in range(ksize):
        for kw in range(ksize):
            k = kh * ksize + kw
            for oh in range(h_out):
                ih = oh * stride + kh - pad
                if not 0 <= ih < h_in:
                    continue
                for ow in range(w_out):
                    iw = ow * stride + kw - pad
                    if 0 <= iw < w_in:
                        g[k * r_out + oh * w_out + ow, ih * w_in + iw] = 1.0
    return g


# ---------------------------------------------------------------------------
# The fused trunk + heads kernel (one batch tile per grid step).
# ---------------------------------------------------------------------------
def _trunk_kernel(x_ref,
                  g1, w1, b1,
                  g2, w2, s2, b2,
                  g3, w3, s3, b3,
                  g4, w4, s4, b4,
                  wd, bd,
                  out_ref):
    nb_t = x_ref.shape[0]

    def conv_layer(acts, g_ref, w_ref, scale_ref, bias_ref):
        r_out = g_ref.shape[0] // 9
        cout = w_ref.shape[2]
        g = g_ref[...]                                  # (9*r_out, r_in) bf16 0/1
        bias = bias_ref[...]                            # (1, cout) f32
        scale = scale_ref[...] if scale_ref is not None else None
        outs = []
        for a in acts:                                  # a: (r_in, cin) bf16
            # im2col via gather matmul; entries are exact copies of `a`.
            p = jnp.dot(g, a, preferred_element_type=jnp.float32)
            p = p.astype(jnp.bfloat16)                  # (9*r_out, cin)
            y = jnp.zeros((r_out, cout), jnp.float32)
            for k in range(9):                          # per 3x3 tap weight matmul
                y = y + jnp.dot(p[k * r_out:(k + 1) * r_out, :], w_ref[k],
                                preferred_element_type=jnp.float32)
            # folded eval-mode BN (eps=0.8) + conv bias, then LeakyReLU(0.2)
            y = y * scale + bias if scale is not None else y + bias
            y = jnp.where(y >= 0.0, y, 0.2 * y)
            outs.append(y.astype(jnp.bfloat16))         # Dropout2d: identity (eval)
        return outs

    acts = [x_ref[n] for n in range(nb_t)]              # (H*W, C) per image
    acts = conv_layer(acts, g1, w1, None, b1)           # c1 (no BN, bias only)
    acts = conv_layer(acts, g2, w2, s2, b2)             # c2 + BN
    acts = conv_layer(acts, g3, w3, s3, b3)             # c3 + BN
    acts = conv_layer(acts, g4, w4, s4, b4)             # c4 + BN

    # Fused heads: wd is (r4, 128, 2) already permuted to NHWC row order.
    r4 = acts[0].shape[0]
    bias_d = bd[...]                                    # (1, 2) f32
    vals = []
    for a in acts:                                      # a: (r4, 128) bf16
        v = bias_d
        for r in range(r4):
            v = v + jnp.dot(a[r:r + 1, :], wd[r],
                            preferred_element_type=jnp.float32)
        vals.append(v)                                  # (1, 2) f32
    out_ref[0, :, :] = jnp.concatenate(vals, axis=0)


# ---------------------------------------------------------------------------
# Forward wrapper: layout prep, BN folding, head-weight permutation, pallas_call
# ---------------------------------------------------------------------------
def coupled_discriminators_forward(params, img1, img2):
    """img1, img2: NCHW float32 (like the PyTorch module). Returns (validity1, validity2)."""
    B, C, H, W = img1.shape
    nb = 2 * B                              # shared trunk runs once on [img1; img2]
    nb_t = nb // 2                          # 2-step "parallel" grid (v7x megacore)
    n_steps = nb // nb_t

    imgs = jnp.concatenate([img1, img2], axis=0)                    # (2B, C, H, W)
    x = jnp.transpose(imgs, (0, 2, 3, 1)).reshape(nb, H * W, C)     # NHWC rows
    x = x.astype(jnp.bfloat16)

    # Static conv geometry + gather matrices (trace-time numpy constants).
    spatial = []
    h, w_sp = H, W
    for _ in range(4):
        ho = (h + 2 - 3) // 2 + 1
        wo = (w_sp + 2 - 3) // 2 + 1
        spatial.append((h, w_sp, ho, wo))
        h, w_sp = ho, wo
    gmats = [jnp.asarray(_gather_matrix(hi, wi), dtype=jnp.bfloat16)
             for (hi, wi, _, _) in spatial]

    def conv_w(p):          # (cout, cin, 3, 3) -> (9, cin, cout), k = kh*3 + kw
        w = p["w"]
        return jnp.transpose(w, (2, 3, 1, 0)).reshape(
            9, w.shape[1], w.shape[0]).astype(jnp.bfloat16)

    def bn_fold(p):         # eval-mode BN; the positional 0.8 in BatchNorm2d is eps
        eps = 0.8
        scale = p["gamma"] / jnp.sqrt(p["running_var"] + eps)
        bias = p["beta"] + scale * (p["b"] - p["running_mean"])
        return (scale.reshape(1, -1).astype(jnp.float32),
                bias.reshape(1, -1).astype(jnp.float32))

    w1 = conv_w(params["c1"]); b1 = params["c1"]["b"].reshape(1, -1).astype(jnp.float32)
    w2 = conv_w(params["c2"]); s2, b2 = bn_fold(params["c2"])
    w3 = conv_w(params["c3"]); s3, b3 = bn_fold(params["c3"])
    w4 = conv_w(params["c4"]); s4, b4 = bn_fold(params["c4"])

    # Heads: permute D1/D2 weights from PyTorch NCHW-flatten order (c, h, w) to
    # our NHWC row order (h, w, c) -- weight-side permutation, NO feature transpose.
    r4 = spatial[-1][2] * spatial[-1][3]
    c4 = params["c4"]["w"].shape[0]
    def head_w(p):
        return p["w"].reshape(c4, r4).T                              # (r4, c4)
    wd = jnp.stack([head_w(params["D1"]), head_w(params["D2"])],
                   axis=-1).astype(jnp.bfloat16)                     # (r4, c4, 2)
    bd = jnp.stack([params["D1"]["b"], params["D2"]["b"]],
                   axis=-1).reshape(1, 2).astype(jnp.float32)

    consts = [gmats[0], w1, b1,
              gmats[1], w2, s2, b2,
              gmats[2], w3, s3, b3,
              gmats[3], w4, s4, b4,
              wd, bd]

    def const_spec(a):
        nd = a.ndim
        return pl.BlockSpec(a.shape, lambda i, nd=nd: (0,) * nd)

    out = pl.pallas_call(
        _trunk_kernel,
        out_shape=jax.ShapeDtypeStruct((n_steps, nb_t, 2), jnp.float32),
        grid=(n_steps,),
        in_specs=[pl.BlockSpec((nb_t, H * W, C), lambda i: (i, 0, 0))]
                 + [const_spec(a) for a in consts],
        out_specs=pl.BlockSpec((1, nb_t, 2), lambda i: (i, 0, 0)),
        compiler_params=pltpu.CompilerParams(
            dimension_semantics=("parallel",)),
    )(x, *consts)

    out = out.reshape(nb, 2)
    validity1 = out[:B, 0:1]        # img1 features through D1
    validity2 = out[B:, 1:2]        # img2 features through D2
    return validity1, validity2


# ---------------------------------------------------------------------------
# Pure-JAX f32 reference (same eval-mode semantics), parameter init, demo main
# ---------------------------------------------------------------------------
def _reference_forward(params, img1, img2):
    def block(x, p, bn):
        y = jax.lax.conv_general_dilated(
            x, p["w"], window_strides=(2, 2), padding=((1, 1), (1, 1)),
            dimension_numbers=("NCHW", "OIHW", "NCHW"))
        y = y + p["b"].reshape(1, -1, 1, 1)
        if bn:
            eps = 0.8
            y = (y - p["running_mean"].reshape(1, -1, 1, 1)) / jnp.sqrt(
                p["running_var"].reshape(1, -1, 1, 1) + eps)
            y = y * p["gamma"].reshape(1, -1, 1, 1) + p["beta"].reshape(1, -1, 1, 1)
        return jnp.where(y >= 0.0, y, 0.2 * y)

    def trunk(x):
        x = block(x, params["c1"], False)
        x = block(x, params["c2"], True)
        x = block(x, params["c3"], True)
        x = block(x, params["c4"], True)
        return x.reshape(x.shape[0], -1)

    f1, f2 = trunk(img1), trunk(img2)
    v1 = f1 @ params["D1"]["w"].T + params["D1"]["b"]
    v2 = f2 @ params["D2"]["w"].T + params["D2"]["b"]
    return v1, v2


def _conv_init(key, cout, cin):
    kw, kb = jax.random.split(key)
    bound = 1.0 / math.sqrt(cin * 9)
    return {"w": jax.random.uniform(kw, (cout, cin, 3, 3), jnp.float32, -bound, bound),
            "b": jax.random.uniform(kb, (cout,), jnp.float32, -bound, bound)}


def _bn_init(cout):
    return {"gamma": jnp.ones((cout,), jnp.float32),
            "beta": jnp.zeros((cout,), jnp.float32),
            "running_mean": jnp.zeros((cout,), jnp.float32),
            "running_var": jnp.ones((cout,), jnp.float32)}


def _linear_init(key, out_f, in_f):
    kw, kb = jax.random.split(key)
    bound = 1.0 / math.sqrt(in_f)
    return {"w": jax.random.uniform(kw, (out_f, in_f), jnp.float32, -bound, bound),
            "b": jax.random.uniform(kb, (out_f,), jnp.float32, -bound, bound)}


def init_params(key, channels, img_size):
    ks = jax.random.split(key, 6)
    ds_size = img_size // 2 ** 4
    feat_dim = 128 * ds_size ** 2
    return {
        "c1": _conv_init(ks[0], 16, channels),
        "c2": {**_conv_init(ks[1], 32, 16), **_bn_init(32)},
        "c3": {**_conv_init(ks[2], 64, 32), **_bn_init(64)},
        "c4": {**_conv_init(ks[3], 128, 64), **_bn_init(128)},
        "D1": _linear_init(ks[4], 1, feat_dim),
        "D2": _linear_init(ks[5], 1, feat_dim),
    }


if __name__ == "__main__":
    CHANNELS = 4
    IMG_SIZE = 16
    BATCH = 2

    key = jax.random.PRNGKey(0)
    k_params, k_img1, k_img2 = jax.random.split(key, 3)

    params = init_params(k_params, CHANNELS, IMG_SIZE)
    img1 = jax.random.normal(k_img1, (BATCH, CHANNELS, IMG_SIZE, IMG_SIZE), jnp.float32)
    img2 = jax.random.normal(k_img2, (BATCH, CHANNELS, IMG_SIZE, IMG_SIZE), jnp.float32)

    fwd = jax.jit(coupled_discriminators_forward)
    v1, v2 = fwd(params, img1, img2)
    jax.block_until_ready((v1, v2))
    assert v1.shape == (BATCH, 1) and v2.shape == (BATCH, 1)

    # Loose-tolerance parity check vs. pure-JAX f32 reference (bf16 MXU operands).
    r1, r2 = _reference_forward(params, img1, img2)
    np.testing.assert_allclose(np.asarray(v1), np.asarray(r1), rtol=3e-2, atol=3e-2)
    np.testing.assert_allclose(np.asarray(v2), np.asarray(r2), rtol=3e-2, atol=3e-2)

    print("KERNEL_OK")
</pallas_src>

<mosaic_0001>
module attributes {stable_mosaic.version = 11 : i64} {
  func.func @_trunk_kernel(%arg0: i32, %arg1: memref<2x256x4xbf16, #tpu.memory_space<vmem>>, %arg2: memref<576x256xbf16, #tpu.memory_space<vmem>>, %arg3: memref<9x4x16xbf16, #tpu.memory_space<vmem>>, %arg4: memref<1x16xf32, #tpu.memory_space<vmem>>, %arg5: memref<144x64xbf16, #tpu.memory_space<vmem>>, %arg6: memref<9x16x32xbf16, #tpu.memory_space<vmem>>, %arg7: memref<1x32xf32, #tpu.memory_space<vmem>>, %arg8: memref<1x32xf32, #tpu.memory_space<vmem>>, %arg9: memref<36x16xbf16, #tpu.memory_space<vmem>>, %arg10: memref<9x32x64xbf16, #tpu.memory_space<vmem>>, %arg11: memref<1x64xf32, #tpu.memory_space<vmem>>, %arg12: memref<1x64xf32, #tpu.memory_space<vmem>>, %arg13: memref<9x4xbf16, #tpu.memory_space<vmem>>, %arg14: memref<9x64x128xbf16, #tpu.memory_space<vmem>>, %arg15: memref<1x128xf32, #tpu.memory_space<vmem>>, %arg16: memref<1x128xf32, #tpu.memory_space<vmem>>, %arg17: memref<1x128x2xbf16, #tpu.memory_space<vmem>>, %arg18: memref<1x2xf32, #tpu.memory_space<vmem>>, %arg19: memref<1x2x2xf32, #tpu.memory_space<vmem>>) attributes {dimension_semantics = [#tpu.dimension_semantics<parallel>], iteration_bounds = array<i64: 2>, scalar_prefetch = 0 : i64, scratch_operands = 0 : i64, tpu.core_type = #tpu.core_type<tc>, window_params = [{transform_indices = @transform_0, window_bounds = array<i64: 2, 256, 4>}, {pipeline_mode = #tpu.pipeline_mode<synchronous>, transform_indices = @transform_1, window_bounds = array<i64: 576, 256>}, {pipeline_mode = #tpu.pipeline_mode<synchronous>, transform_indices = @transform_2, window_bounds = array<i64: 9, 4, 16>}, {pipeline_mode = #tpu.pipeline_mode<synchronous>, transform_indices = @transform_3, window_bounds = array<i64: 1, 16>}, {pipeline_mode = #tpu.pipeline_mode<synchronous>, transform_indices = @transform_4, window_bounds = array<i64: 144, 64>}, {pipeline_mode = #tpu.pipeline_mode<synchronous>, transform_indices = @transform_5, window_bounds = array<i64: 9, 16, 32>}, {pipeline_mode = #tpu.pipeline_mode<synchronous>, transform_indices = @transform_6, window_bounds = array<i64: 1, 32>}, {pipeline_mode = #tpu.pipeline_mode<synchronous>, transform_indices = @transform_7, window_bounds = array<i64: 1, 32>}, {pipeline_mode = #tpu.pipeline_mode<synchronous>, transform_indices = @transform_8, window_bounds = array<i64: 36, 16>}, {pipeline_mode = #tpu.pipeline_mode<synchronous>, transform_indices = @transform_9, window_bounds = array<i64: 9, 32, 64>}, {pipeline_mode = #tpu.pipeline_mode<synchronous>, transform_indices = @transform_10, window_bounds = array<i64: 1, 64>}, {pipeline_mode = #tpu.pipeline_mode<synchronous>, transform_indices = @transform_11, window_bounds = array<i64: 1, 64>}, {pipeline_mode = #tpu.pipeline_mode<synchronous>, transform_indices = @transform_12, window_bounds = array<i64: 9, 4>}, {pipeline_mode = #tpu.pipeline_mode<synchronous>, transform_indices = @transform_13, window_bounds = array<i64: 9, 64, 128>}, {pipeline_mode = #tpu.pipeline_mode<synchronous>, transform_indices = @transform_14, window_bounds = array<i64: 1, 128>}, {pipeline_mode = #tpu.pipeline_mode<synchronous>, transform_indices = @transform_15, window_bounds = array<i64: 1, 128>}, {pipeline_mode = #tpu.pipeline_mode<synchronous>, transform_indices = @transform_16, window_bounds = array<i64: 1, 128, 2>}, {pipeline_mode = #tpu.pipeline_mode<synchronous>, transform_indices = @transform_17, window_bounds = array<i64: 1, 2>}, {transform_indices = @transform_18, window_bounds = array<i64: 1, 2, 2>}]} {
    %c0 = arith.constant 0 : index
    %c0_0 = arith.constant 0 : index
    %c0_1 = arith.constant 0 : index
    %0 = vector.load %arg1[%c0, %c0_0, %c0_1] : memref<2x256x4xbf16, #tpu.memory_space<vmem>>, vector<1x256x4xbf16>
    %1 = vector.shape_cast %0 : vector<1x256x4xbf16> to vector<256x4xbf16>
    %c1 = arith.constant 1 : index
    %c0_2 = arith.constant 0 : index
    %c0_3 = arith.constant 0 : index
    %2 = vector.load %arg1[%c1, %c0_2, %c0_3] : memref<2x256x4xbf16, #tpu.memory_space<vmem>>, vector<1x256x4xbf16>
    %3 = vector.shape_cast %2 : vector<1x256x4xbf16> to vector<256x4xbf16>
    %c0_4 = arith.constant 0 : index
    %c0_5 = arith.constant 0 : index
    %4 = vector.load %arg2[%c0_4, %c0_5] : memref<576x256xbf16, #tpu.memory_space<vmem>>, vector<576x256xbf16>
    %c0_6 = arith.constant 0 : index
    %c0_7 = arith.constant 0 : index
    %5 = vector.load %arg4[%c0_6, %c0_7] : memref<1x16xf32, #tpu.memory_space<vmem>>, vector<1x16xf32>
    %cst = arith.constant dense<0.000000e+00> : vector<576x4xf32>
    %6 = tpu.matmul %4, %1, %cst {dimension_numbers = #tpu.dot_dimension_numbers<[1], [0], [0], [1], [0, 0, 1, 1], [], []>} : vector<576x256xbf16>, vector<256x4xbf16>, vector<576x4xf32> -> vector<576x4xf32>
    %7 = arith.truncf %6 : vector<576x4xf32> to vector<576x4xbf16>
    %cst_8 = arith.constant 0.000000e+00 : f32
    %8 = vector.broadcast %cst_8 : f32 to vector<64x16xf32>
    %9 = vector.extract_strided_slice %7 {offsets = [0, 0], sizes = [64, 4], strides = [1, 1]} : vector<576x4xbf16> to vector<64x4xbf16>
    %c0_9 = arith.constant 0 : index
    %c0_10 = arith.constant 0 : index
    %c0_11 = arith.constant 0 : index
    %10 = vector.load %arg3[%c0_9, %c0_10, %c0_11] : memref<9x4x16xbf16, #tpu.memory_space<vmem>>, vector<1x4x16xbf16>
    %11 = vector.shape_cast %10 : vector<1x4x16xbf16> to vector<4x16xbf16>
    %cst_12 = arith.constant dense<0.000000e+00> : vector<64x16xf32>
    %12 = tpu.matmul %9, %11, %cst_12 {dimension_numbers = #tpu.dot_dimension_numbers<[1], [0], [0], [1], [0, 0, 1, 1], [], []>} : vector<64x4xbf16>, vector<4x16xbf16>, vector<64x16xf32> -> vector<64x16xf32>
    %13 = arith.addf %8, %12 : vector<64x16xf32>
    %14 = vector.extract_strided_slice %7 {offsets = [64, 0], sizes = [64, 4], strides = [1, 1]} : vector<576x4xbf16> to vector<64x4xbf16>
    %c1_13 = arith.constant 1 : index
    %c0_14 = arith.constant 0 : index
    %c0_15 = arith.constant 0 : index
    %15 = vector.load %arg3[%c1_13, %c0_14, %c0_15] : memref<9x4x16xbf16, #tpu.memory_space<vmem>>, vector<1x4x16xbf16>
    %16 = vector.shape_cast %15 : vector<1x4x16xbf16> to vector<4x16xbf16>
    %cst_16 = arith.constant dense<0.000000e+00> : vector<64x16xf32>
    %17 = tpu.matmul %14, %16, %cst_16 {dimension_numbers = #tpu.dot_dimension_numbers<[1], [0], [0], [1], [0, 0, 1, 1], [], []>} : vector<64x4xbf16>, vector<4x16xbf16>, vector<64x16xf32> -> vector<64x16xf32>
    %18 = arith.addf %13, %17 : vector<64x16xf32>
    %19 = vector.extract_strided_slice %7 {offsets = [128, 0], sizes = [64, 4], strides = [1, 1]} : vector<576x4xbf16> to vector<64x4xbf16>
    %c2 = arith.constant 2 : index
    %c0_17 = arith.constant 0 : index
    %c0_18 = arith.constant 0 : index
    %20 = vector.load %arg3[%c2, %c0_17, %c0_18] : memref<9x4x16xbf16, #tpu.memory_space<vmem>>, vector<1x4x16xbf16>
    %21 = vector.shape_cast %20 : vector<1x4x16xbf16> to vector<4x16xbf16>
    %cst_19 = arith.constant dense<0.000000e+00> : vector<64x16xf32>
    %22 = tpu.matmul %19, %21, %cst_19 {dimension_numbers = #tpu.dot_dimension_numbers<[1], [0], [0], [1], [0, 0, 1, 1], [], []>} : vector<64x4xbf16>, vector<4x16xbf16>, vector<64x16xf32> -> vector<64x16xf32>
    %23 = arith.addf %18, %22 : vector<64x16xf32>
    %24 = vector.extract_strided_slice %7 {offsets = [192, 0], sizes = [64, 4], strides = [1, 1]} : vector<576x4xbf16> to vector<64x4xbf16>
    %c3 = arith.constant 3 : index
    %c0_20 = arith.constant 0 : index
    %c0_21 = arith.constant 0 : index
    %25 = vector.load %arg3[%c3, %c0_20, %c0_21] : memref<9x4x16xbf16, #tpu.memory_space<vmem>>, vector<1x4x16xbf16>
    %26 = vector.shape_cast %25 : vector<1x4x16xbf16> to vector<4x16xbf16>
    %cst_22 = arith.constant dense<0.000000e+00> : vector<64x16xf32>
    %27 = tpu.matmul %24, %26, %cst_22 {dimension_numbers = #tpu.dot_dimension_numbers<[1], [0], [0], [1], [0, 0, 1, 1], [], []>} : vector<64x4xbf16>, vector<4x16xbf16>, vector<64x16xf32> -> vector<64x16xf32>
    %28 = arith.addf %23, %27 : vector<64x16xf32>
    %29 = vector.extract_strided_slice %7 {offsets = [256, 0], sizes = [64, 4], strides = [1, 1]} : vector<576x4xbf16> to vector<64x4xbf16>
    %c4 = arith.constant 4 : index
    %c0_23 = arith.constant 0 : index
    %c0_24 = arith.constant 0 : index
    %30 = vector.load %arg3[%c4, %c0_23, %c0_24] : memref<9x4x16xbf16, #tpu.memory_space<vmem>>, vector<1x4x16xbf16>
    %31 = vector.shape_cast %30 : vector<1x4x16xbf16> to vector<4x16xbf16>
    %cst_25 = arith.constant dense<0.000000e+00> : vector<64x16xf32>
    %32 = tpu.matmul %29, %31, %cst_25 {dimension_numbers = #tpu.dot_dimension_numbers<[1], [0], [0], [1], [0, 0, 1, 1], [], []>} : vector<64x4xbf16>, vector<4x16xbf16>, vector<64x16xf32> -> vector<64x16xf32>
    %33 = arith.addf %28, %32 : vector<64x16xf32>
    %34 = vector.extract_strided_slice %7 {offsets = [320, 0], sizes = [64, 4], strides = [1, 1]} : vector<576x4xbf16> to vector<64x4xbf16>
    %c5 = arith.constant 5 : index
    %c0_26 = arith.constant 0 : index
    %c0_27 = arith.constant 0 : index
    %35 = vector.load %arg3[%c5, %c0_26, %c0_27] : memref<9x4x16xbf16, #tpu.memory_space<vmem>>, vector<1x4x16xbf16>
    %36 = vector.shape_cast %35 : vector<1x4x16xbf16> to vector<4x16xbf16>
    %cst_28 = arith.constant dense<0.000000e+00> : vector<64x16xf32>
    %37 = tpu.matmul %34, %36, %cst_28 {dimension_numbers = #tpu.dot_dimension_numbers<[1], [0], [0], [1], [0, 0, 1, 1], [], []>} : vector<64x4xbf16>, vector<4x16xbf16>, vector<64x16xf32> -> vector<64x16xf32>
    %38 = arith.addf %33, %37 : vector<64x16xf32>
    %39 = vector.extract_strided_slice %7 {offsets = [384, 0], sizes = [64, 4], strides = [1, 1]} : vector<576x4xbf16> to vector<64x4xbf16>
    %c6 = arith.constant 6 : index
    %c0_29 = arith.constant 0 : index
    %c0_30 = arith.constant 0 : index
    %40 = vector.load %arg3[%c6, %c0_29, %c0_30] : memref<9x4x16xbf16, #tpu.memory_space<vmem>>, vector<1x4x16xbf16>
    %41 = vector.shape_cast %40 : vector<1x4x16xbf16> to vector<4x16xbf16>
    %cst_31 = arith.constant dense<0.000000e+00> : vector<64x16xf32>
    %42 = tpu.matmul %39, %41, %cst_31 {dimension_numbers = #tpu.dot_dimension_numbers<[1], [0], [0], [1], [0, 0, 1, 1], [], []>} : vector<64x4xbf16>, vector<4x16xbf16>, vector<64x16xf32> -> vector<64x16xf32>
    %43 = arith.addf %38, %42 : vector<64x16xf32>
    %44 = vector.extract_strided_slice %7 {offsets = [448, 0], sizes = [64, 4], strides = [1, 1]} : vector<576x4xbf16> to vector<64x4xbf16>
    %c7 = arith.constant 7 : index
    %c0_32 = arith.constant 0 : index
    %c0_33 = arith.constant 0 : index
    %45 = vector.load %arg3[%c7, %c0_32, %c0_33] : memref<9x4x16xbf16, #tpu.memory_space<vmem>>, vector<1x4x16xbf16>
    %46 = vector.shape_cast %45 : vector<1x4x16xbf16> to vector<4x16xbf16>
    %cst_34 = arith.constant dense<0.000000e+00> : vector<64x16xf32>
    %47 = tpu.matmul %44, %46, %cst_34 {dimension_numbers = #tpu.dot_dimension_numbers<[1], [0], [0], [1], [0, 0, 1, 1], [], []>} : vector<64x4xbf16>, vector<4x16xbf16>, vector<64x16xf32> -> vector<64x16xf32>
    %48 = arith.addf %43, %47 : vector<64x16xf32>
    %49 = vector.extract_strided_slice %7 {offsets = [512, 0], sizes = [64, 4], strides = [1, 1]} : vector<576x4xbf16> to vector<64x4xbf16>
    %c8 = arith.constant 8 : index
    %c0_35 = arith.constant 0 : index
    %c0_36 = arith.constant 0 : index
    %50 = vector.load %arg3[%c8, %c0_35, %c0_36] : memref<9x4x16xbf16, #tpu.memory_space<vmem>>, vector<1x4x16xbf16>
    %51 = vector.shape_cast %50 : vector<1x4x16xbf16> to vector<4x16xbf16>
    %cst_37 = arith.constant dense<0.000000e+00> : vector<64x16xf32>
    %52 = tpu.matmul %49, %51, %cst_37 {dimension_numbers = #tpu.dot_dimension_numbers<[1], [0], [0], [1], [0, 0, 1, 1], [], []>} : vector<64x4xbf16>, vector<4x16xbf16>, vector<64x16xf32> -> vector<64x16xf32>
    %53 = arith.addf %48, %52 : vector<64x16xf32>
    %54 = vector.broadcast %5 : vector<1x16xf32> to vector<64x16xf32>
    %55 = arith.addf %53, %54 : vector<64x16xf32>
    %cst_38 = arith.constant 0.000000e+00 : f32
    %56 = vector.broadcast %cst_38 : f32 to vector<64x16xf32>
    %57 = arith.cmpf oge, %55, %56 : vector<64x16xf32>
    %cst_39 = arith.constant 2.000000e-01 : f32
    %58 = vector.broadcast %cst_39 : f32 to vector<64x16xf32>
    %59 = arith.mulf %58, %55 : vector<64x16xf32>
    %60 = arith.select %57, %55, %59 : vector<64x16xi1>, vector<64x16xf32>
    %61 = arith.truncf %60 : vector<64x16xf32> to vector<64x16xbf16>
    %cst_40 = arith.constant dense<0.000000e+00> : vector<576x4xf32>
    %62 = tpu.matmul %4, %3, %cst_40 {dimension_numbers = #tpu.dot_dimension_numbers<[1], [0], [0], [1], [0, 0, 1, 1], [], []>} : vector<576x256xbf16>, vector<256x4xbf16>, vector<576x4xf32> -> vector<576x4xf32>
    %63 = arith.truncf %62 : vector<576x4xf32> to vector<576x4xbf16>
    %cst_41 = arith.constant 0.000000e+00 : f32
    %64 = vector.broadcast %cst_41 : f32 to vector<64x16xf32>
    %65 = vector.extract_strided_slice %63 {offsets = [0, 0], sizes = [64, 4], strides = [1, 1]} : vector<576x4xbf16> to vector<64x4xbf16>
    %c0_42 = arith.constant 0 : index
    %c0_43 = arith.constant 0 : index
    %c0_44 = arith.constant 0 : index
    %66 = vector.load %arg3[%c0_42, %c0_43, %c0_44] : memref<9x4x16xbf16, #tpu.memory_space<vmem>>, vector<1x4x16xbf16>
    %67 = vector.shape_cast %66 : vector<1x4x16xbf16> to vector<4x16xbf16>
    %cst_45 = arith.constant dense<0.000000e+00> : vector<64x16xf32>
    %68 = tpu.matmul %65, %67, %cst_45 {dimension_numbers = #tpu.dot_dimension_numbers<[1], [0], [0], [1], [0, 0, 1, 1], [], []>} : vector<64x4xbf16>, vector<4x16xbf16>, vector<64x16xf32> -> vector<64x16xf32>
    %69 = arith.addf %64, %68 : vector<64x16xf32>
    %70 = vector.extract_strided_slice %63 {offsets = [64, 0], sizes = [64, 4], strides = [1, 1]} : vector<576x4xbf16> to vector<64x4xbf16>
    %c1_46 = arith.constant 1 : index
    %c0_47 = arith.constant 0 : index
    %c0_48 = arith.constant 0 : index
    %71 = vector.load %arg3[%c1_46, %c0_47, %c0_48] : memref<9x4x16xbf16, #tpu.memory_space<vmem>>, vector<1x4x16xbf16>
    %72 = vector.shape_cast %71 : vector<1x4x16xbf16> to vector<4x16xbf16>
    %cst_49 = arith.constant dense<0.000000e+00> : vector<64x16xf32>
    %73 = tpu.matmul %70, %72, %cst_49 {dimension_numbers = #tpu.dot_dimension_numbers<[1], [0], [0], [1], [0, 0, 1, 1], [], []>} : vector<64x4xbf16>, vector<4x16xbf16>, vector<64x16xf32> -> vector<64x16xf32>
    %74 = arith.addf %69, %73 : vector<64x16xf32>
    %75 = vector.extract_strided_slice %63 {offsets = [128, 0], sizes = [64, 4], strides = [1, 1]} : vector<576x4xbf16> to vector<64x4xbf16>
    %c2_50 = arith.constant 2 : index
    %c0_51 = arith.constant 0 : index
    %c0_52 = arith.constant 0 : index
    %76 = vector.load %arg3[%c2_50, %c0_51, %c0_52] : memref<9x4x16xbf16, #tpu.memory_space<vmem>>, vector<1x4x16xbf16>
    %77 = vector.shape_cast %76 : vector<1x4x16xbf16> to vector<4x16xbf16>
    %cst_53 = arith.constant dense<0.000000e+00> : vector<64x16xf32>
    %78 = tpu.matmul %75, %77, %cst_53 {dimension_numbers = #tpu.dot_dimension_numbers<[1], [0], [0], [1], [0, 0, 1, 1], [], []>} : vector<64x4xbf16>, vector<4x16xbf16>, vector<64x16xf32> -> vector<64x16xf32>
    %79 = arith.addf %74, %78 : vector<64x16xf32>
    %80 = vector.extract_strided_slice %63 {offsets = [192, 0], sizes = [64, 4], strides = [1, 1]} : vector<576x4xbf16> to vector<64x4xbf16>
    %c3_54 = arith.constant 3 : index
    %c0_55 = arith.constant 0 : index
    %c0_56 = arith.constant 0 : index
    %81 = vector.load %arg3[%c3_54, %c0_55, %c0_56] : memref<9x4x16xbf16, #tpu.memory_space<vmem>>, vector<1x4x16xbf16>
    %82 = vector.shape_cast %81 : vector<1x4x16xbf16> to vector<4x16xbf16>
    %cst_57 = arith.constant dense<0.000000e+00> : vector<64x16xf32>
    %83 = tpu.matmul %80, %82, %cst_57 {dimension_numbers = #tpu.dot_dimension_numbers<[1], [0], [0], [1], [0, 0, 1, 1], [], []>} : vector<64x4xbf16>, vector<4x16xbf16>, vector<64x16xf32> -> vector<64x16xf32>
    %84 = arith.addf %79, %83 : vector<64x16xf32>
    %85 = vector.extract_strided_slice %63 {offsets = [256, 0], sizes = [64, 4], strides = [1, 1]} : vector<576x4xbf16> to vector<64x4xbf16>
    %c4_58 = arith.constant 4 : index
    %c0_59 = arith.constant 0 : index
    %c0_60 = arith.constant 0 : index
    %86 = vector.load %arg3[%c4_58, %c0_59, %c0_60] : memref<9x4x16xbf16, #tpu.memory_space<vmem>>, vector<1x4x16xbf16>
    %87 = vector.shape_cast %86 : vector<1x4x16xbf16> to vector<4x16xbf16>
    %cst_61 = arith.constant dense<0.000000e+00> : vector<64x16xf32>
    %88 = tpu.matmul %85, %87, %cst_61 {dimension_numbers = #tpu.dot_dimension_numbers<[1], [0], [0], [1], [0, 0, 1, 1], [], []>} : vector<64x4xbf16>, vector<4x16xbf16>, vector<64x16xf32> -> vector<64x16xf32>
    %89 = arith.addf %84, %88 : vector<64x16xf32>
    %90 = vector.extract_strided_slice %63 {offsets = [320, 0], sizes = [64, 4], strides = [1, 1]} : vector<576x4xbf16> to vector<64x4xbf16>
    %c5_62 = arith.constant 5 : index
    %c0_63 = arith.constant 0 : index
    %c0_64 = arith.constant 0 : index
    %91 = vector.load %arg3[%c5_62, %c0_63, %c0_64] : memref<9x4x16xbf16, #tpu.memory_space<vmem>>, vector<1x4x16xbf16>
    %92 = vector.shape_cast %91 : vector<1x4x16xbf16> to vector<4x16xbf16>
    %cst_65 = arith.constant dense<0.000000e+00> : vector<64x16xf32>
    %93 = tpu.matmul %90, %92, %cst_65 {dimension_numbers = #tpu.dot_dimension_numbers<[1], [0], [0], [1], [0, 0, 1, 1], [], []>} : vector<64x4xbf16>, vector<4x16xbf16>, vector<64x16xf32> -> vector<64x16xf32>
    %94 = arith.addf %89, %93 : vector<64x16xf32>
    %95 = vector.extract_strided_slice %63 {offsets = [384, 0], sizes = [64, 4], strides = [1, 1]} : vector<576x4xbf16> to vector<64x4xbf16>
    %c6_66 = arith.constant 6 : index
    %c0_67 = arith.constant 0 : index
    %c0_68 = arith.constant 0 : index
    %96 = vector.load %arg3[%c6_66, %c0_67, %c0_68] : memref<9x4x16xbf16, #tpu.memory_space<vmem>>, vector<1x4x16xbf16>
    %97 = vector.shape_cast %96 : vector<1x4x16xbf16> to vector<4x16xbf16>
    %cst_69 = arith.constant dense<0.000000e+00> : vector<64x16xf32>
    %98 = tpu.matmul %95, %97, %cst_69 {dimension_numbers = #tpu.dot_dimension_numbers<[1], [0], [0], [1], [0, 0, 1, 1], [], []>} : vector<64x4xbf16>, vector<4x16xbf16>, vector<64x16xf32> -> vector<64x16xf32>
    %99 = arith.addf %94, %98 : vector<64x16xf32>
    %100 = vector.extract_strided_slice %63 {offsets = [448, 0], sizes = [64, 4], strides = [1, 1]} : vector<576x4xbf16> to vector<64x4xbf16>
    %c7_70 = arith.constant 7 : index
    %c0_71 = arith.constant 0 : index
    %c0_72 = arith.constant 0 : index
    %101 = vector.load %arg3[%c7_70, %c0_71, %c0_72] : memref<9x4x16xbf16, #tpu.memory_space<vmem>>, vector<1x4x16xbf16>
    %102 = vector.shape_cast %101 : vector<1x4x16xbf16> to vector<4x16xbf16>
    %cst_73 = arith.constant dense<0.000000e+00> : vector<64x16xf32>
    %103 = tpu.matmul %100, %102, %cst_73 {dimension_numbers = #tpu.dot_dimension_numbers<[1], [0], [0], [1], [0, 0, 1, 1], [], []>} : vector<64x4xbf16>, vector<4x16xbf16>, vector<64x16xf32> -> vector<64x16xf32>
    %104 = arith.addf %99, %103 : vector<64x16xf32>
    %105 = vector.extract_strided_slice %63 {offsets = [512, 0], sizes = [64, 4], strides = [1, 1]} : vector<576x4xbf16> to vector<64x4xbf16>
    %c8_74 = arith.constant 8 : index
    %c0_75 = arith.constant 0 : index
    %c0_76 = arith.constant 0 : index
    %106 = vector.load %arg3[%c8_74, %c0_75, %c0_76] : memref<9x4x16xbf16, #tpu.memory_space<vmem>>, vector<1x4x16xbf16>
    %107 = vector.shape_cast %106 : vector<1x4x16xbf16> to vector<4x16xbf16>
    %cst_77 = arith.constant dense<0.000000e+00> : vector<64x16xf32>
    %108 = tpu.matmul %105, %107, %cst_77 {dimension_numbers = #tpu.dot_dimension_numbers<[1], [0], [0], [1], [0, 0, 1, 1], [], []>} : vector<64x4xbf16>, vector<4x16xbf16>, vector<64x16xf32> -> vector<64x16xf32>
    %109 = arith.addf %104, %108 : vector<64x16xf32>
    %110 = vector.broadcast %5 : vector<1x16xf32> to vector<64x16xf32>
    %111 = arith.addf %109, %110 : vector<64x16xf32>
    %cst_78 = arith.constant 0.000000e+00 : f32
    %112 = vector.broadcast %cst_78 : f32 to vector<64x16xf32>
    %113 = arith.cmpf oge, %111, %112 : vector<64x16xf32>
    %cst_79 = arith.constant 2.000000e-01 : f32
    %114 = vector.broadcast %cst_79 : f32 to vector<64x16xf32>
    %115 = arith.mulf %114, %111 : vector<64x16xf32>
    %116 = arith.select %113, %111, %115 : vector<64x16xi1>, vector<64x16xf32>
    %117 = arith.truncf %116 : vector<64x16xf32> to vector<64x16xbf16>
    %c0_80 = arith.constant 0 : index
    %c0_81 = arith.constant 0 : index
    %118 = vector.load %arg5[%c0_80, %c0_81] : memref<144x64xbf16, #tpu.memory_space<vmem>>, vector<144x64xbf16>
    %c0_82 = arith.constant 0 : index
    %c0_83 = arith.constant 0 : index
    %119 = vector.load %arg8[%c0_82, %c0_83] : memref<1x32xf32, #tpu.memory_space<vmem>>, vector<1x32xf32>
    %c0_84 = arith.constant 0 : index
    %c0_85 = arith.constant 0 : index
    %120 = vector.load %arg7[%c0_84, %c0_85] : memref<1x32xf32, #tpu.memory_space<vmem>>, vector<1x32xf32>
    %cst_86 = arith.constant dense<0.000000e+00> : vector<144x16xf32>
    %121 = tpu.matmul %118, %61, %cst_86 {dimension_numbers = #tpu.dot_dimension_numbers<[1], [0], [0], [1], [0, 0, 1, 1], [], []>} : vector<144x64xbf16>, vector<64x16xbf16>, vector<144x16xf32> -> vector<144x16xf32>
    %122 = arith.truncf %121 : vector<144x16xf32> to vector<144x16xbf16>
    %cst_87 = arith.constant 0.000000e+00 : f32
    %123 = vector.broadcast %cst_87 : f32 to vector<16x32xf32>
    %124 = vector.extract_strided_slice %122 {offsets = [0, 0], sizes = [16, 16], strides = [1, 1]} : vector<144x16xbf16> to vector<16x16xbf16>
    %c0_88 = arith.constant 0 : index
    %c0_89 = arith.constant 0 : index
    %c0_90 = arith.constant 0 : index
    %125 = vector.load %arg6[%c0_88, %c0_89, %c0_90] : memref<9x16x32xbf16, #tpu.memory_space<vmem>>, vector<1x16x32xbf16>
    %126 = vector.shape_cast %125 : vector<1x16x32xbf16> to vector<16x32xbf16>
    %cst_91 = arith.constant dense<0.000000e+00> : vector<16x32xf32>
    %127 = tpu.matmul %124, %126, %cst_91 {dimension_numbers = #tpu.dot_dimension_numbers<[1], [0], [0], [1], [0, 0, 1, 1], [], []>} : vector<16x16xbf16>, vector<16x32xbf16>, vector<16x32xf32> -> vector<16x32xf32>
    %128 = arith.addf %123, %127 : vector<16x32xf32>
    %129 = vector.extract_strided_slice %122 {offsets = [16, 0], sizes = [16, 16], strides = [1, 1]} : vector<144x16xbf16> to vector<16x16xbf16>
    %c1_92 = arith.constant 1 : index
    %c0_93 = arith.constant 0 : index
    %c0_94 = arith.constant 0 : index
    %130 = vector.load %arg6[%c1_92, %c0_93, %c0_94] : memref<9x16x32xbf16, #tpu.memory_space<vmem>>, vector<1x16x32xbf16>
    %131 = vector.shape_cast %130 : vector<1x16x32xbf16> to vector<16x32xbf16>
    %cst_95 = arith.constant dense<0.000000e+00> : vector<16x32xf32>
    %132 = tpu.matmul %129, %131, %cst_95 {dimension_numbers = #tpu.dot_dimension_numbers<[1], [0], [0], [1], [0, 0, 1, 1], [], []>} : vector<16x16xbf16>, vector<16x32xbf16>, vector<16x32xf32> -> vector<16x32xf32>
    %133 = arith.addf %128, %132 : vector<16x32xf32>
    %134 = vector.extract_strided_slice %122 {offsets = [32, 0], sizes = [16, 16], strides = [1, 1]} : vector<144x16xbf16> to vector<16x16xbf16>
    %c2_96 = arith.constant 2 : index
    %c0_97 = arith.constant 0 : index
    %c0_98 = arith.constant 0 : index
    %135 = vector.load %arg6[%c2_96, %c0_97, %c0_98] : memref<9x16x32xbf16, #tpu.memory_space<vmem>>, vector<1x16x32xbf16>
    %136 = vector.shape_cast %135 : vector<1x16x32xbf16> to vector<16x32xbf16>
    %cst_99 = arith.constant dense<0.000000e+00> : vector<16x32xf32>
    %137 = tpu.matmul %134, %136, %cst_99 {dimension_numbers = #tpu.dot_dimension_numbers<[1], [0], [0], [1], [0, 0, 1, 1], [], []>} : vector<16x16xbf16>, vector<16x32xbf16>, vector<16x32xf32> -> vector<16x32xf32>
    %138 = arith.addf %133, %137 : vector<16x32xf32>
    %139 = vector.extract_strided_slice %122 {offsets = [48, 0], sizes = [16, 16], strides = [1, 1]} : vector<144x16xbf16> to vector<16x16xbf16>
    %c3_100 = arith.constant 3 : index
    %c0_101 = arith.constant 0 : index
    %c0_102 = arith.constant 0 : index
    %140 = vector.load %arg6[%c3_100, %c0_101, %c0_102] : memref<9x16x32xbf16, #tpu.memory_space<vmem>>, vector<1x16x32xbf16>
    %141 = vector.shape_cast %140 : vector<1x16x32xbf16> to vector<16x32xbf16>
    %cst_103 = arith.constant dense<0.000000e+00> : vector<16x32xf32>
    %142 = tpu.matmul %139, %141, %cst_103 {dimension_numbers = #tpu.dot_dimension_numbers<[1], [0], [0], [1], [0, 0, 1, 1], [], []>} : vector<16x16xbf16>, vector<16x32xbf16>, vector<16x32xf32> -> vector<16x32xf32>
    %143 = arith.addf %138, %142 : vector<16x32xf32>
    %144 = vector.extract_strided_slice %122 {offsets = [64, 0], sizes = [16, 16], strides = [1, 1]} : vector<144x16xbf16> to vector<16x16xbf16>
    %c4_104 = arith.constant 4 : index
    %c0_105 = arith.constant 0 : index
    %c0_106 = arith.constant 0 : index
    %145 = vector.load %arg6[%c4_104, %c0_105, %c0_106] : memref<9x16x32xbf16, #tpu.memory_space<vmem>>, vector<1x16x32xbf16>
    %146 = vector.shape_cast %145 : vector<1x16x32xbf16> to vector<16x32xbf16>
    %cst_107 = arith.constant dense<0.000000e+00> : vector<16x32xf32>
    %147 = tpu.matmul %144, %146, %cst_107 {dimension_numbers = #tpu.dot_dimension_numbers<[1], [0], [0], [1], [0, 0, 1, 1], [], []>} : vector<16x16xbf16>, vector<16x32xbf16>, vector<16x32xf32> -> vector<16x32xf32>
    %148 = arith.addf %143, %147 : vector<16x32xf32>
    %149 = vector.extract_strided_slice %122 {offsets = [80, 0], sizes = [16, 16], strides = [1, 1]} : vector<144x16xbf16> to vector<16x16xbf16>
    %c5_108 = arith.constant 5 : index
    %c0_109 = arith.constant 0 : index
    %c0_110 = arith.constant 0 : index
    %150 = vector.load %arg6[%c5_108, %c0_109, %c0_110] : memref<9x16x32xbf16, #tpu.memory_space<vmem>>, vector<1x16x32xbf16>
    %151 = vector.shape_cast %150 : vector<1x16x32xbf16> to vector<16x32xbf16>
    %cst_111 = arith.constant dense<0.000000e+00> : vector<16x32xf32>
    %152 = tpu.matmul %149, %151, %cst_111 {dimension_numbers = #tpu.dot_dimension_numbers<[1], [0], [0], [1], [0, 0, 1, 1], [], []>} : vector<16x16xbf16>, vector<16x32xbf16>, vector<16x32xf32> -> vector<16x32xf32>
    %153 = arith.addf %148, %152 : vector<16x32xf32>
    %154 = vector.extract_strided_slice %122 {offsets = [96, 0], sizes = [16, 16], strides = [1, 1]} : vector<144x16xbf16> to vector<16x16xbf16>
    %c6_112 = arith.constant 6 : index
    %c0_113 = arith.constant 0 : index
    %c0_114 = arith.constant 0 : index
    %155 = vector.load %arg6[%c6_112, %c0_113, %c0_114] : memref<9x16x32xbf16, #tpu.memory_space<vmem>>, vector<1x16x32xbf16>
    %156 = vector.shape_cast %155 : vector<1x16x32xbf16> to vector<16x32xbf16>
    %cst_115 = arith.constant dense<0.000000e+00> : vector<16x32xf32>
    %157 = tpu.matmul %154, %156, %cst_115 {dimension_numbers = #tpu.dot_dimension_numbers<[1], [0], [0], [1], [0, 0, 1, 1], [], []>} : vector<16x16xbf16>, vector<16x32xbf16>, vector<16x32xf32> -> vector<16x32xf32>
    %158 = arith.addf %153, %157 : vector<16x32xf32>
    %159 = vector.extract_strided_slice %122 {offsets = [112, 0], sizes = [16, 16], strides = [1, 1]} : vector<144x16xbf16> to vector<16x16xbf16>
    %c7_116 = arith.constant 7 : index
    %c0_117 = arith.constant 0 : index
    %c0_118 = arith.constant 0 : index
    %160 = vector.load %arg6[%c7_116, %c0_117, %c0_118] : memref<9x16x32xbf16, #tpu.memory_space<vmem>>, vector<1x16x32xbf16>
    %161 = vector.shape_cast %160 : vector<1x16x32xbf16> to vector<16x32xbf16>
    %cst_119 = arith.constant dense<0.000000e+00> : vector<16x32xf32>
    %162 = tpu.matmul %159, %161, %cst_119 {dimension_numbers = #tpu.dot_dimension_numbers<[1], [0], [0], [1], [0, 0, 1, 1], [], []>} : vector<16x16xbf16>, vector<16x32xbf16>, vector<16x32xf32> -> vector<16x32xf32>
    %163 = arith.addf %158, %162 : vector<16x32xf32>
    %164 = vector.extract_strided_slice %122 {offsets = [128, 0], sizes = [16, 16], strides = [1, 1]} : vector<144x16xbf16> to vector<16x16xbf16>
    %c8_120 = arith.constant 8 : index
    %c0_121 = arith.constant 0 : index
    %c0_122 = arith.constant 0 : index
    %165 = vector.load %arg6[%c8_120, %c0_121, %c0_122] : memref<9x16x32xbf16, #tpu.memory_space<vmem>>, vector<1x16x32xbf16>
    %166 = vector.shape_cast %165 : vector<1x16x32xbf16> to vector<16x32xbf16>
    %cst_123 = arith.constant dense<0.000000e+00> : vector<16x32xf32>
    %167 = tpu.matmul %164, %166, %cst_123 {dimension_numbers = #tpu.dot_dimension_numbers<[1], [0], [0], [1], [0, 0, 1, 1], [], []>} : vector<16x16xbf16>, vector<16x32xbf16>, vector<16x32xf32> -> vector<16x32xf32>
    %168 = arith.addf %163, %167 : vector<16x32xf32>
    %169 = vector.broadcast %120 : vector<1x32xf32> to vector<16x32xf32>
    %170 = arith.mulf %168, %169 : vector<16x32xf32>
    %171 = vector.broadcast %119 : vector<1x32xf32> to vector<16x32xf32>
    %172 = arith.addf %170, %171 : vector<16x32xf32>
    %cst_124 = arith.constant 0.000000e+00 : f32
    %173 = vector.broadcast %cst_124 : f32 to vector<16x32xf32>
    %174 = arith.cmpf oge, %172, %173 : vector<16x32xf32>
    %cst_125 = arith.constant 2.000000e-01 : f32
    %175 = vector.broadcast %cst_125 : f32 to vector<16x32xf32>
    %176 = arith.mulf %175, %172 : vector<16x32xf32>
    %177 = arith.select %174, %172, %176 : vector<16x32xi1>, vector<16x32xf32>
    %178 = arith.truncf %177 : vector<16x32xf32> to vector<16x32xbf16>
    %cst_126 = arith.constant dense<0.000000e+00> : vector<144x16xf32>
    %179 = tpu.matmul %118, %117, %cst_126 {dimension_numbers = #tpu.dot_dimension_numbers<[1], [0], [0], [1], [0, 0, 1, 1], [], []>} : vector<144x64xbf16>, vector<64x16xbf16>, vector<144x16xf32> -> vector<144x16xf32>
    %180 = arith.truncf %179 : vector<144x16xf32> to vector<144x16xbf16>
    %cst_127 = arith.constant 0.000000e+00 : f32
    %181 = vector.broadcast %cst_127 : f32 to vector<16x32xf32>
    %182 = vector.extract_strided_slice %180 {offsets = [0, 0], sizes = [16, 16], strides = [1, 1]} : vector<144x16xbf16> to vector<16x16xbf16>
    %c0_128 = arith.constant 0 : index
    %c0_129 = arith.constant 0 : index
    %c0_130 = arith.constant 0 : index
    %183 = vector.load %arg6[%c0_128, %c0_129, %c0_130] : memref<9x16x32xbf16, #tpu.memory_space<vmem>>, vector<1x16x32xbf16>
    %184 = vector.shape_cast %183 : vector<1x16x32xbf16> to vector<16x32xbf16>
    %cst_131 = arith.constant dense<0.000000e+00> : vector<16x32xf32>
    %185 = tpu.matmul %182, %184, %cst_131 {dimension_numbers = #tpu.dot_dimension_numbers<[1], [0], [0], [1], [0, 0, 1, 1], [], []>} : vector<16x16xbf16>, vector<16x32xbf16>, vector<16x32xf32> -> vector<16x32xf32>
    %186 = arith.addf %181, %185 : vector<16x32xf32>
    %187 = vector.extract_strided_slice %180 {offsets = [16, 0], sizes = [16, 16], strides = [1, 1]} : vector<144x16xbf16> to vector<16x16xbf16>
    %c1_132 = arith.constant 1 : index
    %c0_133 = arith.constant 0 : index
    %c0_134 = arith.constant 0 : index
    %188 = vector.load %arg6[%c1_132, %c0_133, %c0_134] : memref<9x16x32xbf16, #tpu.memory_space<vmem>>, vector<1x16x32xbf16>
    %189 = vector.shape_cast %188 : vector<1x16x32xbf16> to vector<16x32xbf16>
    %cst_135 = arith.constant dense<0.000000e+00> : vector<16x32xf32>
    %190 = tpu.matmul %187, %189, %cst_135 {dimension_numbers = #tpu.dot_dimension_numbers<[1], [0], [0], [1], [0, 0, 1, 1], [], []>} : vector<16x16xbf16>, vector<16x32xbf16>, vector<16x32xf32> -> vector<16x32xf32>
    %191 = arith.addf %186, %190 : vector<16x32xf32>
    %192 = vector.extract_strided_slice %180 {offsets = [32, 0], sizes = [16, 16], strides = [1, 1]} : vector<144x16xbf16> to vector<16x16xbf16>
    %c2_136 = arith.constant 2 : index
    %c0_137 = arith.constant 0 : index
    %c0_138 = arith.constant 0 : index
    %193 = vector.load %arg6[%c2_136, %c0_137, %c0_138] : memref<9x16x32xbf16, #tpu.memory_space<vmem>>, vector<1x16x32xbf16>
    %194 = vector.shape_cast %193 : vector<1x16x32xbf16> to vector<16x32xbf16>
    %cst_139 = arith.constant dense<0.000000e+00> : vector<16x32xf32>
    %195 = tpu.matmul %192, %194, %cst_139 {dimension_numbers = #tpu.dot_dimension_numbers<[1], [0], [0], [1], [0, 0, 1, 1], [], []>} : vector<16x16xbf16>, vector<16x32xbf16>, vector<16x32xf32> -> vector<16x32xf32>
    %196 = arith.addf %191, %195 : vector<16x32xf32>
    %197 = vector.extract_strided_slice %180 {offsets = [48, 0], sizes = [16, 16], strides = [1, 1]} : vector<144x16xbf16> to vector<16x16xbf16>
    %c3_140 = arith.constant 3 : index
    %c0_141 = arith.constant 0 : index
    %c0_142 = arith.constant 0 : index
    %198 = vector.load %arg6[%c3_140, %c0_141, %c0_142] : memref<9x16x32xbf16, #tpu.memory_space<vmem>>, vector<1x16x32xbf16>
    %199 = vector.shape_cast %198 : vector<1x16x32xbf16> to vector<16x32xbf16>
    %cst_143 = arith.constant dense<0.000000e+00> : vector<16x32xf32>
    %200 = tpu.matmul %197, %199, %cst_143 {dimension_numbers = #tpu.dot_dimension_numbers<[1], [0], [0], [1], [0, 0, 1, 1], [], []>} : vector<16x16xbf16>, vector<16x32xbf16>, vector<16x32xf32> -> vector<16x32xf32>
    %201 = arith.addf %196, %200 : vector<16x32xf32>
    %202 = vector.extract_strided_slice %180 {offsets = [64, 0], sizes = [16, 16], strides = [1, 1]} : vector<144x16xbf16> to vector<16x16xbf16>
    %c4_144 = arith.constant 4 : index
    %c0_145 = arith.constant 0 : index
    %c0_146 = arith.constant 0 : index
    %203 = vector.load %arg6[%c4_144, %c0_145, %c0_146] : memref<9x16x32xbf16, #tpu.memory_space<vmem>>, vector<1x16x32xbf16>
    %204 = vector.shape_cast %203 : vector<1x16x32xbf16> to vector<16x32xbf16>
    %cst_147 = arith.constant dense<0.000000e+00> : vector<16x32xf32>
    %205 = tpu.matmul %202, %204, %cst_147 {dimension_numbers = #tpu.dot_dimension_numbers<[1], [0], [0], [1], [0, 0, 1, 1], [], []>} : vector<16x16xbf16>, vector<16x32xbf16>, vector<16x32xf32> -> vector<16x32xf32>
    %206 = arith.addf %201, %205 : vector<16x32xf32>
    %207 = vector.extract_strided_slice %180 {offsets = [80, 0], sizes = [16, 16], strides = [1, 1]} : vector<144x16xbf16> to vector<16x16xbf16>
    %c5_148 = arith.constant 5 : index
    %c0_149 = arith.constant 0 : index
    %c0_150 = arith.constant 0 : index
    %208 = vector.load %arg6[%c5_148, %c0_149, %c0_150] : memref<9x16x32xbf16, #tpu.memory_space<vmem>>, vector<1x16x32xbf16>
    %209 = vector.shape_cast %208 : vector<1x16x32xbf16> to vector<16x32xbf16>
    %cst_151 = arith.constant dense<0.000000e+00> : vector<16x32xf32>
    %210 = tpu.matmul %207, %209, %cst_151 {dimension_numbers = #tpu.dot_dimension_numbers<[1], [0], [0], [1], [0, 0, 1, 1], [], []>} : vector<16x16xbf16>, vector<16x32xbf16>, vector<16x32xf32> -> vector<16x32xf32>
    %211 = arith.addf %206, %210 : vector<16x32xf32>
    %212 = vector.extract_strided_slice %180 {offsets = [96, 0], sizes = [16, 16], strides = [1, 1]} : vector<144x16xbf16> to vector<16x16xbf16>
    %c6_152 = arith.constant 6 : index
    %c0_153 = arith.constant 0 : index
    %c0_154 = arith.constant 0 : index
    %213 = vector.load %arg6[%c6_152, %c0_153, %c0_154] : memref<9x16x32xbf16, #tpu.memory_space<vmem>>, vector<1x16x32xbf16>
    %214 = vector.shape_cast %213 : vector<1x16x32xbf16> to vector<16x32xbf16>
    %cst_155 = arith.constant dense<0.000000e+00> : vector<16x32xf32>
    %215 = tpu.matmul %212, %214, %cst_155 {dimension_numbers = #tpu.dot_dimension_numbers<[1], [0], [0], [1], [0, 0, 1, 1], [], []>} : vector<16x16xbf16>, vector<16x32xbf16>, vector<16x32xf32> -> vector<16x32xf32>
    %216 = arith.addf %211, %215 : vector<16x32xf32>
    %217 = vector.extract_strided_slice %180 {offsets = [112, 0], sizes = [16, 16], strides = [1, 1]} : vector<144x16xbf16> to vector<16x16xbf16>
    %c7_156 = arith.constant 7 : index
    %c0_157 = arith.constant 0 : index
    %c0_158 = arith.constant 0 : index
    %218 = vector.load %arg6[%c7_156, %c0_157, %c0_158] : memref<9x16x32xbf16, #tpu.memory_space<vmem>>, vector<1x16x32xbf16>
    %219 = vector.shape_cast %218 : vector<1x16x32xbf16> to vector<16x32xbf16>
    %cst_159 = arith.constant dense<0.000000e+00> : vector<16x32xf32>
    %220 = tpu.matmul %217, %219, %cst_159 {dimension_numbers = #tpu.dot_dimension_numbers<[1], [0], [0], [1], [0, 0, 1, 1], [], []>} : vector<16x16xbf16>, vector<16x32xbf16>, vector<16x32xf32> -> vector<16x32xf32>
    %221 = arith.addf %216, %220 : vector<16x32xf32>
    %222 = vector.extract_strided_slice %180 {offsets = [128, 0], sizes = [16, 16], strides = [1, 1]} : vector<144x16xbf16> to vector<16x16xbf16>
    %c8_160 = arith.constant 8 : index
    %c0_161 = arith.constant 0 : index
    %c0_162 = arith.constant 0 : index
    %223 = vector.load %arg6[%c8_160, %c0_161, %c0_162] : memref<9x16x32xbf16, #tpu.memory_space<vmem>>, vector<1x16x32xbf16>
    %224 = vector.shape_cast %223 : vector<1x16x32xbf16> to vector<16x32xbf16>
    %cst_163 = arith.constant dense<0.000000e+00> : vector<16x32xf32>
    %225 = tpu.matmul %222, %224, %cst_163 {dimension_numbers = #tpu.dot_dimension_numbers<[1], [0], [0], [1], [0, 0, 1, 1], [], []>} : vector<16x16xbf16>, vector<16x32xbf16>, vector<16x32xf32> -> vector<16x32xf32>
    %226 = arith.addf %221, %225 : vector<16x32xf32>
    %227 = vector.broadcast %120 : vector<1x32xf32> to vector<16x32xf32>
    %228 = arith.mulf %226, %227 : vector<16x32xf32>
    %229 = vector.broadcast %119 : vector<1x32xf32> to vector<16x32xf32>
    %230 = arith.addf %228, %229 : vector<16x32xf32>
    %cst_164 = arith.constant 0.000000e+00 : f32
    %231 = vector.broadcast %cst_164 : f32 to vector<16x32xf32>
    %232 = arith.cmpf oge, %230, %231 : vector<16x32xf32>
    %cst_165 = arith.constant 2.000000e-01 : f32
    %233 = vector.broadcast %cst_165 : f32 to vector<16x32xf32>
    %234 = arith.mulf %233, %230 : vector<16x32xf32>
    %235 = arith.select %232, %230, %234 : vector<16x32xi1>, vector<16x32xf32>
    %236 = arith.truncf %235 : vector<16x32xf32> to vector<16x32xbf16>
    %c0_166 = arith.constant 0 : index
    %c0_167 = arith.constant 0 : index
    %237 = vector.load %arg9[%c0_166, %c0_167] : memref<36x16xbf16, #tpu.memory_space<vmem>>, vector<36x16xbf16>
    %c0_168 = arith.constant 0 : index
    %c0_169 = arith.constant 0 : index
    %238 = vector.load %arg12[%c0_168, %c0_169] : memref<1x64xf32, #tpu.memory_space<vmem>>, vector<1x64xf32>
    %c0_170 = arith.constant 0 : index
    %c0_171 = arith.constant 0 : index
    %239 = vector.load %arg11[%c0_170, %c0_171] : memref<1x64xf32, #tpu.memory_space<vmem>>, vector<1x64xf32>
    %cst_172 = arith.constant dense<0.000000e+00> : vector<36x32xf32>
    %240 = tpu.matmul %237, %178, %cst_172 {dimension_numbers = #tpu.dot_dimension_numbers<[1], [0], [0], [1], [0, 0, 1, 1], [], []>} : vector<36x16xbf16>, vector<16x32xbf16>, vector<36x32xf32> -> vector<36x32xf32>
    %241 = arith.truncf %240 : vector<36x32xf32> to vector<36x32xbf16>
    %cst_173 = arith.constant 0.000000e+00 : f32
    %242 = vector.broadcast %cst_173 : f32 to vector<4x64xf32>
    %243 = vector.extract_strided_slice %241 {offsets = [0, 0], sizes = [4, 32], strides = [1, 1]} : vector<36x32xbf16> to vector<4x32xbf16>
    %c0_174 = arith.constant 0 : index
    %c0_175 = arith.constant 0 : index
    %c0_176 = arith.constant 0 : index
    %244 = vector.load %arg10[%c0_174, %c0_175, %c0_176] : memref<9x32x64xbf16, #tpu.memory_space<vmem>>, vector<1x32x64xbf16>
    %245 = vector.shape_cast %244 : vector<1x32x64xbf16> to vector<32x64xbf16>
    %cst_177 = arith.constant dense<0.000000e+00> : vector<4x64xf32>
    %246 = tpu.matmul %243, %245, %cst_177 {dimension_numbers = #tpu.dot_dimension_numbers<[1], [0], [0], [1], [0, 0, 1, 1], [], []>} : vector<4x32xbf16>, vector<32x64xbf16>, vector<4x64xf32> -> vector<4x64xf32>
    %247 = arith.addf %242, %246 : vector<4x64xf32>
    %248 = vector.extract_strided_slice %241 {offsets = [4, 0], sizes = [4, 32], strides = [1, 1]} : vector<36x32xbf16> to vector<4x32xbf16>
    %c1_178 = arith.constant 1 : index
    %c0_179 = arith.constant 0 : index
    %c0_180 = arith.constant 0 : index
    %249 = vector.load %arg10[%c1_178, %c0_179, %c0_180] : memref<9x32x64xbf16, #tpu.memory_space<vmem>>, vector<1x32x64xbf16>
    %250 = vector.shape_cast %249 : vector<1x32x64xbf16> to vector<32x64xbf16>
    %cst_181 = arith.constant dense<0.000000e+00> : vector<4x64xf32>
    %251 = tpu.matmul %248, %250, %cst_181 {dimension_numbers = #tpu.dot_dimension_numbers<[1], [0], [0], [1], [0, 0, 1, 1], [], []>} : vector<4x32xbf16>, vector<32x64xbf16>, vector<4x64xf32> -> vector<4x64xf32>
    %252 = arith.addf %247, %251 : vector<4x64xf32>
    %253 = vector.extract_strided_slice %241 {offsets = [8, 0], sizes = [4, 32], strides = [1, 1]} : vector<36x32xbf16> to vector<4x32xbf16>
    %c2_182 = arith.constant 2 : index
    %c0_183 = arith.constant 0 : index
    %c0_184 = arith.constant 0 : index
    %254 = vector.load %arg10[%c2_182, %c0_183, %c0_184] : memref<9x32x64xbf16, #tpu.memory_space<vmem>>, vector<1x32x64xbf16>
    %255 = vector.shape_cast %254 : vector<1x32x64xbf16> to vector<32x64xbf16>
    %cst_185 = arith.constant dense<0.000000e+00> : vector<4x64xf32>
    %256 = tpu.matmul %253, %255, %cst_185 {dimension_numbers = #tpu.dot_dimension_numbers<[1], [0], [0], [1], [0, 0, 1, 1], [], []>} : vector<4x32xbf16>, vector<32x64xbf16>, vector<4x64xf32> -> vector<4x64xf32>
    %257 = arith.addf %252, %256 : vector<4x64xf32>
    %258 = vector.extract_strided_slice %241 {offsets = [12, 0], sizes = [4, 32], strides = [1, 1]} : vector<36x32xbf16> to vector<4x32xbf16>
    %c3_186 = arith.constant 3 : index
    %c0_187 = arith.constant 0 : index
    %c0_188 = arith.constant 0 : index
    %259 = vector.load %arg10[%c3_186, %c0_187, %c0_188] : memref<9x32x64xbf16, #tpu.memory_space<vmem>>, vector<1x32x64xbf16>
    %260 = vector.shape_cast %259 : vector<1x32x64xbf16> to vector<32x64xbf16>
    %cst_189 = arith.constant dense<0.000000e+00> : vector<4x64xf32>
    %261 = tpu.matmul %258, %260, %cst_189 {dimension_numbers = #tpu.dot_dimension_numbers<[1], [0], [0], [1], [0, 0, 1, 1], [], []>} : vector<4x32xbf16>, vector<32x64xbf16>, vector<4x64xf32> -> vector<4x64xf32>
    %262 = arith.addf %257, %261 : vector<4x64xf32>
    %263 = vector.extract_strided_slice %241 {offsets = [16, 0], sizes = [4, 32], strides = [1, 1]} : vector<36x32xbf16> to vector<4x32xbf16>
    %c4_190 = arith.constant 4 : index
    %c0_191 = arith.constant 0 : index
    %c0_192 = arith.constant 0 : index
    %264 = vector.load %arg10[%c4_190, %c0_191, %c0_192] : memref<9x32x64xbf16, #tpu.memory_space<vmem>>, vector<1x32x64xbf16>
    %265 = vector.shape_cast %264 : vector<1x32x64xbf16> to vector<32x64xbf16>
    %cst_193 = arith.constant dense<0.000000e+00> : vector<4x64xf32>
    %266 = tpu.matmul %263, %265, %cst_193 {dimension_numbers = #tpu.dot_dimension_numbers<[1], [0], [0], [1], [0, 0, 1, 1], [], []>} : vector<4x32xbf16>, vector<32x64xbf16>, vector<4x64xf32> -> vector<4x64xf32>
    %267 = arith.addf %262, %266 : vector<4x64xf32>
    %268 = vector.extract_strided_slice %241 {offsets = [20, 0], sizes = [4, 32], strides = [1, 1]} : vector<36x32xbf16> to vector<4x32xbf16>
    %c5_194 = arith.constant 5 : index
    %c0_195 = arith.constant 0 : index
    %c0_196 = arith.constant 0 : index
    %269 = vector.load %arg10[%c5_194, %c0_195, %c0_196] : memref<9x32x64xbf16, #tpu.memory_space<vmem>>, vector<1x32x64xbf16>
    %270 = vector.shape_cast %269 : vector<1x32x64xbf16> to vector<32x64xbf16>
    %cst_197 = arith.constant dense<0.000000e+00> : vector<4x64xf32>
    %271 = tpu.matmul %268, %270, %cst_197 {dimension_numbers = #tpu.dot_dimension_numbers<[1], [0], [0], [1], [0, 0, 1, 1], [], []>} : vector<4x32xbf16>, vector<32x64xbf16>, vector<4x64xf32> -> vector<4x64xf32>
    %272 = arith.addf %267, %271 : vector<4x64xf32>
    %273 = vector.extract_strided_slice %241 {offsets = [24, 0], sizes = [4, 32], strides = [1, 1]} : vector<36x32xbf16> to vector<4x32xbf16>
    %c6_198 = arith.constant 6 : index
    %c0_199 = arith.constant 0 : index
    %c0_200 = arith.constant 0 : index
    %274 = vector.load %arg10[%c6_198, %c0_199, %c0_200] : memref<9x32x64xbf16, #tpu.memory_space<vmem>>, vector<1x32x64xbf16>
    %275 = vector.shape_cast %274 : vector<1x32x64xbf16> to vector<32x64xbf16>
    %cst_201 = arith.constant dense<0.000000e+00> : vector<4x64xf32>
    %276 = tpu.matmul %273, %275, %cst_201 {dimension_numbers = #tpu.dot_dimension_numbers<[1], [0], [0], [1], [0, 0, 1, 1], [], []>} : vector<4x32xbf16>, vector<32x64xbf16>, vector<4x64xf32> -> vector<4x64xf32>
    %277 = arith.addf %272, %276 : vector<4x64xf32>
    %278 = vector.extract_strided_slice %241 {offsets = [28, 0], sizes = [4, 32], strides = [1, 1]} : vector<36x32xbf16> to vector<4x32xbf16>
    %c7_202 = arith.constant 7 : index
    %c0_203 = arith.constant 0 : index
    %c0_204 = arith.constant 0 : index
    %279 = vector.load %arg10[%c7_202, %c0_203, %c0_204] : memref<9x32x64xbf16, #tpu.memory_space<vmem>>, vector<1x32x64xbf16>
    %280 = vector.shape_cast %279 : vector<1x32x64xbf16> to vector<32x64xbf16>
    %cst_205 = arith.constant dense<0.000000e+00> : vector<4x64xf32>
    %281 = tpu.matmul %278, %280, %cst_205 {dimension_numbers = #tpu.dot_dimension_numbers<[1], [0], [0], [1], [0, 0, 1, 1], [], []>} : vector<4x32xbf16>, vector<32x64xbf16>, vector<4x64xf32> -> vector<4x64xf32>
    %282 = arith.addf %277, %281 : vector<4x64xf32>
    %283 = vector.extract_strided_slice %241 {offsets = [32, 0], sizes = [4, 32], strides = [1, 1]} : vector<36x32xbf16> to vector<4x32xbf16>
    %c8_206 = arith.constant 8 : index
    %c0_207 = arith.constant 0 : index
    %c0_208 = arith.constant 0 : index
    %284 = vector.load %arg10[%c8_206, %c0_207, %c0_208] : memref<9x32x64xbf16, #tpu.memory_space<vmem>>, vector<1x32x64xbf16>
    %285 = vector.shape_cast %284 : vector<1x32x64xbf16> to vector<32x64xbf16>
    %cst_209 = arith.constant dense<0.000000e+00> : vector<4x64xf32>
    %286 = tpu.matmul %283, %285, %cst_209 {dimension_numbers = #tpu.dot_dimension_numbers<[1], [0], [0], [1], [0, 0, 1, 1], [], []>} : vector<4x32xbf16>, vector<32x64xbf16>, vector<4x64xf32> -> vector<4x64xf32>
    %287 = arith.addf %282, %286 : vector<4x64xf32>
    %288 = vector.broadcast %239 : vector<1x64xf32> to vector<4x64xf32>
    %289 = arith.mulf %287, %288 : vector<4x64xf32>
    %290 = vector.broadcast %238 : vector<1x64xf32> to vector<4x64xf32>
    %291 = arith.addf %289, %290 : vector<4x64xf32>
    %cst_210 = arith.constant 0.000000e+00 : f32
    %292 = vector.broadcast %cst_210 : f32 to vector<4x64xf32>
    %293 = arith.cmpf oge, %291, %292 : vector<4x64xf32>
    %cst_211 = arith.constant 2.000000e-01 : f32
    %294 = vector.broadcast %cst_211 : f32 to vector<4x64xf32>
    %295 = arith.mulf %294, %291 : vector<4x64xf32>
    %296 = arith.select %293, %291, %295 : vector<4x64xi1>, vector<4x64xf32>
    %297 = arith.truncf %296 : vector<4x64xf32> to vector<4x64xbf16>
    %cst_212 = arith.constant dense<0.000000e+00> : vector<36x32xf32>
    %298 = tpu.matmul %237, %236, %cst_212 {dimension_numbers = #tpu.dot_dimension_numbers<[1], [0], [0], [1], [0, 0, 1, 1], [], []>} : vector<36x16xbf16>, vector<16x32xbf16>, vector<36x32xf32> -> vector<36x32xf32>
    %299 = arith.truncf %298 : vector<36x32xf32> to vector<36x32xbf16>
    %cst_213 = arith.constant 0.000000e+00 : f32
    %300 = vector.broadcast %cst_213 : f32 to vector<4x64xf32>
    %301 = vector.extract_strided_slice %299 {offsets = [0, 0], sizes = [4, 32], strides = [1, 1]} : vector<36x32xbf16> to vector<4x32xbf16>
    %c0_214 = arith.constant 0 : index
    %c0_215 = arith.constant 0 : index
    %c0_216 = arith.constant 0 : index
    %302 = vector.load %arg10[%c0_214, %c0_215, %c0_216] : memref<9x32x64xbf16, #tpu.memory_space<vmem>>, vector<1x32x64xbf16>
    %303 = vector.shape_cast %302 : vector<1x32x64xbf16> to vector<32x64xbf16>
    %cst_217 = arith.constant dense<0.000000e+00> : vector<4x64xf32>
    %304 = tpu.matmul %301, %303, %cst_217 {dimension_numbers = #tpu.dot_dimension_numbers<[1], [0], [0], [1], [0, 0, 1, 1], [], []>} : vector<4x32xbf16>, vector<32x64xbf16>, vector<4x64xf32> -> vector<4x64xf32>
    %305 = arith.addf %300, %304 : vector<4x64xf32>
    %306 = vector.extract_strided_slice %299 {offsets = [4, 0], sizes = [4, 32], strides = [1, 1]} : vector<36x32xbf16> to vector<4x32xbf16>
    %c1_218 = arith.constant 1 : index
    %c0_219 = arith.constant 0 : index
    %c0_220 = arith.constant 0 : index
    %307 = vector.load %arg10[%c1_218, %c0_219, %c0_220] : memref<9x32x64xbf16, #tpu.memory_space<vmem>>, vector<1x32x64xbf16>
    %308 = vector.shape_cast %307 : vector<1x32x64xbf16> to vector<32x64xbf16>
    %cst_221 = arith.constant dense<0.000000e+00> : vector<4x64xf32>
    %309 = tpu.matmul %306, %308, %cst_221 {dimension_numbers = #tpu.dot_dimension_numbers<[1], [0], [0], [1], [0, 0, 1, 1], [], []>} : vector<4x32xbf16>, vector<32x64xbf16>, vector<4x64xf32> -> vector<4x64xf32>
    %310 = arith.addf %305, %309 : vector<4x64xf32>
    %311 = vector.extract_strided_slice %299 {offsets = [8, 0], sizes = [4, 32], strides = [1, 1]} : vector<36x32xbf16> to vector<4x32xbf16>
    %c2_222 = arith.constant 2 : index
    %c0_223 = arith.constant 0 : index
    %c0_224 = arith.constant 0 : index
    %312 = vector.load %arg10[%c2_222, %c0_223, %c0_224] : memref<9x32x64xbf16, #tpu.memory_space<vmem>>, vector<1x32x64xbf16>
    %313 = vector.shape_cast %312 : vector<1x32x64xbf16> to vector<32x64xbf16>
    %cst_225 = arith.constant dense<0.000000e+00> : vector<4x64xf32>
    %314 = tpu.matmul %311, %313, %cst_225 {dimension_numbers = #tpu.dot_dimension_numbers<[1], [0], [0], [1], [0, 0, 1, 1], [], []>} : vector<4x32xbf16>, vector<32x64xbf16>, vector<4x64xf32> -> vector<4x64xf32>
    %315 = arith.addf %310, %314 : vector<4x64xf32>
    %316 = vector.extract_strided_slice %299 {offsets = [12, 0], sizes = [4, 32], strides = [1, 1]} : vector<36x32xbf16> to vector<4x32xbf16>
    %c3_226 = arith.constant 3 : index
    %c0_227 = arith.constant 0 : index
    %c0_228 = arith.constant 0 : index
    %317 = vector.load %arg10[%c3_226, %c0_227, %c0_228] : memref<9x32x64xbf16, #tpu.memory_space<vmem>>, vector<1x32x64xbf16>
    %318 = vector.shape_cast %317 : vector<1x32x64xbf16> to vector<32x64xbf16>
    %cst_229 = arith.constant dense<0.000000e+00> : vector<4x64xf32>
    %319 = tpu.matmul %316, %318, %cst_229 {dimension_numbers = #tpu.dot_dimension_numbers<[1], [0], [0], [1], [0, 0, 1, 1], [], []>} : vector<4x32xbf16>, vector<32x64xbf16>, vector<4x64xf32> -> vector<4x64xf32>
    %320 = arith.addf %315, %319 : vector<4x64xf32>
    %321 = vector.extract_strided_slice %299 {offsets = [16, 0], sizes = [4, 32], strides = [1, 1]} : vector<36x32xbf16> to vector<4x32xbf16>
    %c4_230 = arith.constant 4 : index
    %c0_231 = arith.constant 0 : index
    %c0_232 = arith.constant 0 : index
    %322 = vector.load %arg10[%c4_230, %c0_231, %c0_232] : memref<9x32x64xbf16, #tpu.memory_space<vmem>>, vector<1x32x64xbf16>
    %323 = vector.shape_cast %322 : vector<1x32x64xbf16> to vector<32x64xbf16>
    %cst_233 = arith.constant dense<0.000000e+00> : vector<4x64xf32>
    %324 = tpu.matmul %321, %323, %cst_233 {dimension_numbers = #tpu.dot_dimension_numbers<[1], [0], [0], [1], [0, 0, 1, 1], [], []>} : vector<4x32xbf16>, vector<32x64xbf16>, vector<4x64xf32> -> vector<4x64xf32>
    %325 = arith.addf %320, %324 : vector<4x64xf32>
    %326 = vector.extract_strided_slice %299 {offsets = [20, 0], sizes = [4, 32], strides = [1, 1]} : vector<36x32xbf16> to vector<4x32xbf16>
    %c5_234 = arith.constant 5 : index
    %c0_235 = arith.constant 0 : index
    %c0_236 = arith.constant 0 : index
    %327 = vector.load %arg10[%c5_234, %c0_235, %c0_236] : memref<9x32x64xbf16, #tpu.memory_space<vmem>>, vector<1x32x64xbf16>
    %328 = vector.shape_cast %327 : vector<1x32x64xbf16> to vector<32x64xbf16>
    %cst_237 = arith.constant dense<0.000000e+00> : vector<4x64xf32>
    %329 = tpu.matmul %326, %328, %cst_237 {dimension_numbers = #tpu.dot_dimension_numbers<[1], [0], [0], [1], [0, 0, 1, 1], [], []>} : vector<4x32xbf16>, vector<32x64xbf16>, vector<4x64xf32> -> vector<4x64xf32>
    %330 = arith.addf %325, %329 : vector<4x64xf32>
    %331 = vector.extract_strided_slice %299 {offsets = [24, 0], sizes = [4, 32], strides = [1, 1]} : vector<36x32xbf16> to vector<4x32xbf16>
    %c6_238 = arith.constant 6 : index
    %c0_239 = arith.constant 0 : index
    %c0_240 = arith.constant 0 : index
    %332 = vector.load %arg10[%c6_238, %c0_239, %c0_240] : memref<9x32x64xbf16, #tpu.memory_space<vmem>>, vector<1x32x64xbf16>
    %333 = vector.shape_cast %332 : vector<1x32x64xbf16> to vector<32x64xbf16>
    %cst_241 = arith.constant dense<0.000000e+00> : vector<4x64xf32>
    %334 = tpu.matmul %331, %333, %cst_241 {dimension_numbers = #tpu.dot_dimension_numbers<[1], [0], [0], [1], [0, 0, 1, 1], [], []>} : vector<4x32xbf16>, vector<32x64xbf16>, vector<4x64xf32> -> vector<4x64xf32>
    %335 = arith.addf %330, %334 : vector<4x64xf32>
    %336 = vector.extract_strided_slice %299 {offsets = [28, 0], sizes = [4, 32], strides = [1, 1]} : vector<36x32xbf16> to vector<4x32xbf16>
    %c7_242 = arith.constant 7 : index
    %c0_243 = arith.constant 0 : index
    %c0_244 = arith.constant 0 : index
    %337 = vector.load %arg10[%c7_242, %c0_243, %c0_244] : memref<9x32x64xbf16, #tpu.memory_space<vmem>>, vector<1x32x64xbf16>
    %338 = vector.shape_cast %337 : vector<1x32x64xbf16> to vector<32x64xbf16>
    %cst_245 = arith.constant dense<0.000000e+00> : vector<4x64xf32>
    %339 = tpu.matmul %336, %338, %cst_245 {dimension_numbers = #tpu.dot_dimension_numbers<[1], [0], [0], [1], [0, 0, 1, 1], [], []>} : vector<4x32xbf16>, vector<32x64xbf16>, vector<4x64xf32> -> vector<4x64xf32>
    %340 = arith.addf %335, %339 : vector<4x64xf32>
    %341 = vector.extract_strided_slice %299 {offsets = [32, 0], sizes = [4, 32], strides = [1, 1]} : vector<36x32xbf16> to vector<4x32xbf16>
    %c8_246 = arith.constant 8 : index
    %c0_247 = arith.constant 0 : index
    %c0_248 = arith.constant 0 : index
    %342 = vector.load %arg10[%c8_246, %c0_247, %c0_248] : memref<9x32x64xbf16, #tpu.memory_space<vmem>>, vector<1x32x64xbf16>
    %343 = vector.shape_cast %342 : vector<1x32x64xbf16> to vector<32x64xbf16>
    %cst_249 = arith.constant dense<0.000000e+00> : vector<4x64xf32>
    %344 = tpu.matmul %341, %343, %cst_249 {dimension_numbers = #tpu.dot_dimension_numbers<[1], [0], [0], [1], [0, 0, 1, 1], [], []>} : vector<4x32xbf16>, vector<32x64xbf16>, vector<4x64xf32> -> vector<4x64xf32>
    %345 = arith.addf %340, %344 : vector<4x64xf32>
    %346 = vector.broadcast %239 : vector<1x64xf32> to vector<4x64xf32>
    %347 = arith.mulf %345, %346 : vector<4x64xf32>
    %348 = vector.broadcast %238 : vector<1x64xf32> to vector<4x64xf32>
    %349 = arith.addf %347, %348 : vector<4x64xf32>
    %cst_250 = arith.constant 0.000000e+00 : f32
    %350 = vector.broadcast %cst_250 : f32 to vector<4x64xf32>
    %351 = arith.cmpf oge, %349, %350 : vector<4x64xf32>
    %cst_251 = arith.constant 2.000000e-01 : f32
    %352 = vector.broadcast %cst_251 : f32 to vector<4x64xf32>
    %353 = arith.mulf %352, %349 : vector<4x64xf32>
    %354 = arith.select %351, %349, %353 : vector<4x64xi1>, vector<4x64xf32>
    %355 = arith.truncf %354 : vector<4x64xf32> to vector<4x64xbf16>
    %c0_252 = arith.constant 0 : index
    %c0_253 = arith.constant 0 : index
    %356 = vector.load %arg13[%c0_252, %c0_253] : memref<9x4xbf16, #tpu.memory_space<vmem>>, vector<9x4xbf16>
    %c0_254 = arith.constant 0 : index
    %c0_255 = arith.constant 0 : index
    %357 = vector.load %arg16[%c0_254, %c0_255] : memref<1x128xf32, #tpu.memory_space<vmem>>, vector<1x128xf32>
    %c0_256 = arith.constant 0 : index
    %c0_257 = arith.constant 0 : index
    %358 = vector.load %arg15[%c0_256, %c0_257] : memref<1x128xf32, #tpu.memory_space<vmem>>, vector<1x128xf32>
    %cst_258 = arith.constant dense<0.000000e+00> : vector<9x64xf32>
    %359 = tpu.matmul %356, %297, %cst_258 {dimension_numbers = #tpu.dot_dimension_numbers<[1], [0], [0], [1], [0, 0, 1, 1], [], []>} : vector<9x4xbf16>, vector<4x64xbf16>, vector<9x64xf32> -> vector<9x64xf32>
    %360 = arith.truncf %359 : vector<9x64xf32> to vector<9x64xbf16>
    %cst_259 = arith.constant 0.000000e+00 : f32
    %361 = vector.broadcast %cst_259 : f32 to vector<1x128xf32>
    %362 = vector.extract_strided_slice %360 {offsets = [0, 0], sizes = [1, 64], strides = [1, 1]} : vector<9x64xbf16> to vector<1x64xbf16>
    %c0_260 = arith.constant 0 : index
    %c0_261 = arith.constant 0 : index
    %c0_262 = arith.constant 0 : index
    %363 = vector.load %arg14[%c0_260, %c0_261, %c0_262] : memref<9x64x128xbf16, #tpu.memory_space<vmem>>, vector<1x64x128xbf16>
    %364 = vector.shape_cast %363 : vector<1x64x128xbf16> to vector<64x128xbf16>
    %cst_263 = arith.constant dense<0.000000e+00> : vector<1x128xf32>
    %365 = tpu.matmul %362, %364, %cst_263 {dimension_numbers = #tpu.dot_dimension_numbers<[1], [0], [0], [1], [0, 0, 1, 1], [], []>} : vector<1x64xbf16>, vector<64x128xbf16>, vector<1x128xf32> -> vector<1x128xf32>
    %366 = arith.addf %361, %365 : vector<1x128xf32>
    %367 = vector.extract_strided_slice %360 {offsets = [1, 0], sizes = [1, 64], strides = [1, 1]} : vector<9x64xbf16> to vector<1x64xbf16>
    %c1_264 = arith.constant 1 : index
    %c0_265 = arith.constant 0 : index
    %c0_266 = arith.constant 0 : index
    %368 = vector.load %arg14[%c1_264, %c0_265, %c0_266] : memref<9x64x128xbf16, #tpu.memory_space<vmem>>, vector<1x64x128xbf16>
    %369 = vector.shape_cast %368 : vector<1x64x128xbf16> to vector<64x128xbf16>
    %cst_267 = arith.constant dense<0.000000e+00> : vector<1x128xf32>
    %370 = tpu.matmul %367, %369, %cst_267 {dimension_numbers = #tpu.dot_dimension_numbers<[1], [0], [0], [1], [0, 0, 1, 1], [], []>} : vector<1x64xbf16>, vector<64x128xbf16>, vector<1x128xf32> -> vector<1x128xf32>
    %371 = arith.addf %366, %370 : vector<1x128xf32>
    %372 = vector.extract_strided_slice %360 {offsets = [2, 0], sizes = [1, 64], strides = [1, 1]} : vector<9x64xbf16> to vector<1x64xbf16>
    %c2_268 = arith.constant 2 : index
    %c0_269 = arith.constant 0 : index
    %c0_270 = arith.constant 0 : index
    %373 = vector.load %arg14[%c2_268, %c0_269, %c0_270] : memref<9x64x128xbf16, #tpu.memory_space<vmem>>, vector<1x64x128xbf16>
    %374 = vector.shape_cast %373 : vector<1x64x128xbf16> to vector<64x128xbf16>
    %cst_271 = arith.constant dense<0.000000e+00> : vector<1x128xf32>
    %375 = tpu.matmul %372, %374, %cst_271 {dimension_numbers = #tpu.dot_dimension_numbers<[1], [0], [0], [1], [0, 0, 1, 1], [], []>} : vector<1x64xbf16>, vector<64x128xbf16>, vector<1x128xf32> -> vector<1x128xf32>
    %376 = arith.addf %371, %375 : vector<1x128xf32>
    %377 = vector.extract_strided_slice %360 {offsets = [3, 0], sizes = [1, 64], strides = [1, 1]} : vector<9x64xbf16> to vector<1x64xbf16>
    %c3_272 = arith.constant 3 : index
    %c0_273 = arith.constant 0 : index
    %c0_274 = arith.constant 0 : index
    %378 = vector.load %arg14[%c3_272, %c0_273, %c0_274] : memref<9x64x128xbf16, #tpu.memory_space<vmem>>, vector<1x64x128xbf16>
    %379 = vector.shape_cast %378 : vector<1x64x128xbf16> to vector<64x128xbf16>
    %cst_275 = arith.constant dense<0.000000e+00> : vector<1x128xf32>
    %380 = tpu.matmul %377, %379, %cst_275 {dimension_numbers = #tpu.dot_dimension_numbers<[1], [0], [0], [1], [0, 0, 1, 1], [], []>} : vector<1x64xbf16>, vector<64x128xbf16>, vector<1x128xf32> -> vector<1x128xf32>
    %381 = arith.addf %376, %380 : vector<1x128xf32>
    %382 = vector.extract_strided_slice %360 {offsets = [4, 0], sizes = [1, 64], strides = [1, 1]} : vector<9x64xbf16> to vector<1x64xbf16>
    %c4_276 = arith.constant 4 : index
    %c0_277 = arith.constant 0 : index
    %c0_278 = arith.constant 0 : index
    %383 = vector.load %arg14[%c4_276, %c0_277, %c0_278] : memref<9x64x128xbf16, #tpu.memory_space<vmem>>, vector<1x64x128xbf16>
    %384 = vector.shape_cast %383 : vector<1x64x128xbf16> to vector<64x128xbf16>
    %cst_279 = arith.constant dense<0.000000e+00> : vector<1x128xf32>
    %385 = tpu.matmul %382, %384, %cst_279 {dimension_numbers = #tpu.dot_dimension_numbers<[1], [0], [0], [1], [0, 0, 1, 1], [], []>} : vector<1x64xbf16>, vector<64x128xbf16>, vector<1x128xf32> -> vector<1x128xf32>
    %386 = arith.addf %381, %385 : vector<1x128xf32>
    %387 = vector.extract_strided_slice %360 {offsets = [5, 0], sizes = [1, 64], strides = [1, 1]} : vector<9x64xbf16> to vector<1x64xbf16>
    %c5_280 = arith.constant 5 : index
    %c0_281 = arith.constant 0 : index
    %c0_282 = arith.constant 0 : index
    %388 = vector.load %arg14[%c5_280, %c0_281, %c0_282] : memref<9x64x128xbf16, #tpu.memory_space<vmem>>, vector<1x64x128xbf16>
    %389 = vector.shape_cast %388 : vector<1x64x128xbf16> to vector<64x128xbf16>
    %cst_283 = arith.constant dense<0.000000e+00> : vector<1x128xf32>
    %390 = tpu.matmul %387, %389, %cst_283 {dimension_numbers = #tpu.dot_dimension_numbers<[1], [0], [0], [1], [0, 0, 1, 1], [], []>} : vector<1x64xbf16>, vector<64x128xbf16>, vector<1x128xf32> -> vector<1x128xf32>
    %391 = arith.addf %386, %390 : vector<1x128xf32>
    %392 = vector.extract_strided_slice %360 {offsets = [6, 0], sizes = [1, 64], strides = [1, 1]} : vector<9x64xbf16> to vector<1x64xbf16>
    %c6_284 = arith.constant 6 : index
    %c0_285 = arith.constant 0 : index
    %c0_286 = arith.constant 0 : index
    %393 = vector.load %arg14[%c6_284, %c0_285, %c0_286] : memref<9x64x128xbf16, #tpu.memory_space<vmem>>, vector<1x64x128xbf16>
    %394 = vector.shape_cast %393 : vector<1x64x128xbf16> to vector<64x128xbf16>
    %cst_287 = arith.constant dense<0.000000e+00> : vector<1x128xf32>
    %395 = tpu.matmul %392, %394, %cst_287 {dimension_numbers = #tpu.dot_dimension_numbers<[1], [0], [0], [1], [0, 0, 1, 1], [], []>} : vector<1x64xbf16>, vector<64x128xbf16>, vector<1x128xf32> -> vector<1x128xf32>
    %396 = arith.addf %391, %395 : vector<1x128xf32>
    %397 = vector.extract_strided_slice %360 {offsets = [7, 0], sizes = [1, 64], strides = [1, 1]} : vector<9x64xbf16> to vector<1x64xbf16>
    %c7_288 = arith.constant 7 : index
    %c0_289 = arith.constant 0 : index
    %c0_290 = arith.constant 0 : index
    %398 = vector.load %arg14[%c7_288, %c0_289, %c0_290] : memref<9x64x128xbf16, #tpu.memory_space<vmem>>, vector<1x64x128xbf16>
    %399 = vector.shape_cast %398 : vector<1x64x128xbf16> to vector<64x128xbf16>
    %cst_291 = arith.constant dense<0.000000e+00> : vector<1x128xf32>
    %400 = tpu.matmul %397, %399, %cst_291 {dimension_numbers = #tpu.dot_dimension_numbers<[1], [0], [0], [1], [0, 0, 1, 1], [], []>} : vector<1x64xbf16>, vector<64x128xbf16>, vector<1x128xf32> -> vector<1x128xf32>
    %401 = arith.addf %396, %400 : vector<1x128xf32>
    %402 = vector.extract_strided_slice %360 {offsets = [8, 0], sizes = [1, 64], strides = [1, 1]} : vector<9x64xbf16> to vector<1x64xbf16>
    %c8_292 = arith.constant 8 : index
    %c0_293 = arith.constant 0 : index
    %c0_294 = arith.constant 0 : index
    %403 = vector.load %arg14[%c8_292, %c0_293, %c0_294] : memref<9x64x128xbf16, #tpu.memory_space<vmem>>, vector<1x64x128xbf16>
    %404 = vector.shape_cast %403 : vector<1x64x128xbf16> to vector<64x128xbf16>
    %cst_295 = arith.constant dense<0.000000e+00> : vector<1x128xf32>
    %405 = tpu.matmul %402, %404, %cst_295 {dimension_numbers = #tpu.dot_dimension_numbers<[1], [0], [0], [1], [0, 0, 1, 1], [], []>} : vector<1x64xbf16>, vector<64x128xbf16>, vector<1x128xf32> -> vector<1x128xf32>
    %406 = arith.addf %401, %405 : vector<1x128xf32>
    %407 = arith.mulf %406, %358 : vector<1x128xf32>
    %408 = arith.addf %407, %357 : vector<1x128xf32>
    %cst_296 = arith.constant 0.000000e+00 : f32
    %409 = vector.broadcast %cst_296 : f32 to vector<1x128xf32>
    %410 = arith.cmpf oge, %408, %409 : vector<1x128xf32>
    %cst_297 = arith.constant 2.000000e-01 : f32
    %411 = vector.broadcast %cst_297 : f32 to vector<1x128xf32>
    %412 = arith.mulf %411, %408 : vector<1x128xf32>
    %413 = arith.select %410, %408, %412 : vector<1x128xi1>, vector<1x128xf32>
    %414 = arith.truncf %413 : vector<1x128xf32> to vector<1x128xbf16>
    %cst_298 = arith.constant dense<0.000000e+00> : vector<9x64xf32>
    %415 = tpu.matmul %356, %355, %cst_298 {dimension_numbers = #tpu.dot_dimension_numbers<[1], [0], [0], [1], [0, 0, 1, 1], [], []>} : vector<9x4xbf16>, vector<4x64xbf16>, vector<9x64xf32> -> vector<9x64xf32>
    %416 = arith.truncf %415 : vector<9x64xf32> to vector<9x64xbf16>
    %cst_299 = arith.constant 0.000000e+00 : f32
    %417 = vector.broadcast %cst_299 : f32 to vector<1x128xf32>
    %418 = vector.extract_strided_slice %416 {offsets = [0, 0], sizes = [1, 64], strides = [1, 1]} : vector<9x64xbf16> to vector<1x64xbf16>
    %c0_300 = arith.constant 0 : index
    %c0_301 = arith.constant 0 : index
    %c0_302 = arith.constant 0 : index
    %419 = vector.load %arg14[%c0_300, %c0_301, %c0_302] : memref<9x64x128xbf16, #tpu.memory_space<vmem>>, vector<1x64x128xbf16>
    %420 = vector.shape_cast %419 : vector<1x64x128xbf16> to vector<64x128xbf16>
    %cst_303 = arith.constant dense<0.000000e+00> : vector<1x128xf32>
    %421 = tpu.matmul %418, %420, %cst_303 {dimension_numbers = #tpu.dot_dimension_numbers<[1], [0], [0], [1], [0, 0, 1, 1], [], []>} : vector<1x64xbf16>, vector<64x128xbf16>, vector<1x128xf32> -> vector<1x128xf32>
    %422 = arith.addf %417, %421 : vector<1x128xf32>
    %423 = vector.extract_strided_slice %416 {offsets = [1, 0], sizes = [1, 64], strides = [1, 1]} : vector<9x64xbf16> to vector<1x64xbf16>
    %c1_304 = arith.constant 1 : index
    %c0_305 = arith.constant 0 : index
    %c0_306 = arith.constant 0 : index
    %424 = vector.load %arg14[%c1_304, %c0_305, %c0_306] : memref<9x64x128xbf16, #tpu.memory_space<vmem>>, vector<1x64x128xbf16>
    %425 = vector.shape_cast %424 : vector<1x64x128xbf16> to vector<64x128xbf16>
    %cst_307 = arith.constant dense<0.000000e+00> : vector<1x128xf32>
    %426 = tpu.matmul %423, %425, %cst_307 {dimension_numbers = #tpu.dot_dimension_numbers<[1], [0], [0], [1], [0, 0, 1, 1], [], []>} : vector<1x64xbf16>, vector<64x128xbf16>, vector<1x128xf32> -> vector<1x128xf32>
    %427 = arith.addf %422, %426 : vector<1x128xf32>
    %428 = vector.extract_strided_slice %416 {offsets = [2, 0], sizes = [1, 64], strides = [1, 1]} : vector<9x64xbf16> to vector<1x64xbf16>
    %c2_308 = arith.constant 2 : index
    %c0_309 = arith.constant 0 : index
    %c0_310 = arith.constant 0 : index
    %429 = vector.load %arg14[%c2_308, %c0_309, %c0_310] : memref<9x64x128xbf16, #tpu.memory_space<vmem>>, vector<1x64x128xbf16>
    %430 = vector.shape_cast %429 : vector<1x64x128xbf16> to vector<64x128xbf16>
    %cst_311 = arith.constant dense<0.000000e+00> : vector<1x128xf32>
    %431 = tpu.matmul %428, %430, %cst_311 {dimension_numbers = #tpu.dot_dimension_numbers<[1], [0], [0], [1], [0, 0, 1, 1], [], []>} : vector<1x64xbf16>, vector<64x128xbf16>, vector<1x128xf32> -> vector<1x128xf32>
    %432 = arith.addf %427, %431 : vector<1x128xf32>
    %433 = vector.extract_strided_slice %416 {offsets = [3, 0], sizes = [1, 64], strides = [1, 1]} : vector<9x64xbf16> to vector<1x64xbf16>
    %c3_312 = arith.constant 3 : index
    %c0_313 = arith.constant 0 : index
    %c0_314 = arith.constant 0 : index
    %434 = vector.load %arg14[%c3_312, %c0_313, %c0_314] : memref<9x64x128xbf16, #tpu.memory_space<vmem>>, vector<1x64x128xbf16>
    %435 = vector.shape_cast %434 : vector<1x64x128xbf16> to vector<64x128xbf16>
    %cst_315 = arith.constant dense<0.000000e+00> : vector<1x128xf32>
    %436 = tpu.matmul %433, %435, %cst_315 {dimension_numbers = #tpu.dot_dimension_numbers<[1], [0], [0], [1], [0, 0, 1, 1], [], []>} : vector<1x64xbf16>, vector<64x128xbf16>, vector<1x128xf32> -> vector<1x128xf32>
    %437 = arith.addf %432, %436 : vector<1x128xf32>
    %438 = vector.extract_strided_slice %416 {offsets = [4, 0], sizes = [1, 64], strides = [1, 1]} : vector<9x64xbf16> to vector<1x64xbf16>
    %c4_316 = arith.constant 4 : index
    %c0_317 = arith.constant 0 : index
    %c0_318 = arith.constant 0 : index
    %439 = vector.load %arg14[%c4_316, %c0_317, %c0_318] : memref<9x64x128xbf16, #tpu.memory_space<vmem>>, vector<1x64x128xbf16>
    %440 = vector.shape_cast %439 : vector<1x64x128xbf16> to vector<64x128xbf16>
    %cst_319 = arith.constant dense<0.000000e+00> : vector<1x128xf32>
    %441 = tpu.matmul %438, %440, %cst_319 {dimension_numbers = #tpu.dot_dimension_numbers<[1], [0], [0], [1], [0, 0, 1, 1], [], []>} : vector<1x64xbf16>, vector<64x128xbf16>, vector<1x128xf32> -> vector<1x128xf32>
    %442 = arith.addf %437, %441 : vector<1x128xf32>
    %443 = vector.extract_strided_slice %416 {offsets = [5, 0], sizes = [1, 64], strides = [1, 1]} : vector<9x64xbf16> to vector<1x64xbf16>
    %c5_320 = arith.constant 5 : index
    %c0_321 = arith.constant 0 : index
    %c0_322 = arith.constant 0 : index
    %444 = vector.load %arg14[%c5_320, %c0_321, %c0_322] : memref<9x64x128xbf16, #tpu.memory_space<vmem>>, vector<1x64x128xbf16>
    %445 = vector.shape_cast %444 : vector<1x64x128xbf16> to vector<64x128xbf16>
    %cst_323 = arith.constant dense<0.000000e+00> : vector<1x128xf32>
    %446 = tpu.matmul %443, %445, %cst_323 {dimension_numbers = #tpu.dot_dimension_numbers<[1], [0], [0], [1], [0, 0, 1, 1], [], []>} : vector<1x64xbf16>, vector<64x128xbf16>, vector<1x128xf32> -> vector<1x128xf32>
    %447 = arith.addf %442, %446 : vector<1x128xf32>
    %448 = vector.extract_strided_slice %416 {offsets = [6, 0], sizes = [1, 64], strides = [1, 1]} : vector<9x64xbf16> to vector<1x64xbf16>
    %c6_324 = arith.constant 6 : index
    %c0_325 = arith.constant 0 : index
    %c0_326 = arith.constant 0 : index
    %449 = vector.load %arg14[%c6_324, %c0_325, %c0_326] : memref<9x64x128xbf16, #tpu.memory_space<vmem>>, vector<1x64x128xbf16>
    %450 = vector.shape_cast %449 : vector<1x64x128xbf16> to vector<64x128xbf16>
    %cst_327 = arith.constant dense<0.000000e+00> : vector<1x128xf32>
    %451 = tpu.matmul %448, %450, %cst_327 {dimension_numbers = #tpu.dot_dimension_numbers<[1], [0], [0], [1], [0, 0, 1, 1], [], []>} : vector<1x64xbf16>, vector<64x128xbf16>, vector<1x128xf32> -> vector<1x128xf32>
    %452 = arith.addf %447, %451 : vector<1x128xf32>
    %453 = vector.extract_strided_slice %416 {offsets = [7, 0], sizes = [1, 64], strides = [1, 1]} : vector<9x64xbf16> to vector<1x64xbf16>
    %c7_328 = arith.constant 7 : index
    %c0_329 = arith.constant 0 : index
    %c0_330 = arith.constant 0 : index
    %454 = vector.load %arg14[%c7_328, %c0_329, %c0_330] : memref<9x64x128xbf16, #tpu.memory_space<vmem>>, vector<1x64x128xbf16>
    %455 = vector.shape_cast %454 : vector<1x64x128xbf16> to vector<64x128xbf16>
    %cst_331 = arith.constant dense<0.000000e+00> : vector<1x128xf32>
    %456 = tpu.matmul %453, %455, %cst_331 {dimension_numbers = #tpu.dot_dimension_numbers<[1], [0], [0], [1], [0, 0, 1, 1], [], []>} : vector<1x64xbf16>, vector<64x128xbf16>, vector<1x128xf32> -> vector<1x128xf32>
    %457 = arith.addf %452, %456 : vector<1x128xf32>
    %458 = vector.extract_strided_slice %416 {offsets = [8, 0], sizes = [1, 64], strides = [1, 1]} : vector<9x64xbf16> to vector<1x64xbf16>
    %c8_332 = arith.constant 8 : index
    %c0_333 = arith.constant 0 : index
    %c0_334 = arith.constant 0 : index
    %459 = vector.load %arg14[%c8_332, %c0_333, %c0_334] : memref<9x64x128xbf16, #tpu.memory_space<vmem>>, vector<1x64x128xbf16>
    %460 = vector.shape_cast %459 : vector<1x64x128xbf16> to vector<64x128xbf16>
    %cst_335 = arith.constant dense<0.000000e+00> : vector<1x128xf32>
    %461 = tpu.matmul %458, %460, %cst_335 {dimension_numbers = #tpu.dot_dimension_numbers<[1], [0], [0], [1], [0, 0, 1, 1], [], []>} : vector<1x64xbf16>, vector<64x128xbf16>, vector<1x128xf32> -> vector<1x128xf32>
    %462 = arith.addf %457, %461 : vector<1x128xf32>
    %463 = arith.mulf %462, %358 : vector<1x128xf32>
    %464 = arith.addf %463, %357 : vector<1x128xf32>
    %cst_336 = arith.constant 0.000000e+00 : f32
    %465 = vector.broadcast %cst_336 : f32 to vector<1x128xf32>
    %466 = arith.cmpf oge, %464, %465 : vector<1x128xf32>
    %cst_337 = arith.constant 2.000000e-01 : f32
    %467 = vector.broadcast %cst_337 : f32 to vector<1x128xf32>
    %468 = arith.mulf %467, %464 : vector<1x128xf32>
    %469 = arith.select %466, %464, %468 : vector<1x128xi1>, vector<1x128xf32>
    %470 = arith.truncf %469 : vector<1x128xf32> to vector<1x128xbf16>
    %c0_338 = arith.constant 0 : index
    %c0_339 = arith.constant 0 : index
    %471 = vector.load %arg18[%c0_338, %c0_339] : memref<1x2xf32, #tpu.memory_space<vmem>>, vector<1x2xf32>
    %c0_340 = arith.constant 0 : index
    %c0_341 = arith.constant 0 : index
    %c0_342 = arith.constant 0 : index
    %472 = vector.load %arg17[%c0_340, %c0_341, %c0_342] : memref<1x128x2xbf16, #tpu.memory_space<vmem>>, vector<1x128x2xbf16>
    %473 = vector.shape_cast %472 : vector<1x128x2xbf16> to vector<128x2xbf16>
    %cst_343 = arith.constant dense<0.000000e+00> : vector<1x2xf32>
    %474 = tpu.matmul %414, %473, %cst_343 {dimension_numbers = #tpu.dot_dimension_numbers<[1], [0], [0], [1], [0, 0, 1, 1], [], []>} : vector<1x128xbf16>, vector<128x2xbf16>, vector<1x2xf32> -> vector<1x2xf32>
    %475 = arith.addf %471, %474 : vector<1x2xf32>
    %c0_344 = arith.constant 0 : index
    %c0_345 = arith.constant 0 : index
    %c0_346 = arith.constant 0 : index
    %476 = vector.load %arg17[%c0_344, %c0_345, %c0_346] : memref<1x128x2xbf16, #tpu.memory_space<vmem>>, vector<1x128x2xbf16>
    %477 = vector.shape_cast %476 : vector<1x128x2xbf16> to vector<128x2xbf16>
    %cst_347 = arith.constant dense<0.000000e+00> : vector<1x2xf32>
    %478 = tpu.matmul %470, %477, %cst_347 {dimension_numbers = #tpu.dot_dimension_numbers<[1], [0], [0], [1], [0, 0, 1, 1], [], []>} : vector<1x128xbf16>, vector<128x2xbf16>, vector<1x2xf32> -> vector<1x2xf32>
    %479 = arith.addf %471, %478 : vector<1x2xf32>
    %480 = tpu.concatenate %475, %479 in 0 : vector<1x2xf32>, vector<1x2xf32> -> vector<2x2xf32>
    %c0_348 = arith.constant 0 : index
    %c0_349 = arith.constant 0 : index
    %c0_350 = arith.constant 0 : index
    %481 = vector.load %arg19[%c0_348, %c0_349, %c0_350] : memref<1x2x2xf32, #tpu.memory_space<vmem>>, vector<1x2x2xf32>
    %482 = vector.shape_cast %481 : vector<1x2x2xf32> to vector<2x2xf32>
    %483 = vector.shape_cast %480 : vector<2x2xf32> to vector<1x2x2xf32>
    tpu.vector_store %arg19[%c0_348, %c0_349, %c0_350], %483 {strides = array<i32>} : memref<1x2x2xf32, #tpu.memory_space<vmem>>, vector<1x2x2xf32>,
    return
  }
  func.func @transform_0(%arg0: i32) -> (i32, i32, i32) {
    %c0_i32 = arith.constant 0 : i32
    %c0_i32_0 = arith.constant 0 : i32
    %c0_i32_1 = arith.constant 0 : i32
    return %arg0, %c0_i32, %c0_i32_0 : i32, i32, i32
  }
  func.func @transform_1(%arg0: i32) -> (i32, i32) {
    %c0_i32 = arith.constant 0 : i32
    %c0_i32_0 = arith.constant 0 : i32
    %c0_i32_1 = arith.constant 0 : i32
    return %c0_i32, %c0_i32_0 : i32, i32
  }
  func.func @transform_2(%arg0: i32) -> (i32, i32, i32) {
    %c0_i32 = arith.constant 0 : i32
    %c0_i32_0 = arith.constant 0 : i32
    %c0_i32_1 = arith.constant 0 : i32
    %c0_i32_2 = arith.constant 0 : i32
    return %c0_i32, %c0_i32_0, %c0_i32_1 : i32, i32, i32
  }
  func.func @transform_3(%arg0: i32) -> (i32, i32) {
    %c0_i32 = arith.constant 0 : i32
    %c0_i32_0 = arith.constant 0 : i32
    %c0_i32_1 = arith.constant 0 : i32
    return %c0_i32, %c0_i32_0 : i32, i32
  }
  func.func @transform_4(%arg0: i32) -> (i32, i32) {
    %c0_i32 = arith.constant 0 : i32
    %c0_i32_0 = arith.constant 0 : i32
    %c0_i32_1 = arith.constant 0 : i32
    return %c0_i32, %c0_i32_0 : i32, i32
  }
  func.func @transform_5(%arg0: i32) -> (i32, i32, i32) {
    %c0_i32 = arith.constant 0 : i32
    %c0_i32_0 = arith.constant 0 : i32
    %c0_i32_1 = arith.constant 0 : i32
    %c0_i32_2 = arith.constant 0 : i32
    return %c0_i32, %c0_i32_0, %c0_i32_1 : i32, i32, i32
  }
  func.func @transform_6(%arg0: i32) -> (i32, i32) {
    %c0_i32 = arith.constant 0 : i32
    %c0_i32_0 = arith.constant 0 : i32
    %c0_i32_1 = arith.constant 0 : i32
    return %c0_i32, %c0_i32_0 : i32, i32
  }
  func.func @transform_7(%arg0: i32) -> (i32, i32) {
    %c0_i32 = arith.constant 0 : i32
    %c0_i32_0 = arith.constant 0 : i32
    %c0_i32_1 = arith.constant 0 : i32
    return %c0_i32, %c0_i32_0 : i32, i32
  }
  func.func @transform_8(%arg0: i32) -> (i32, i32) {
    %c0_i32 = arith.constant 0 : i32
    %c0_i32_0 = arith.constant 0 : i32
    %c0_i32_1 = arith.constant 0 : i32
    return %c0_i32, %c0_i32_0 : i32, i32
  }
  func.func @transform_9(%arg0: i32) -> (i32, i32, i32) {
    %c0_i32 = arith.constant 0 : i32
    %c0_i32_0 = arith.constant 0 : i32
    %c0_i32_1 = arith.constant 0 : i32
    %c0_i32_2 = arith.constant 0 : i32
    return %c0_i32, %c0_i32_0, %c0_i32_1 : i32, i32, i32
  }
  func.func @transform_10(%arg0: i32) -> (i32, i32) {
    %c0_i32 = arith.constant 0 : i32
    %c0_i32_0 = arith.constant 0 : i32
    %c0_i32_1 = arith.constant 0 : i32
    return %c0_i32, %c0_i32_0 : i32, i32
  }
  func.func @transform_11(%arg0: i32) -> (i32, i32) {
    %c0_i32 = arith.constant 0 : i32
    %c0_i32_0 = arith.constant 0 : i32
    %c0_i32_1 = arith.constant 0 : i32
    return %c0_i32, %c0_i32_0 : i32, i32
  }
  func.func @transform_12(%arg0: i32) -> (i32, i32) {
    %c0_i32 = arith.constant 0 : i32
    %c0_i32_0 = arith.constant 0 : i32
    %c0_i32_1 = arith.constant 0 : i32
    return %c0_i32, %c0_i32_0 : i32, i32
  }
  func.func @transform_13(%arg0: i32) -> (i32, i32, i32) {
    %c0_i32 = arith.constant 0 : i32
    %c0_i32_0 = arith.constant 0 : i32
    %c0_i32_1 = arith.constant 0 : i32
    %c0_i32_2 = arith.constant 0 : i32
    return %c0_i32, %c0_i32_0, %c0_i32_1 : i32, i32, i32
  }
  func.func @transform_14(%arg0: i32) -> (i32, i32) {
    %c0_i32 = arith.constant 0 : i32
    %c0_i32_0 = arith.constant 0 : i32
    %c0_i32_1 = arith.constant 0 : i32
    return %c0_i32, %c0_i32_0 : i32, i32
  }
  func.func @transform_15(%arg0: i32) -> (i32, i32) {
    %c0_i32 = arith.constant 0 : i32
    %c0_i32_0 = arith.constant 0 : i32
    %c0_i32_1 = arith.constant 0 : i32
    return %c0_i32, %c0_i32_0 : i32, i32
  }
  func.func @transform_16(%arg0: i32) -> (i32, i32, i32) {
    %c0_i32 = arith.constant 0 : i32
    %c0_i32_0 = arith.constant 0 : i32
    %c0_i32_1 = arith.constant 0 : i32
    %c0_i32_2 = arith.constant 0 : i32
    return %c0_i32, %c0_i32_0, %c0_i32_1 : i32, i32, i32
  }
  func.func @transform_17(%arg0: i32) -> (i32, i32) {
    %c0_i32 = arith.constant 0 : i32
    %c0_i32_0 = arith.constant 0 : i32
    %c0_i32_1 = arith.constant 0 : i32
    return %c0_i32, %c0_i32_0 : i32, i32
  }
  func.func @transform_18(%arg0: i32) -> (i32, i32, i32) {
    %c0_i32 = arith.constant 0 : i32
    %c0_i32_0 = arith.constant 0 : i32
    %c0_i32_1 = arith.constant 0 : i32
    return %arg0, %c0_i32, %c0_i32_0 : i32, i32, i32
  }
}

</mosaic_0001>

<llo_original>
// kernel: coupled_discriminators_forward.1
$region0: #{coupled_discriminators_forward.1}
  #allocation0 [shape = 'u32[]', space=smem, size = 0x4, offset = 0x4, fixed_abs, tag = 'smem constant byte address 0x4 - core index']
  #allocation1 [shape = 'u32[72,128]{1,0:T(1,128)}', space=vmem, size = 0x9000, scoped, tag = 'internal scratch']
  %s0 = inlined_call_operand.vmem [shape: bf16[4,256,4], index: 0, kind: input, shape index: {}]
  %s1 = inlined_call_operand.vmem [shape: bf16[576,256], index: 1, kind: input, shape index: {}]
  %s2 = inlined_call_operand.vmem [shape: bf16[9,4,16], index: 2, kind: input, shape index: {}]
  %s3 = inlined_call_operand.vmem [shape: f32[1,16], index: 3, kind: input, shape index: {}]
  %s4 = inlined_call_operand.vmem [shape: bf16[144,64], index: 4, kind: input, shape index: {}]
  %s5 = inlined_call_operand.vmem [shape: bf16[9,16,32], index: 5, kind: input, shape index: {}]
  %s6 = inlined_call_operand.vmem [shape: f32[1,32], index: 6, kind: input, shape index: {}]
  %s7 = inlined_call_operand.vmem [shape: f32[1,32], index: 7, kind: input, shape index: {}]
  %s8 = inlined_call_operand.vmem [shape: bf16[36,16], index: 8, kind: input, shape index: {}]
  %s9 = inlined_call_operand.vmem [shape: bf16[9,32,64], index: 9, kind: input, shape index: {}]
  %s10 = inlined_call_operand.vmem [shape: f32[1,64], index: 10, kind: input, shape index: {}]
  %s11 = inlined_call_operand.vmem [shape: f32[1,64], index: 11, kind: input, shape index: {}]
  %s12 = inlined_call_operand.vmem [shape: bf16[9,4], index: 12, kind: input, shape index: {}]
  %s13 = inlined_call_operand.vmem [shape: bf16[9,64,128], index: 13, kind: input, shape index: {}]
  %s14 = inlined_call_operand.vmem [shape: f32[1,128], index: 14, kind: input, shape index: {}]
  %s15 = inlined_call_operand.vmem [shape: f32[1,128], index: 15, kind: input, shape index: {}]
  %s16 = inlined_call_operand.vmem [shape: bf16[1,128,2], index: 16, kind: input, shape index: {}]
  %s17 = inlined_call_operand.vmem [shape: f32[1,2], index: 17, kind: input, shape index: {}]
  %s18 = inlined_call_operand.vmem [shape: f32[2,2,2], index: 18, kind: output, shape index: {}]
  %s19 = sld [smem:[#allocation0]]
  $region105: #{coupled_discriminators_forward.1} parent=0
    _
  %s21 = ssub.s32 1, %s19
  %s22 = scalar_select 0, %s21, %s19
  loop: start=0, step=1, limit=4
  $region2: #{coupled_discriminators_forward.1} parent=0 // loop_pre_header
    _
  $region3: #{coupled_discriminators_forward.1} parent=0 // loop_header
    %s24 = sphi 0, %s28
    %p25 = scmp.ge.s32.totalorder %s24, 4
    %s34 = sphi 0, %s36
    %s37 = sphi 0, %s34
    %s38 = sphi 0, %s37
    %s54 = sphi 0, %s38
    %s58 = sphi 0, %s58
    %s60 = sphi 0, %s58
    %s61 = sphi 0, %s60
    %s75 = sphi 0, %s61
    %s79 = sphi 0, %s79
    %s81 = sphi 0, %s79
    %s82 = sphi 0, %s81
    %s96 = sphi 0, %s82
    %s100 = sphi 0, %s100
    %s102 = sphi 0, %s100
    %s103 = sphi 0, %s102
    %s117 = sphi 0, %s103
    %s121 = sphi 0, %s121
    %s123 = sphi 0, %s121
    %s124 = sphi 0, %s123
    %s138 = sphi 0, %s124
    %s142 = sphi 0, %s142
    %s144 = sphi 0, %s142
    %s145 = sphi 0, %s144
    %s159 = sphi 0, %s145
    %s163 = sphi 0, %s163
    %s165 = sphi 0, %s163
    %s166 = sphi 0, %s165
    %s180 = sphi 0, %s166
    %s184 = sphi 0, %s184
    %s186 = sphi 0, %s184
    %s187 = sphi 0, %s186
    %s201 = sphi 0, %s187
    %s205 = sphi 0, %s205
    %s207 = sphi 0, %s205
    %s208 = sphi 0, %s207
    %s222 = sphi 0, %s208
    %s226 = sphi 0, %s226
    %s228 = sphi 0, %s226
    %s229 = sphi 0, %s228
    %s243 = sphi 0, %s229
    %s247 = sphi 0, %s247
    %s249 = sphi 0, %s247
    %s250 = sphi 0, %s249
    %s264 = sphi 0, %s250
    %s268 = sphi 0, %s268
    %s270 = sphi 0, %s268
    %s271 = sphi 0, %s270
    %s285 = sphi 0, %s271
    %s289 = sphi 0, %s289
    %s291 = sphi 0, %s289
    %s292 = sphi 0, %s291
    %s306 = sphi 0, %s292
    %s310 = sphi 0, %s310
    %s312 = sphi 0, %s310
    %s313 = sphi 0, %s312
    %s327 = sphi 0, %s313
    %s331 = sphi 0, %s331
    %s333 = sphi 0, %s331
    %s334 = sphi 0, %s333
    %s348 = sphi 0, %s334
    %s352 = sphi 0, %s352
    %s354 = sphi 0, %s352
    %s355 = sphi 0, %s354
    %s369 = sphi 0, %s355
    %s373 = sphi 0, %s373
    %s375 = sphi 0, %s373
    %s376 = sphi 0, %s375
    %s390 = sphi 0, %s376
    %s394 = sphi 0, %s394
    %s396 = sphi 0, %s394
    %s397 = sphi 0, %s396
    %s411 = sphi 0, %s397
    %s417 = sphi 0, %s419
    %s420 = sphi 0, %s417
    %s421 = sphi 0, %s420
    %s437 = sphi 0, %s421
  $region4: #{coupled_discriminators_forward.1} parent=0 // loop_header_branch
    %27 = sbr.rel (%p25) target = $region8
  $region5: #{coupled_discriminators_forward.1} parent=0 // loop_body
    %s29 = ssub.s32 %s24, 1
    %s30 = ssub.s32 %s24, 2
    %s31 = sadd.s32 %s24, 1
    %s32 = ssub.s32 %s24, %s31
    %p33 = scmp.eq.s32.totalorder %s32, 0
    %s35 = sadd.s32 %s34, 1
    %s36 = scalar_select %p33, %s34, %s35
    %p39 = pneg %p33
    %p40 = scmp.eq.s32.totalorder %s24, 1
    %p41 = por %p39, %p40
    %p42 = scmp.ne.s32.totalorder %s34, %s37
    %p43 = scmp.eq.s32.totalorder %s24, 0
    %p44 = por %p42, %p43
    %p45 = scmp.ne.s32.totalorder %s34, %s37
    %p46 = scmp.eq.s32.totalorder %s29, 1
    %p47 = por %p45, %p46
    %p48 = scmp.ne.s32.totalorder %s37, %s38
    %p49 = scmp.eq.s32.totalorder %s29, 0
    %p50 = por %p48, %p49
    %p51 = scmp.ne.s32.totalorder %s37, %s38
    %p52 = scmp.eq.s32.totalorder %s30, 1
    %p53 = por %p51, %p52
    %p55 = scmp.ne.s32.totalorder %s38, %s54
    %p56 = scmp.eq.s32.totalorder %s30, 0
    %p57 = por %p55, %p56
    %s59 = sadd.s32 %s58, 1
    %p62 = scmp.eq.s32.totalorder %s24, 1
    %p63 = scmp.ne.s32.totalorder %s58, %s60
    %p64 = scmp.eq.s32.totalorder %s24, 0
    %p65 = por %p63, %p64
    %p66 = scmp.ne.s32.totalorder %s58, %s60
    %p67 = scmp.eq.s32.totalorder %s29, 1
    %p68 = por %p66, %p67
    %p69 = scmp.ne.s32.totalorder %s60, %s61
    %p70 = scmp.eq.s32.totalorder %s29, 0
    %p71 = por %p69, %p70
    %p72 = scmp.ne.s32.totalorder %s60, %s61
    %p73 = scmp.eq.s32.totalorder %s30, 1
    %p74 = por %p72, %p73
    %p76 = scmp.ne.s32.totalorder %s61, %s75
    %p77 = scmp.eq.s32.totalorder %s30, 0
    %p78 = por %p76, %p77
    %s80 = sadd.s32 %s79, 1
    %p83 = scmp.eq.s32.totalorder %s24, 1
    %p84 = scmp.ne.s32.totalorder %s79, %s81
    %p85 = scmp.eq.s32.totalorder %s24, 0
    %p86 = por %p84, %p85
    %p87 = scmp.ne.s32.totalorder %s79, %s81
    %p88 = scmp.eq.s32.totalorder %s29, 1
    %p89 = por %p87, %p88
    %p90 = scmp.ne.s32.totalorder %s81, %s82
    %p91 = scmp.eq.s32.totalorder %s29, 0
    %p92 = por %p90, %p91
    %p93 = scmp.ne.s32.totalorder %s81, %s82
    %p94 = scmp.eq.s32.totalorder %s30, 1
    %p95 = por %p93, %p94
    %p97 = scmp.ne.s32.totalorder %s82, %s96
    %p98 = scmp.eq.s32.totalorder %s30, 0
    %p99 = por %p97, %p98
    %s101 = sadd.s32 %s100, 1
    %p104 = scmp.eq.s32.totalorder %s24, 1
    %p105 = scmp.ne.s32.totalorder %s100, %s102
    %p106 = scmp.eq.s32.totalorder %s24, 0
    %p107 = por %p105, %p106
    %p108 = scmp.ne.s32.totalorder %s100, %s102
    %p109 = scmp.eq.s32.totalorder %s29, 1
    %p110 = por %p108, %p109
    %p111 = scmp.ne.s32.totalorder %s102, %s103
    %p112 = scmp.eq.s32.totalorder %s29, 0
    %p113 = por %p111, %p112
    %p114 = scmp.ne.s32.totalorder %s102, %s103
    %p115 = scmp.eq.s32.totalorder %s30, 1
    %p116 = por %p114, %p115
    %p118 = scmp.ne.s32.totalorder %s103, %s117
    %p119 = scmp.eq.s32.totalorder %s30, 0
    %p120 = por %p118, %p119
    %s122 = sadd.s32 %s121, 1
    %p125 = scmp.eq.s32.totalorder %s24, 1
    %p126 = scmp.ne.s32.totalorder %s121, %s123
    %p127 = scmp.eq.s32.totalorder %s24, 0
    %p128 = por %p126, %p127
    %p129 = scmp.ne.s32.totalorder %s121, %s123
    %p130 = scmp.eq.s32.totalorder %s29, 1
    %p131 = por %p129, %p130
    %p132 = scmp.ne.s32.totalorder %s123, %s124
    %p133 = scmp.eq.s32.totalorder %s29, 0
    %p134 = por %p132, %p133
    %p135 = scmp.ne.s32.totalorder %s123, %s124
    %p136 = scmp.eq.s32.totalorder %s30, 1
    %p137 = por %p135, %p136
    %p139 = scmp.ne.s32.totalorder %s124, %s138
    %p140 = scmp.eq.s32.totalorder %s30, 0
    %p141 = por %p139, %p140
    %s143 = sadd.s32 %s142, 1
    %p146 = scmp.eq.s32.totalorder %s24, 1
    %p147 = scmp.ne.s32.totalorder %s142, %s144
    %p148 = scmp.eq.s32.totalorder %s24, 0
    %p149 = por %p147, %p148
    %p150 = scmp.ne.s32.totalorder %s142, %s144
    %p151 = scmp.eq.s32.totalorder %s29, 1
    %p152 = por %p150, %p151
    %p153 = scmp.ne.s32.totalorder %s144, %s145
    %p154 = scmp.eq.s32.totalorder %s29, 0
    %p155 = por %p153, %p154
    %p156 = scmp.ne.s32.totalorder %s144, %s145
    %p157 = scmp.eq.s32.totalorder %s30, 1
    %p158 = por %p156, %p157
    %p160 = scmp.ne.s32.totalorder %s145, %s159
    %p161 = scmp.eq.s32.totalorder %s30, 0
    %p162 = por %p160, %p161
    %s164 = sadd.s32 %s163, 1
    %p167 = scmp.eq.s32.totalorder %s24, 1
    %p168 = scmp.ne.s32.totalorder %s163, %s165
    %p169 = scmp.eq.s32.totalorder %s24, 0
    %p170 = por %p168, %p169
    %p171 = scmp.ne.s32.totalorder %s163, %s165
    %p172 = scmp.eq.s32.totalorder %s29, 1
    %p173 = por %p171, %p172
    %p174 = scmp.ne.s32.totalorder %s165, %s166
    %p175 = scmp.eq.s32.totalorder %s29, 0
    %p176 = por %p174, %p175
    %p177 = scmp.ne.s32.totalorder %s165, %s166
    %p178 = scmp.eq.s32.totalorder %s30, 1
    %p179 = por %p177, %p178
    %p181 = scmp.ne.s32.totalorder %s166, %s180
    %p182 = scmp.eq.s32.totalorder %s30, 0
    %p183 = por %p181, %p182
    %s185 = sadd.s32 %s184, 1
    %p188 = scmp.eq.s32.totalorder %s24, 1
    %p189 = scmp.ne.s32.totalorder %s184, %s186
    %p190 = scmp.eq.s32.totalorder %s24, 0
    %p191 = por %p189, %p190
    %p192 = scmp.ne.s32.totalorder %s184, %s186
    %p193 = scmp.eq.s32.totalorder %s29, 1
    %p194 = por %p192, %p193
    %p195 = scmp.ne.s32.totalorder %s186, %s187
    %p196 = scmp.eq.s32.totalorder %s29, 0
    %p197 = por %p195, %p196
    %p198 = scmp.ne.s32.totalorder %s186, %s187
    %p199 = scmp.eq.s32.totalorder %s30, 1
    %p200 = por %p198, %p199
    %p202 = scmp.ne.s32.totalorder %s187, %s201
    %p203 = scmp.eq.s32.totalorder %s30, 0
    %p204 = por %p202, %p203
    %s206 = sadd.s32 %s205, 1
    %p209 = scmp.eq.s32.totalorder %s24, 1
    %p210 = scmp.ne.s32.totalorder %s205, %s207
    %p211 = scmp.eq.s32.totalorder %s24, 0
    %p212 = por %p210, %p211
    %p213 = scmp.ne.s32.totalorder %s205, %s207
    %p214 = scmp.eq.s32.totalorder %s29, 1
    %p215 = por %p213, %p214
    %p216 = scmp.ne.s32.totalorder %s207, %s208
    %p217 = scmp.eq.s32.totalorder %s29, 0
    %p218 = por %p216, %p217
    %p219 = scmp.ne.s32.totalorder %s207, %s208
    %p220 = scmp.eq.s32.totalorder %s30, 1
    %p221 = por %p219, %p220
    %p223 = scmp.ne.s32.totalorder %s208, %s222
    %p224 = scmp.eq.s32.totalorder %s30, 0
    %p225 = por %p223, %p224
    %s227 = sadd.s32 %s226, 1
    %p230 = scmp.eq.s32.totalorder %s24, 1
    %p231 = scmp.ne.s32.totalorder %s226, %s228
    %p232 = scmp.eq.s32.totalorder %s24, 0
    %p233 = por %p231, %p232
    %p234 = scmp.ne.s32.totalorder %s226, %s228
    %p235 = scmp.eq.s32.totalorder %s29, 1
    %p236 = por %p234, %p235
    %p237 = scmp.ne.s32.totalorder %s228, %s229
    %p238 = scmp.eq.s32.totalorder %s29, 0
    %p239 = por %p237, %p238
    %p240 = scmp.ne.s32.totalorder %s228, %s229
    %p241 = scmp.eq.s32.totalorder %s30, 1
    %p242 = por %p240, %p241
    %p244 = scmp.ne.s32.totalorder %s229, %s243
    %p245 = scmp.eq.s32.totalorder %s30, 0
    %p246 = por %p244, %p245
    %s248 = sadd.s32 %s247, 1
    %p251 = scmp.eq.s32.totalorder %s24, 1
    %p252 = scmp.ne.s32.totalorder %s247, %s249
    %p253 = scmp.eq.s32.totalorder %s24, 0
    %p254 = por %p252, %p253
    %p255 = scmp.ne.s32.totalorder %s247, %s249
    %p256 = scmp.eq.s32.totalorder %s29, 1
    %p257 = por %p255, %p256
    %p258 = scmp.ne.s32.totalorder %s249, %s250
    %p259 = scmp.eq.s32.totalorder %s29, 0
    %p260 = por %p258, %p259
    %p261 = scmp.ne.s32.totalorder %s249, %s250
    %p262 = scmp.eq.s32.totalorder %s30, 1
    %p263 = por %p261, %p262
    %p265 = scmp.ne.s32.totalorder %s250, %s264
    %p266 = scmp.eq.s32.totalorder %s30, 0
    %p267 = por %p265, %p266
    %s269 = sadd.s32 %s268, 1
    %p272 = scmp.eq.s32.totalorder %s24, 1
    %p273 = scmp.ne.s32.totalorder %s268, %s270
    %p274 = scmp.eq.s32.totalorder %s24, 0
    %p275 = por %p273, %p274
    %p276 = scmp.ne.s32.totalorder %s268, %s270
    %p277 = scmp.eq.s32.totalorder %s29, 1
    %p278 = por %p276, %p277
    %p279 = scmp.ne.s32.totalorder %s270, %s271
    %p280 = scmp.eq.s32.totalorder %s29, 0
    %p281 = por %p279, %p280
    %p282 = scmp.ne.s32.totalorder %s270, %s271
    %p283 = scmp.eq.s32.totalorder %s30, 1
    %p284 = por %p282, %p283
    %p286 = scmp.ne.s32.totalorder %s271, %s285
    %p287 = scmp.eq.s32.totalorder %s30, 0
    %p288 = por %p286, %p287
    %s290 = sadd.s32 %s289, 1
    %p293 = scmp.eq.s32.totalorder %s24, 1
    %p294 = scmp.ne.s32.totalorder %s289, %s291
    %p295 = scmp.eq.s32.totalorder %s24, 0
    %p296 = por %p294, %p295
    %p297 = scmp.ne.s32.totalorder %s289, %s291
    %p298 = scmp.eq.s32.totalorder %s29, 1
    %p299 = por %p297, %p298
    %p300 = scmp.ne.s32.totalorder %s291, %s292
    %p301 = scmp.eq.s32.totalorder %s29, 0
    %p302 = por %p300, %p301
    %p303 = scmp.ne.s32.totalorder %s291, %s292
    %p304 = scmp.eq.s32.totalorder %s30, 1
    %p305 = por %p303, %p304
    %p307 = scmp.ne.s32.totalorder %s292, %s306
    %p308 = scmp.eq.s32.totalorder %s30, 0
    %p309 = por %p307, %p308
    %s311 = sadd.s32 %s310, 1
    %p314 = scmp.eq.s32.totalorder %s24, 1
    %p315 = scmp.ne.s32.totalorder %s310, %s312
    %p316 = scmp.eq.s32.totalorder %s24, 0
    %p317 = por %p315, %p316
    %p318 = scmp.ne.s32.totalorder %s310, %s312
    %p319 = scmp.eq.s32.totalorder %s29, 1
    %p320 = por %p318, %p319
    %p321 = scmp.ne.s32.totalorder %s312, %s313
    %p322 = scmp.eq.s32.totalorder %s29, 0
    %p323 = por %p321, %p322
    %p324 = scmp.ne.s32.totalorder %s312, %s313
    %p325 = scmp.eq.s32.totalorder %s30, 1
    %p326 = por %p324, %p325
    %p328 = scmp.ne.s32.totalorder %s313, %s327
    %p329 = scmp.eq.s32.totalorder %s30, 0
    %p330 = por %p328, %p329
    %s332 = sadd.s32 %s331, 1
    %p335 = scmp.eq.s32.totalorder %s24, 1
    %p336 = scmp.ne.s32.totalorder %s331, %s333
    %p337 = scmp.eq.s32.totalorder %s24, 0
    %p338 = por %p336, %p337
    %p339 = scmp.ne.s32.totalorder %s331, %s333
    %p340 = scmp.eq.s32.totalorder %s29, 1
    %p341 = por %p339, %p340
    %p342 = scmp.ne.s32.totalorder %s333, %s334
    %p343 = scmp.eq.s32.totalorder %s29, 0
    %p344 = por %p342, %p343
    %p345 = scmp.ne.s32.totalorder %s333, %s334
    %p346 = scmp.eq.s32.totalorder %s30, 1
    %p347 = por %p345, %p346
    %p349 = scmp.ne.s32.totalorder %s334, %s348
    %p350 = scmp.eq.s32.totalorder %s30, 0
    %p351 = por %p349, %p350
    %s353 = sadd.s32 %s352, 1
    %p356 = scmp.eq.s32.totalorder %s24, 1
    %p357 = scmp.ne.s32.totalorder %s352, %s354
    %p358 = scmp.eq.s32.totalorder %s24, 0
    %p359 = por %p357, %p358
    %p360 = scmp.ne.s32.totalorder %s352, %s354
    %p361 = scmp.eq.s32.totalorder %s29, 1
    %p362 = por %p360, %p361
    %p363 = scmp.ne.s32.totalorder %s354, %s355
    %p364 = scmp.eq.s32.totalorder %s29, 0
    %p365 = por %p363, %p364
    %p366 = scmp.ne.s32.totalorder %s354, %s355
    %p367 = scmp.eq.s32.totalorder %s30, 1
    %p368 = por %p366, %p367
    %p370 = scmp.ne.s32.totalorder %s355, %s369
    %p371 = scmp.eq.s32.totalorder %s30, 0
    %p372 = por %p370, %p371
    %s374 = sadd.s32 %s373, 1
    %p377 = scmp.eq.s32.totalorder %s24, 1
    %p378 = scmp.ne.s32.totalorder %s373, %s375
    %p379 = scmp.eq.s32.totalorder %s24, 0
    %p380 = por %p378, %p379
    %p381 = scmp.ne.s32.totalorder %s373, %s375
    %p382 = scmp.eq.s32.totalorder %s29, 1
    %p383 = por %p381, %p382
    %p384 = scmp.ne.s32.totalorder %s375, %s376
    %p385 = scmp.eq.s32.totalorder %s29, 0
    %p386 = por %p384, %p385
    %p387 = scmp.ne.s32.totalorder %s375, %s376
    %p388 = scmp.eq.s32.totalorder %s30, 1
    %p389 = por %p387, %p388
    %p391 = scmp.ne.s32.totalorder %s376, %s390
    %p392 = scmp.eq.s32.totalorder %s30, 0
    %p393 = por %p391, %p392
    %s395 = sadd.s32 %s394, 1
    %p398 = scmp.eq.s32.totalorder %s24, 1
    %p399 = scmp.ne.s32.totalorder %s394, %s396
    %p400 = scmp.eq.s32.totalorder %s24, 0
    %p401 = por %p399, %p400
    %p402 = scmp.ne.s32.totalorder %s394, %s396
    %p403 = scmp.eq.s32.totalorder %s29, 1
    %p404 = por %p402, %p403
    %p405 = scmp.ne.s32.totalorder %s396, %s397
    %p406 = scmp.eq.s32.totalorder %s29, 0
    %p407 = por %p405, %p406
    %p408 = scmp.ne.s32.totalorder %s396, %s397
    %p409 = scmp.eq.s32.totalorder %s30, 1
    %p410 = por %p408, %p409
    %p412 = scmp.ne.s32.totalorder %s397, %s411
    %p413 = scmp.eq.s32.totalorder %s30, 0
    %p414 = por %p412, %p413
    %s415 = ssub.s32 %s24, %s31
    %p416 = scmp.eq.s32.totalorder %s415, 0
    %s418 = sadd.s32 %s417, 1
    %s419 = scalar_select %p416, %s417, %s418
    %p422 = pneg %p416
    %p423 = scmp.eq.s32.totalorder %s24, 1
    %p424 = por %p422, %p423
    %p425 = scmp.ne.s32.totalorder %s417, %s420
    %p426 = scmp.eq.s32.totalorder %s24, 0
    %p427 = por %p425, %p426
    %p428 = scmp.ne.s32.totalorder %s417, %s420
    %p429 = scmp.eq.s32.totalorder %s29, 1
    %p430 = por %p428, %p429
    %p431 = scmp.ne.s32.totalorder %s420, %s421
    %p432 = scmp.eq.s32.totalorder %s29, 0
    %p433 = por %p431, %p432
    %p434 = scmp.ne.s32.totalorder %s420, %s421
    %p435 = scmp.eq.s32.totalorder %s30, 1
    %p436 = por %p434, %p435
    %p438 = scmp.ne.s32.totalorder %s421, %s437
    %p439 = scmp.eq.s32.totalorder %s30, 0
    %p440 = por %p438, %p439
    %p441 = scmp.le.s32.totalorder 1, %s24
    %p442 = scmp.lt.s32.totalorder %s24, 3
    %p443 = pnand %p441, %p442
    %p444 = pneg %p443
    // Predicated region
    $region9: #{coupled_discriminators_forward.1} parent=5 // pred_check
      _
    $region10: #{coupled_discriminators_forward.1} parent=5 // pred_check_branch
      %446 = sbr.rel (%p443) target = $region12
    $region11: #{coupled_discriminators_forward.1} parent=5 // pred_region
      %s447 = ssub.s32 %s24, 1
      // Predicated region
      $region13: #{coupled_discriminators_forward.1} parent=11 // pred_check
        %p448 = pneg %p71
      $region14: #{coupled_discriminators_forward.1} parent=11 // pred_check_branch
        %450 = sbr.rel (%p448) target = $region16
      $region15: #{coupled_discriminators_forward.1} parent=11 // pred_region
        _
      $region16: #{coupled_discriminators_forward.1} parent=11 // pred_fallthru
        _
      // Predicated region
      $region17: #{coupled_discriminators_forward.1} parent=11 // pred_check
        %p451 = pneg %p92
      $region18: #{coupled_discriminators_forward.1} parent=11 // pred_check_branch
        %453 = sbr.rel (%p451) target = $region20
      $region19: #{coupled_discriminators_forward.1} parent=11 // pred_region
        _
      $region20: #{coupled_discriminators_forward.1} parent=11 // pred_fallthru
        _
      // Predicated region
      $region21: #{coupled_discriminators_forward.1} parent=11 // pred_check
        %p454 = pneg %p113
      $region22: #{coupled_discriminators_forward.1} parent=11 // pred_check_branch
        %456 = sbr.rel (%p454) target = $region24
      $region23: #{coupled_discriminators_forward.1} parent=11 // pred_region
        _
      $region24: #{coupled_discriminators_forward.1} parent=11 // pred_fallthru
        _
      // Predicated region
      $region25: #{coupled_discriminators_forward.1} parent=11 // pred_check
        %p457 = pneg %p134
      $region26: #{coupled_discriminators_forward.1} parent=11 // pred_check_branch
        %459 = sbr.rel (%p457) target = $region28
      $region27: #{coupled_discriminators_forward.1} parent=11 // pred_region
        _
      $region28: #{coupled_discriminators_forward.1} parent=11 // pred_fallthru
        _
      // Predicated region
      $region29: #{coupled_discriminators_forward.1} parent=11 // pred_check
        %p460 = pneg %p155
      $region30: #{coupled_discriminators_forward.1} parent=11 // pred_check_branch
        %462 = sbr.rel (%p460) target = $region32
      $region31: #{coupled_discriminators_forward.1} parent=11 // pred_region
        _
      $region32: #{coupled_discriminators_forward.1} parent=11 // pred_fallthru
        _
      // Predicated region
      $region33: #{coupled_discriminators_forward.1} parent=11 // pred_check
        %p463 = pneg %p176
      $region34: #{coupled_discriminators_forward.1} parent=11 // pred_check_branch
        %465 = sbr.rel (%p463) target = $region36
      $region35: #{coupled_discriminators_forward.1} parent=11 // pred_region
        _
      $region36: #{coupled_discriminators_forward.1} parent=11 // pred_fallthru
        _
      // Predicated region
      $region37: #{coupled_discriminators_forward.1} parent=11 // pred_check
        %p466 = pneg %p197
      $region38: #{coupled_discriminators_forward.1} parent=11 // pred_check_branch
        %468 = sbr.rel (%p466) target = $region40
      $region39: #{coupled_discriminators_forward.1} parent=11 // pred_region
        _
      $region40: #{coupled_discriminators_forward.1} parent=11 // pred_fallthru
        _
      // Predicated region
      $region41: #{coupled_discriminators_forward.1} parent=11 // pred_check
        %p469 = pneg %p218
      $region42: #{coupled_discriminators_forward.1} parent=11 // pred_check_branch
        %471 = sbr.rel (%p469) target = $region44
      $region43: #{coupled_discriminators_forward.1} parent=11 // pred_region
        _
      $region44: #{coupled_discriminators_forward.1} parent=11 // pred_fallthru
        _
      // Predicated region
      $region45: #{coupled_discriminators_forward.1} parent=11 // pred_check
        %p472 = pneg %p239
      $region46: #{coupled_discriminators_forward.1} parent=11 // pred_check_branch
        %474 = sbr.rel (%p472) target = $region48
      $region47: #{coupled_discriminators_forward.1} parent=11 // pred_region
        _
      $region48: #{coupled_discriminators_forward.1} parent=11 // pred_fallthru
        _
      // Predicated region
      $region49: #{coupled_discriminators_forward.1} parent=11 // pred_check
        %p475 = pneg %p260
      $region50: #{coupled_discriminators_forward.1} parent=11 // pred_check_branch
        %477 = sbr.rel (%p475) target = $region52
      $region51: #{coupled_discriminators_forward.1} parent=11 // pred_region
        _
      $region52: #{coupled_discriminators_forward.1} parent=11 // pred_fallthru
        _
      // Predicated region
      $region53: #{coupled_discriminators_forward.1} parent=11 // pred_check
        %p478 = pneg %p281
      $region54: #{coupled_discriminators_forward.1} parent=11 // pred_check_branch
        %480 = sbr.rel (%p478) target = $region56
      $region55: #{coupled_discriminators_forward.1} parent=11 // pred_region
        _
      $region56: #{coupled_discriminators_forward.1} parent=11 // pred_fallthru
        _
      // Predicated region
      $region57: #{coupled_discriminators_forward.1} parent=11 // pred_check
        %p481 = pneg %p302
      $region58: #{coupled_discriminators_forward.1} parent=11 // pred_check_branch
        %483 = sbr.rel (%p481) target = $region60
      $region59: #{coupled_discriminators_forward.1} parent=11 // pred_region
        _
      $region60: #{coupled_discriminators_forward.1} parent=11 // pred_fallthru
        _
      // Predicated region
      $region61: #{coupled_discriminators_forward.1} parent=11 // pred_check
        %p484 = pneg %p323
      $region62: #{coupled_discriminators_forward.1} parent=11 // pred_check_branch
        %486 = sbr.rel (%p484) target = $region64
      $region63: #{coupled_discriminators_forward.1} parent=11 // pred_region
        _
      $region64: #{coupled_discriminators_forward.1} parent=11 // pred_fallthru
        _
      // Predicated region
      $region65: #{coupled_discriminators_forward.1} parent=11 // pred_check
        %p487 = pneg %p344
      $region66: #{coupled_discriminators_forward.1} parent=11 // pred_check_branch
        %489 = sbr.rel (%p487) target = $region68
      $region67: #{coupled_discriminators_forward.1} parent=11 // pred_region
        _
      $region68: #{coupled_discriminators_forward.1} parent=11 // pred_fallthru
        _
      // Predicated region
      $region69: #{coupled_discriminators_forward.1} parent=11 // pred_check
        %p490 = pneg %p365
      $region70: #{coupled_discriminators_forward.1} parent=11 // pred_check_branch
        %492 = sbr.rel (%p490) target = $region72
      $region71: #{coupled_discriminators_forward.1} parent=11 // pred_region
        _
      $region72: #{coupled_discriminators_forward.1} parent=11 // pred_fallthru
        _
      // Predicated region
      $region73: #{coupled_discriminators_forward.1} parent=11 // pred_check
        %p493 = pneg %p386
      $region74: #{coupled_discriminators_forward.1} parent=11 // pred_check_branch
        %495 = sbr.rel (%p493) target = $region76
      $region75: #{coupled_discriminators_forward.1} parent=11 // pred_region
        _
      $region76: #{coupled_discriminators_forward.1} parent=11 // pred_fallthru
        _
      // Predicated region
      $region77: #{coupled_discriminators_forward.1} parent=11 // pred_check
        %p496 = pneg %p407
      $region78: #{coupled_discriminators_forward.1} parent=11 // pred_check_branch
        %498 = sbr.rel (%p496) target = $region80
      $region79: #{coupled_discriminators_forward.1} parent=11 // pred_region
        _
      $region80: #{coupled_discriminators_forward.1} parent=11 // pred_fallthru
        _
    $region12: #{coupled_discriminators_forward.1} parent=5 // pred_fallthru
      _
    %p499 = scmp.lt.s32.totalorder %s24, 2
    // Predicated region
    $region81: #{coupled_discriminators_forward.1} parent=5 // pred_check
      %p500 = pneg %p499
    $region82: #{coupled_discriminators_forward.1} parent=5 // pred_check_branch
      %502 = sbr.rel (%p500) target = $region84
    $region83: #{coupled_discriminators_forward.1} parent=5 // pred_region
      // Predicated region
      $region85: #{coupled_discriminators_forward.1} parent=83 // pred_check
        %p503 = pneg %p44
      $region86: #{coupled_discriminators_forward.1} parent=83 // pred_check_branch
        %505 = sbr.rel (%p503) target = $region88
      $region87: #{coupled_discriminators_forward.1} parent=83 // pred_region
        %s506 = smul.u32 2, %s24
        %p507 = scmp.lt.s32.totalorder %s506, 3
        %s508 = scalar_select %p507, %s506, 3
        %s509 = smul.addr %s508, 32
        %s510 = smul.addr %s509, 4
        %s511 = scalar_lea.vmem %s0, %s510
        %s512 = smul.u32 2, %s24
      $region88: #{coupled_discriminators_forward.1} parent=83 // pred_fallthru
        _
    $region84: #{coupled_discriminators_forward.1} parent=5 // pred_fallthru
      _
    %p513 = scmp.le.s32.totalorder 1, %s24
    %p514 = scmp.lt.s32.totalorder %s24, 3
    %p515 = pnand %p513, %p514
    %p516 = pneg %p515
    // Predicated region
    $region89: #{coupled_discriminators_forward.1} parent=5 // pred_check
      _
    $region90: #{coupled_discriminators_forward.1} parent=5 // pred_check_branch
      %518 = sbr.rel (%p515) target = $region92
    $region91: #{coupled_discriminators_forward.1} parent=5 // pred_region
      %s519 = ssub.s32 %s24, 1
      %s520 = smul.u32 2, %s29
      %p521 = scmp.lt.s32.totalorder %s520, 3
      %s522 = scalar_select %p521, %s520, 3
      %s523 = smul.addr %s522, 32
      %s524 = smul.addr %s523, 4
      %s525 = scalar_lea.vmem %s0, %s524
      %p526 = pneg %p50
      %p527 = pneg %p47
      %p528 = pneg %p71
      %p529 = pneg %p68
      %p530 = pneg %p92
      %p531 = pneg %p89
      %p532 = pneg %p113
      %p533 = pneg %p110
      %p534 = pneg %p134
      %p535 = pneg %p131
      %p536 = pneg %p155
      %p537 = pneg %p152
      %p538 = pneg %p176
      %p539 = pneg %p173
      %p540 = pneg %p197
      %p541 = pneg %p194
      %p542 = pneg %p218
      %p543 = pneg %p215
      %p544 = pneg %p239
      %p545 = pneg %p236
      %p546 = pneg %p260
      %p547 = pneg %p257
      %p548 = pneg %p281
      %p549 = pneg %p278
      %p550 = pneg %p302
      %p551 = pneg %p299
      %p552 = pneg %p323
      %p553 = pneg %p320
      %p554 = pneg %p344
      %p555 = pneg %p341
      %p556 = pneg %p365
      %p557 = pneg %p362
      %p558 = pneg %p386
      %p559 = pneg %p383
      %p560 = pneg %p407
      %p561 = pneg %p404
      %p562 = pneg %p433
      %p563 = pneg %p430
      %p564 = scmp.lt.s32.totalorder %s29, 1
      %s565 = scalar_select %p564, %s29, 1
      %s566 = smul.addr %s565, 2
      %s567 = scalar_lea.vmem %s18, %s566
      %s568 = smul.u32 2, %s29
      %p569 = scmp.lt.s32.totalorder %s568, 3
      %s570 = scalar_select %p569, %s568, 3
      %s571 = smul.addr %s570, 32
      %s572 = smul.addr %s571, 4
      %s573 = scalar_lea.vmem %s0, %s572
      %s574 = smul.u32 2, %s29
      %p575 = scmp.lt.s32.totalorder %s29, 1
      %s576 = scalar_select %p575, %s29, 1
      %s577 = smul.addr %s576, 2
      %s578 = scalar_lea.vmem %s18, %s577
      %v580 = vld [vmem:[%s573] sm:$0xf]
      %v581 = vld [vmem:[%s573 + $0x4] sm:$0xf]
      %v582 = vld [vmem:[%s573 + $0x8] sm:$0xf]
      %v583 = vld [vmem:[%s573 + $0xc] sm:$0xf]
      %v584 = vld [vmem:[%s573 + $0x10] sm:$0xf]
      %v585 = vld [vmem:[%s573 + $0x14] sm:$0xf]
      %v586 = vld [vmem:[%s573 + $0x18] sm:$0xf]
      %v587 = vld [vmem:[%s573 + $0x1c] sm:$0xf]
      %v588 = vld [vmem:[%s573 + $0x20] sm:$0xf]
      %v589 = vld [vmem:[%s573 + $0x24] sm:$0xf]
      %v590 = vld [vmem:[%s573 + $0x28] sm:$0xf]
      %v591 = vld [vmem:[%s573 + $0x2c] sm:$0xf]
      %v592 = vld [vmem:[%s573 + $0x30] sm:$0xf]
      %v593 = vld [vmem:[%s573 + $0x34] sm:$0xf]
      %v594 = vld [vmem:[%s573 + $0x38] sm:$0xf]
      %v595 = vld [vmem:[%s573 + $0x3c] sm:$0xf]
      %v596 = vld [vmem:[%s573 + $0x40] sm:$0xf]
      %v597 = vld [vmem:[%s573 + $0x44] sm:$0xf]
      %v598 = vld [vmem:[%s573 + $0x48] sm:$0xf]
      %v599 = vld [vmem:[%s573 + $0x4c] sm:$0xf]
      %v600 = vld [vmem:[%s573 + $0x50] sm:$0xf]
      %v601 = vld [vmem:[%s573 + $0x54] sm:$0xf]
      %v602 = vld [vmem:[%s573 + $0x58] sm:$0xf]
      %v603 = vld [vmem:[%s573 + $0x5c] sm:$0xf]
      %v604 = vld [vmem:[%s573 + $0x60] sm:$0xf]
      %v605 = vld [vmem:[%s573 + $0x64] sm:$0xf]
      %v606 = vld [vmem:[%s573 + $0x68] sm:$0xf]
      %v607 = vld [vmem:[%s573 + $0x6c] sm:$0xf]
      %v608 = vld [vmem:[%s573 + $0x70] sm:$0xf]
      %v609 = vld [vmem:[%s573 + $0x74] sm:$0xf]
      %v610 = vld [vmem:[%s573 + $0x78] sm:$0xf]
      %v611 = vld [vmem:[%s573 + $0x7c] sm:$0xf]
      %s612 = scalar_lea.vmem %s573, 128
      %v613 = vld [vmem:[%s612] sm:$0xf]
      %v614 = vld [vmem:[%s612 + $0x4] sm:$0xf]
      %v615 = vld [vmem:[%s612 + $0x8] sm:$0xf]
      %v616 = vld [vmem:[%s612 + $0xc] sm:$0xf]
      %v617 = vld [vmem:[%s612 + $0x10] sm:$0xf]
      %v618 = vld [vmem:[%s612 + $0x14] sm:$0xf]
      %v619 = vld [vmem:[%s612 + $0x18] sm:$0xf]
      %v620 = vld [vmem:[%s612 + $0x1c] sm:$0xf]
      %v621 = vld [vmem:[%s612 + $0x20] sm:$0xf]
      %v622 = vld [vmem:[%s612 + $0x24] sm:$0xf]
      %v623 = vld [vmem:[%s612 + $0x28] sm:$0xf]
      %v624 = vld [vmem:[%s612 + $0x2c] sm:$0xf]
      %v625 = vld [vmem:[%s612 + $0x30] sm:$0xf]
      %v626 = vld [vmem:[%s612 + $0x34] sm:$0xf]
      %v627 = vld [vmem:[%s612 + $0x38] sm:$0xf]
      %v628 = vld [vmem:[%s612 + $0x3c] sm:$0xf]
      %v629 = vld [vmem:[%s612 + $0x40] sm:$0xf]
      %v630 = vld [vmem:[%s612 + $0x44] sm:$0xf]
      %v631 = vld [vmem:[%s612 + $0x48] sm:$0xf]
      %v632 = vld [vmem:[%s612 + $0x4c] sm:$0xf]
      %v633 = vld [vmem:[%s612 + $0x50] sm:$0xf]
      %v634 = vld [vmem:[%s612 + $0x54] sm:$0xf]
      %v635 = vld [vmem:[%s612 + $0x58] sm:$0xf]
      %v636 = vld [vmem:[%s612 + $0x5c] sm:$0xf]
      %v637 = vld [vmem:[%s612 + $0x60] sm:$0xf]
      %v638 = vld [vmem:[%s612 + $0x64] sm:$0xf]
      %v639 = vld [vmem:[%s612 + $0x68] sm:$0xf]
      %v640 = vld [vmem:[%s612 + $0x6c] sm:$0xf]
      %v641 = vld [vmem:[%s612 + $0x70] sm:$0xf]
      %v642 = vld [vmem:[%s612 + $0x74] sm:$0xf]
      %v643 = vld [vmem:[%s612 + $0x78] sm:$0xf]
      %v644 = vld [vmem:[%s612 + $0x7c] sm:$0xf]
      %v645 = vld [vmem:[%s1] sm:$0xff]
      %v646 = vld [vmem:[%s1 + $0x8] sm:$0xff]
      %v647 = vld [vmem:[%s1 + $0x10] sm:$0xff]
      %v648 = vld [vmem:[%s1 + $0x18] sm:$0xff]
      %v649 = vld [vmem:[%s1 + $0x20] sm:$0xff]
      %v650 = vld [vmem:[%s1 + $0x28] sm:$0xff]
      %v651 = vld [vmem:[%s1 + $0x30] sm:$0xff]
      %v652 = vld [vmem:[%s1 + $0x38] sm:$0xff]
      %v653 = vld [vmem:[%s1 + $0x40] sm:$0xff]
      %v654 = vld [vmem:[%s1 + $0x48] sm:$0xff]
      %v655 = vld [vmem:[%s1 + $0x50] sm:$0xff]
      %v656 = vld [vmem:[%s1 + $0x58] sm:$0xff]
      %v657 = vld [vmem:[%s1 + $0x60] sm:$0xff]
      %v658 = vld [vmem:[%s1 + $0x68] sm:$0xff]
      %v659 = vld [vmem:[%s1 + $0x70] sm:$0xff]
      %v660 = vld [vmem:[%s1 + $0x78] sm:$0xff]
      %v661 = vld [vmem:[%s1 + $0x80] sm:$0xff]
      %v662 = vld [vmem:[%s1 + $0x88] sm:$0xff]
      %v663 = vld [vmem:[%s1 + $0x90] sm:$0xff]
      %v664 = vld [vmem:[%s1 + $0x98] sm:$0xff]
      %v665 = vld [vmem:[%s1 + $0xa0] sm:$0xff]
      %v666 = vld [vmem:[%s1 + $0xa8] sm:$0xff]
      %v667 = vld [vmem:[%s1 + $0xb0] sm:$0xff]
      %v668 = vld [vmem:[%s1 + $0xb8] sm:$0xff]
      %v669 = vld [vmem:[%s1 + $0xc0] sm:$0xff]
      %v670 = vld [vmem:[%s1 + $0xc8] sm:$0xff]
      %v671 = vld [vmem:[%s1 + $0xd0] sm:$0xff]
      %v672 = vld [vmem:[%s1 + $0xd8] sm:$0xff]
      %v673 = vld [vmem:[%s1 + $0xe0] sm:$0xff]
      %v674 = vld [vmem:[%s1 + $0xe8] sm:$0xff]
      %v675 = vld [vmem:[%s1 + $0xf0] sm:$0xff]
      %v676 = vld [vmem:[%s1 + $0xf8] sm:$0xff]
      %v677 = vld [vmem:[%s1 + $0x100] sm:$0xff]
      %v678 = vld [vmem:[%s1 + $0x108] sm:$0xff]
      %v679 = vld [vmem:[%s1 + $0x110] sm:$0xff]
      %v680 = vld [vmem:[%s1 + $0x118] sm:$0xff]
      %v681 = vld [vmem:[%s1 + $0x120] sm:$0xff]
      %v682 = vld [vmem:[%s1 + $0x128] sm:$0xff]
      %v683 = vld [vmem:[%s1 + $0x130] sm:$0xff]
      %v684 = vld [vmem:[%s1 + $0x138] sm:$0xff]
      %v685 = vld [vmem:[%s1 + $0x140] sm:$0xff]
      %v686 = vld [vmem:[%s1 + $0x148] sm:$0xff]
      %v687 = vld [vmem:[%s1 + $0x150] sm:$0xff]
      %v688 = vld [vmem:[%s1 + $0x158] sm:$0xff]
      %v689 = vld [vmem:[%s1 + $0x160] sm:$0xff]
      %v690 = vld [vmem:[%s1 + $0x168] sm:$0xff]
      %v691 = vld [vmem:[%s1 + $0x170] sm:$0xff]
      %v692 = vld [vmem:[%s1 + $0x178] sm:$0xff]
      %v693 = vld [vmem:[%s1 + $0x180] sm:$0xff]
      %v694 = vld [vmem:[%s1 + $0x188] sm:$0xff]
      %v695 = vld [vmem:[%s1 + $0x190] sm:$0xff]
      %v696 = vld [vmem:[%s1 + $0x198] sm:$0xff]
      %v697 = vld [vmem:[%s1 + $0x1a0] sm:$0xff]
      %v698 = vld [vmem:[%s1 + $0x1a8] sm:$0xff]
      %v699 = vld [vmem:[%s1 + $0x1b0] sm:$0xff]
      %v700 = vld [vmem:[%s1 + $0x1b8] sm:$0xff]
      %v701 = vld [vmem:[%s1 + $0x1c0] sm:$0xff]
      %v702 = vld [vmem:[%s1 + $0x1c8] sm:$0xff]
      %v703 = vld [vmem:[%s1 + $0x1d0] sm:$0xff]
      %v704 = vld [vmem:[%s1 + $0x1d8] sm:$0xff]
      %v705 = vld [vmem:[%s1 + $0x1e0] sm:$0xff]
      %v706 = vld [vmem:[%s1 + $0x1e8] sm:$0xff]
      %v707 = vld [vmem:[%s1 + $0x1f0] sm:$0xff]
      %v708 = vld [vmem:[%s1 + $0x1f8] sm:$0xff]
      %v709 = vld [vmem:[%s1 + $0x200] sm:$0xff]
      %v710 = vld [vmem:[%s1 + $0x208] sm:$0xff]
      %v711 = vld [vmem:[%s1 + $0x210] sm:$0xff]
      %v712 = vld [vmem:[%s1 + $0x218] sm:$0xff]
      %v713 = vld [vmem:[%s1 + $0x220] sm:$0xff]
      %v714 = vld [vmem:[%s1 + $0x228] sm:$0xff]
      %v715 = vld [vmem:[%s1 + $0x230] sm:$0xff]
      %v716 = vld [vmem:[%s1 + $0x238] sm:$0xff]
      %v717 = vld [vmem:[%s3] sm:$0x1]
      %v790 = vunpack.c.l.b16 %v645
      %v791 = vunpack.c.h.b16 %v645
      %v792 = vunpack.c.l.b16 %v646
      %v793 = vunpack.c.h.b16 %v646
      %v794 = vunpack.c.l.b16 %v647
      %v795 = vunpack.c.h.b16 %v647
      %v796 = vunpack.c.l.b16 %v648
      %v797 = vunpack.c.h.b16 %v648
      %v798 = vunpack.c.l.b16 %v649
      %v799 = vunpack.c.h.b16 %v649
      %v800 = vunpack.c.l.b16 %v650
      %v801 = vunpack.c.h.b16 %v650
      %v802 = vunpack.c.l.b16 %v651
      %v803 = vunpack.c.h.b16 %v651
      %v804 = vunpack.c.l.b16 %v652
      %v805 = vunpack.c.h.b16 %v652
      %v806 = vunpack.c.l.b16 %v653
      %v807 = vunpack.c.h.b16 %v653
      %v808 = vunpack.c.l.b16 %v654
      %v809 = vunpack.c.h.b16 %v654
      %v810 = vunpack.c.l.b16 %v655
      %v811 = vunpack.c.h.b16 %v655
      %v812 = vunpack.c.l.b16 %v656
      %v813 = vunpack.c.h.b16 %v656
      %v814 = vunpack.c.l.b16 %v657
      %v815 = vunpack.c.h.b16 %v657
      %v816 = vunpack.c.l.b16 %v658
      %v817 = vunpack.c.h.b16 %v658
      %v818 = vunpack.c.l.b16 %v659
      %v819 = vunpack.c.h.b16 %v659
      %v820 = vunpack.c.l.b16 %v660
      %v821 = vunpack.c.h.b16 %v660
      %v822 = vunpack.c.l.b16 %v661
      %v823 = vunpack.c.h.b16 %v661
      %v824 = vunpack.c.l.b16 %v662
      %v825 = vunpack.c.h.b16 %v662
      %v826 = vunpack.c.l.b16 %v663
      %v827 = vunpack.c.h.b16 %v663
      %v828 = vunpack.c.l.b16 %v664
      %v829 = vunpack.c.h.b16 %v664
      %v830 = vunpack.c.l.b16 %v665
      %v831 = vunpack.c.h.b16 %v665
      %v832 = vunpack.c.l.b16 %v666
      %v833 = vunpack.c.h.b16 %v666
      %v834 = vunpack.c.l.b16 %v667
      %v835 = vunpack.c.h.b16 %v667
      %v836 = vunpack.c.l.b16 %v668
      %v837 = vunpack.c.h.b16 %v668
      %v838 = vunpack.c.l.b16 %v669
      %v839 = vunpack.c.h.b16 %v669
      %v840 = vunpack.c.l.b16 %v670
      %v841 = vunpack.c.h.b16 %v670
      %v842 = vunpack.c.l.b16 %v671
      %v843 = vunpack.c.h.b16 %v671
      %v844 = vunpack.c.l.b16 %v672
      %v845 = vunpack.c.h.b16 %v672
      %v846 = vunpack.c.l.b16 %v673
      %v847 = vunpack.c.h.b16 %v673
      %v848 = vunpack.c.l.b16 %v674
      %v849 = vunpack.c.h.b16 %v674
      %v850 = vunpack.c.l.b16 %v675
      %v851 = vunpack.c.h.b16 %v675
      %v852 = vunpack.c.l.b16 %v676
      %v853 = vunpack.c.h.b16 %v676
      %v854 = vunpack.c.l.b16 %v677
      %v855 = vunpack.c.h.b16 %v677
      %v856 = vunpack.c.l.b16 %v678
      %v857 = vunpack.c.h.b16 %v678
      %v858 = vunpack.c.l.b16 %v679
      %v859 = vunpack.c.h.b16 %v679
      %v860 = vunpack.c.l.b16 %v680
      %v861 = vunpack.c.h.b16 %v680
      %v862 = vunpack.c.l.b16 %v681
      %v863 = vunpack.c.h.b16 %v681
      %v864 = vunpack.c.l.b16 %v682
      %v865 = vunpack.c.h.b16 %v682
      %v866 = vunpack.c.l.b16 %v683
      %v867 = vunpack.c.h.b16 %v683
      %v868 = vunpack.c.l.b16 %v684
      %v869 = vunpack.c.h.b16 %v684
      %v870 = vunpack.c.l.b16 %v685
      %v871 = vunpack.c.h.b16 %v685
      %v872 = vunpack.c.l.b16 %v686
      %v873 = vunpack.c.h.b16 %v686
      %v874 = vunpack.c.l.b16 %v687
      %v875 = vunpack.c.h.b16 %v687
      %v876 = vunpack.c.l.b16 %v688
      %v877 = vunpack.c.h.b16 %v688
      %v878 = vunpack.c.l.b16 %v689
      %v879 = vunpack.c.h.b16 %v689
      %v880 = vunpack.c.l.b16 %v690
      %v881 = vunpack.c.h.b16 %v690
      %v882 = vunpack.c.l.b16 %v691
      %v883 = vunpack.c.h.b16 %v691
      %v884 = vunpack.c.l.b16 %v692
      %v885 = vunpack.c.h.b16 %v692
      %v886 = vunpack.c.l.b16 %v693
      %v887 = vunpack.c.h.b16 %v693
      %v888 = vunpack.c.l.b16 %v694
      %v889 = vunpack.c.h.b16 %v694
      %v890 = vunpack.c.l.b16 %v695
      %v891 = vunpack.c.h.b16 %v695
      %v892 = vunpack.c.l.b16 %v696
      %v893 = vunpack.c.h.b16 %v696
      %v894 = vunpack.c.l.b16 %v697
      %v895 = vunpack.c.h.b16 %v697
      %v896 = vunpack.c.l.b16 %v698
      %v897 = vunpack.c.h.b16 %v698
      %v898 = vunpack.c.l.b16 %v699
      %v899 = vunpack.c.h.b16 %v699
      %v900 = vunpack.c.l.b16 %v700
      %v901 = vunpack.c.h.b16 %v700
      %v902 = vunpack.c.l.b16 %v701
      %v903 = vunpack.c.h.b16 %v701
      %v904 = vunpack.c.l.b16 %v702
      %v905 = vunpack.c.h.b16 %v702
      %v906 = vunpack.c.l.b16 %v703
      %v907 = vunpack.c.h.b16 %v703
      %v908 = vunpack.c.l.b16 %v704
      %v909 = vunpack.c.h.b16 %v704
      %v910 = vunpack.c.l.b16 %v705
      %v911 = vunpack.c.h.b16 %v705
      %v912 = vunpack.c.l.b16 %v706
      %v913 = vunpack.c.h.b16 %v706
      %v914 = vunpack.c.l.b16 %v707
      %v915 = vunpack.c.h.b16 %v707
      %v916 = vunpack.c.l.b16 %v708
      %v917 = vunpack.c.h.b16 %v708
      %v918 = vunpack.c.l.b16 %v709
      %v919 = vunpack.c.h.b16 %v709
      %v920 = vunpack.c.l.b16 %v710
      %v921 = vunpack.c.h.b16 %v710
      %v922 = vunpack.c.l.b16 %v711
      %v923 = vunpack.c.h.b16 %v711
      %v924 = vunpack.c.l.b16 %v712
      %v925 = vunpack.c.h.b16 %v712
      %v926 = vunpack.c.l.b16 %v713
      %v927 = vunpack.c.h.b16 %v713
      %v928 = vunpack.c.l.b16 %v714
      %v929 = vunpack.c.h.b16 %v714
      %v930 = vunpack.c.l.b16 %v715
      %v931 = vunpack.c.h.b16 %v715
      %v932 = vunpack.c.l.b16 %v716
      %v933 = vunpack.c.h.b16 %v716
      %v934 = vpack.c.b16 %v792, %v790
      %v935 = vpack.c.b16 %v793, %v791
      %v936 = vpack.c.b16 %v796, %v794
      %v937 = vpack.c.b16 %v797, %v795
      %v938 = vpack.c.b16 %v800, %v798
      %v939 = vpack.c.b16 %v801, %v799
      %v940 = vpack.c.b16 %v804, %v802
      %v941 = vpack.c.b16 %v805, %v803
      %v942 = vpack.c.b16 %v808, %v806
      %v943 = vpack.c.b16 %v809, %v807
      %v944 = vpack.c.b16 %v812, %v810
      %v945 = vpack.c.b16 %v813, %v811
      %v946 = vpack.c.b16 %v816, %v814
      %v947 = vpack.c.b16 %v817, %v815
      %v948 = vpack.c.b16 %v820, %v818
      %v949 = vpack.c.b16 %v821, %v819
      %v950 = vpack.c.b16 %v824, %v822
      %v951 = vpack.c.b16 %v825, %v823
      %v952 = vpack.c.b16 %v828, %v826
      %v953 = vpack.c.b16 %v829, %v827
      %v954 = vpack.c.b16 %v832, %v830
      %v955 = vpack.c.b16 %v833, %v831
      %v956 = vpack.c.b16 %v836, %v834
      %v957 = vpack.c.b16 %v837, %v835
      %v958 = vpack.c.b16 %v840, %v838
      %v959 = vpack.c.b16 %v841, %v839
      %v960 = vpack.c.b16 %v844, %v842
      %v961 = vpack.c.b16 %v845, %v843
      %v962 = vpack.c.b16 %v848, %v846
      %v963 = vpack.c.b16 %v849, %v847
      %v964 = vpack.c.b16 %v852, %v850
      %v965 = vpack.c.b16 %v853, %v851
      %v966 = vpack.c.b16 %v856, %v854
      %v967 = vpack.c.b16 %v857, %v855
      %v968 = vpack.c.b16 %v860, %v858
      %v969 = vpack.c.b16 %v861, %v859
      %v970 = vpack.c.b16 %v864, %v862
      %v971 = vpack.c.b16 %v865, %v863
      %v972 = vpack.c.b16 %v868, %v866
      %v973 = vpack.c.b16 %v869, %v867
      %v974 = vpack.c.b16 %v872, %v870
      %v975 = vpack.c.b16 %v873, %v871
      %v976 = vpack.c.b16 %v876, %v874
      %v977 = vpack.c.b16 %v877, %v875
      %v978 = vpack.c.b16 %v880, %v878
      %v979 = vpack.c.b16 %v881, %v879
      %v980 = vpack.c.b16 %v884, %v882
      %v981 = vpack.c.b16 %v885, %v883
      %v982 = vpack.c.b16 %v888, %v886
      %v983 = vpack.c.b16 %v889, %v887
      %v984 = vpack.c.b16 %v892, %v890
      %v985 = vpack.c.b16 %v893, %v891
      %v986 = vpack.c.b16 %v896, %v894
      %v987 = vpack.c.b16 %v897, %v895
      %v988 = vpack.c.b16 %v900, %v898
      %v989 = vpack.c.b16 %v901, %v899
      %v990 = vpack.c.b16 %v904, %v902
      %v991 = vpack.c.b16 %v905, %v903
      %v992 = vpack.c.b16 %v908, %v906
      %v993 = vpack.c.b16 %v909, %v907
      %v994 = vpack.c.b16 %v912, %v910
      %v995 = vpack.c.b16 %v913, %v911
      %v996 = vpack.c.b16 %v916, %v914
      %v997 = vpack.c.b16 %v917, %v915
      %v998 = vpack.c.b16 %v920, %v918
      %v999 = vpack.c.b16 %v921, %v919
      %v1000 = vpack.c.b16 %v924, %v922
      %v1001 = vpack.c.b16 %v925, %v923
      %v1002 = vpack.c.b16 %v928, %v926
      %v1003 = vpack.c.b16 %v929, %v927
      %v1004 = vpack.c.b16 %v932, %v930
      %v1005 = vpack.c.b16 %v933, %v931
      %v1110 = vunpack.c.l.b16 %v580
      %v1111 = vunpack.c.l.b16 %v581
      %v1112 = vunpack.c.l.b16 %v582
      %v1113 = vunpack.c.l.b16 %v583
      %v1114 = vunpack.c.l.b16 %v584
      %v1115 = vunpack.c.l.b16 %v585
      %v1116 = vunpack.c.l.b16 %v586
      %v1117 = vunpack.c.l.b16 %v587
      %v1118 = vunpack.c.l.b16 %v588
      %v1119 = vunpack.c.l.b16 %v589
      %v1120 = vunpack.c.l.b16 %v590
      %v1121 = vunpack.c.l.b16 %v591
      %v1122 = vunpack.c.l.b16 %v592
      %v1123 = vunpack.c.l.b16 %v593
      %v1124 = vunpack.c.l.b16 %v594
      %v1125 = vunpack.c.l.b16 %v595
      %v1126 = vunpack.c.l.b16 %v596
      %v1127 = vunpack.c.l.b16 %v597
      %v1128 = vunpack.c.l.b16 %v598
      %v1129 = vunpack.c.l.b16 %v599
      %v1130 = vunpack.c.l.b16 %v600
      %v1131 = vunpack.c.l.b16 %v601
      %v1132 = vunpack.c.l.b16 %v602
      %v1133 = vunpack.c.l.b16 %v603
      %v1134 = vunpack.c.l.b16 %v604
      %v1135 = vunpack.c.l.b16 %v605
      %v1136 = vunpack.c.l.b16 %v606
      %v1137 = vunpack.c.l.b16 %v607
      %v1138 = vunpack.c.l.b16 %v608
      %v1139 = vunpack.c.l.b16 %v609
      %v1140 = vunpack.c.l.b16 %v610
      %v1141 = vunpack.c.l.b16 %v611
      %v1142 = vpack.c.b16 %v1111, %v1110
      %v1143 = vpack.c.b16 %v1113, %v1112
      %v1144 = vpack.c.b16 %v1115, %v1114
      %v1145 = vpack.c.b16 %v1117, %v1116
      %v1146 = vpack.c.b16 %v1119, %v1118
      %v1147 = vpack.c.b16 %v1121, %v1120
      %v1148 = vpack.c.b16 %v1123, %v1122
      %v1149 = vpack.c.b16 %v1125, %v1124
      %v1150 = vpack.c.b16 %v1127, %v1126
      %v1151 = vpack.c.b16 %v1129, %v1128
      %v1152 = vpack.c.b16 %v1131, %v1130
      %v1153 = vpack.c.b16 %v1133, %v1132
      %v1154 = vpack.c.b16 %v1135, %v1134
      %v1155 = vpack.c.b16 %v1137, %v1136
      %v1156 = vpack.c.b16 %v1139, %v1138
      %v1157 = vpack.c.b16 %v1141, %v1140
      %1174 = vmatpush.bf16.msra.mxu0 %v1149
      %1175 = vmatpush.bf16.msra.mxu0 %v1148
      %1176 = vmatpush.bf16.msra.mxu0 %v1147
      %1177 = vmatpush.bf16.msra.mxu0 %v1146
      %1178 = vmatpush.bf16.msra.mxu0 %v1145
      %1179 = vmatpush.bf16.msra.mxu0 %v1144
      %1180 = vmatpush.bf16.msra.mxu0 %v1143
      %1181 = vmatpush.bf16.msra.mxu0 %v1142
      %1182 = vmatmul.bf16.gmra.mxu0 %v934
      %v1183 = vpop.f32.mrf.mxu0
      %v1184 = vadd.f32 0.0, %v1183
      %v1185 = vpop.f32.mrf.mxu0
      %v1186 = vadd.f32 0.0, %v1185
      %1187 = vmatmul.bf16.gmra.mxu0 %v936
      %v1188 = vpop.f32.mrf.mxu0
      %v1189 = vadd.f32 0.0, %v1188
      %v1190 = vpop.f32.mrf.mxu0
      %v1191 = vadd.f32 0.0, %v1190
      %1192 = vmatmul.bf16.gmra.mxu0 %v938
      %v1193 = vpop.f32.mrf.mxu0
      %v1194 = vadd.f32 0.0, %v1193
      %v1195 = vpop.f32.mrf.mxu0
      %v1196 = vadd.f32 0.0, %v1195
      %1197 = vmatmul.bf16.gmra.mxu0 %v940
      %v1198 = vpop.f32.mrf.mxu0
      %v1199 = vadd.f32 0.0, %v1198
      %v1200 = vpop.f32.mrf.mxu0
      %v1201 = vadd.f32 0.0, %v1200
      %1202 = vmatmul.bf16.gmra.mxu0 %v942
      %v1203 = vpop.f32.mrf.mxu0
      %v1204 = vadd.f32 0.0, %v1203
      %v1205 = vpop.f32.mrf.mxu0
      %v1206 = vadd.f32 0.0, %v1205
      %1207 = vmatmul.bf16.gmra.mxu0 %v944
      %v1208 = vpop.f32.mrf.mxu0
      %v1209 = vadd.f32 0.0, %v1208
      %v1210 = vpop.f32.mrf.mxu0
      %v1211 = vadd.f32 0.0, %v1210
      %1212 = vmatmul.bf16.gmra.mxu0 %v946
      %v1213 = vpop.f32.mrf.mxu0
      %v1214 = vadd.f32 0.0, %v1213
      %v1215 = vpop.f32.mrf.mxu0
      %v1216 = vadd.f32 0.0, %v1215
      %1217 = vmatmul.bf16.gmra.mxu0 %v948
      %v1218 = vpop.f32.mrf.mxu0
      %v1219 = vadd.f32 0.0, %v1218
      %v1220 = vpop.f32.mrf.mxu0
      %v1221 = vadd.f32 0.0, %v1220
      %1222 = vmatmul.bf16.gmra.mxu0 %v950
      %v1223 = vpop.f32.mrf.mxu0
      %v1224 = vadd.f32 0.0, %v1223
      %v1225 = vpop.f32.mrf.mxu0
      %v1226 = vadd.f32 0.0, %v1225
      %1227 = vmatmul.bf16.gmra.mxu0 %v952
      %v1228 = vpop.f32.mrf.mxu0
      %v1229 = vadd.f32 0.0, %v1228
      %v1230 = vpop.f32.mrf.mxu0
      %v1231 = vadd.f32 0.0, %v1230
      %1232 = vmatmul.bf16.gmra.mxu0 %v954
      %v1233 = vpop.f32.mrf.mxu0
      %v1234 = vadd.f32 0.0, %v1233
      %v1235 = vpop.f32.mrf.mxu0
      %v1236 = vadd.f32 0.0, %v1235
      %1237 = vmatmul.bf16.gmra.mxu0 %v956
      %v1238 = vpop.f32.mrf.mxu0
      %v1239 = vadd.f32 0.0, %v1238
      %v1240 = vpop.f32.mrf.mxu0
      %v1241 = vadd.f32 0.0, %v1240
      %1242 = vmatmul.bf16.gmra.mxu0 %v958
      %v1243 = vpop.f32.mrf.mxu0
      %v1244 = vadd.f32 0.0, %v1243
      %v1245 = vpop.f32.mrf.mxu0
      %v1246 = vadd.f32 0.0, %v1245
      %1247 = vmatmul.bf16.gmra.mxu0 %v960
      %v1248 = vpop.f32.mrf.mxu0
      %v1249 = vadd.f32 0.0, %v1248
      %v1250 = vpop.f32.mrf.mxu0
      %v1251 = vadd.f32 0.0, %v1250
      %1252 = vmatmul.bf16.gmra.mxu0 %v962
      %v1253 = vpop.f32.mrf.mxu0
      %v1254 = vadd.f32 0.0, %v1253
      %v1255 = vpop.f32.mrf.mxu0
      %v1256 = vadd.f32 0.0, %v1255
      %1257 = vmatmul.bf16.gmra.mxu0 %v964
      %v1258 = vpop.f32.mrf.mxu0
      %v1259 = vadd.f32 0.0, %v1258
      %v1260 = vpop.f32.mrf.mxu0
      %v1261 = vadd.f32 0.0, %v1260
      %1262 = vmatmul.bf16.gmra.mxu0 %v966
      %v1263 = vpop.f32.mrf.mxu0
      %v1264 = vadd.f32 0.0, %v1263
      %v1265 = vpop.f32.mrf.mxu0
      %v1266 = vadd.f32 0.0, %v1265
      %1267 = vmatmul.bf16.gmra.mxu0 %v968
      %v1268 = vpop.f32.mrf.mxu0
      %v1269 = vadd.f32 0.0, %v1268
      %v1270 = vpop.f32.mrf.mxu0
      %v1271 = vadd.f32 0.0, %v1270
      %1272 = vmatmul.bf16.gmra.mxu0 %v970
      %v1273 = vpop.f32.mrf.mxu0
      %v1274 = vadd.f32 0.0, %v1273
      %v1275 = vpop.f32.mrf.mxu0
      %v1276 = vadd.f32 0.0, %v1275
      %1277 = vmatmul.bf16.gmra.mxu0 %v972
      %v1278 = vpop.f32.mrf.mxu0
      %v1279 = vadd.f32 0.0, %v1278
      %v1280 = vpop.f32.mrf.mxu0
      %v1281 = vadd.f32 0.0, %v1280
      %1282 = vmatmul.bf16.gmra.mxu0 %v974
      %v1283 = vpop.f32.mrf.mxu0
      %v1284 = vadd.f32 0.0, %v1283
      %v1285 = vpop.f32.mrf.mxu0
      %v1286 = vadd.f32 0.0, %v1285
      %1287 = vmatmul.bf16.gmra.mxu0 %v976
      %v1288 = vpop.f32.mrf.mxu0
      %v1289 = vadd.f32 0.0, %v1288
      %v1290 = vpop.f32.mrf.mxu0
      %v1291 = vadd.f32 0.0, %v1290
      %1292 = vmatmul.bf16.gmra.mxu0 %v978
      %v1293 = vpop.f32.mrf.mxu0
      %v1294 = vadd.f32 0.0, %v1293
      %v1295 = vpop.f32.mrf.mxu0
      %v1296 = vadd.f32 0.0, %v1295
      %1297 = vmatmul.bf16.gmra.mxu0 %v980
      %v1298 = vpop.f32.mrf.mxu0
      %v1299 = vadd.f32 0.0, %v1298
      %v1300 = vpop.f32.mrf.mxu0
      %v1301 = vadd.f32 0.0, %v1300
      %1302 = vmatmul.bf16.gmra.mxu0 %v982
      %v1303 = vpop.f32.mrf.mxu0
      %v1304 = vadd.f32 0.0, %v1303
      %v1305 = vpop.f32.mrf.mxu0
      %v1306 = vadd.f32 0.0, %v1305
      %1307 = vmatmul.bf16.gmra.mxu0 %v984
      %v1308 = vpop.f32.mrf.mxu0
      %v1309 = vadd.f32 0.0, %v1308
      %v1310 = vpop.f32.mrf.mxu0
      %v1311 = vadd.f32 0.0, %v1310
      %1312 = vmatmul.bf16.gmra.mxu0 %v986
      %v1313 = vpop.f32.mrf.mxu0
      %v1314 = vadd.f32 0.0, %v1313
      %v1315 = vpop.f32.mrf.mxu0
      %v1316 = vadd.f32 0.0, %v1315
      %1317 = vmatmul.bf16.gmra.mxu0 %v988
      %v1318 = vpop.f32.mrf.mxu0
      %v1319 = vadd.f32 0.0, %v1318
      %v1320 = vpop.f32.mrf.mxu0
      %v1321 = vadd.f32 0.0, %v1320
      %1322 = vmatmul.bf16.gmra.mxu0 %v990
      %v1323 = vpop.f32.mrf.mxu0
      %v1324 = vadd.f32 0.0, %v1323
      %v1325 = vpop.f32.mrf.mxu0
      %v1326 = vadd.f32 0.0, %v1325
      %1327 = vmatmul.bf16.gmra.mxu0 %v992
      %v1328 = vpop.f32.mrf.mxu0
      %v1329 = vadd.f32 0.0, %v1328
      %v1330 = vpop.f32.mrf.mxu0
      %v1331 = vadd.f32 0.0, %v1330
      %1332 = vmatmul.bf16.gmra.mxu0 %v994
      %v1333 = vpop.f32.mrf.mxu0
      %v1334 = vadd.f32 0.0, %v1333
      %v1335 = vpop.f32.mrf.mxu0
      %v1336 = vadd.f32 0.0, %v1335
      %1337 = vmatmul.bf16.gmra.mxu0 %v996
      %v1338 = vpop.f32.mrf.mxu0
      %v1339 = vadd.f32 0.0, %v1338
      %v1340 = vpop.f32.mrf.mxu0
      %v1341 = vadd.f32 0.0, %v1340
      %1342 = vmatmul.bf16.gmra.mxu0 %v998
      %v1343 = vpop.f32.mrf.mxu0
      %v1344 = vadd.f32 0.0, %v1343
      %v1345 = vpop.f32.mrf.mxu0
      %v1346 = vadd.f32 0.0, %v1345
      %1347 = vmatmul.bf16.gmra.mxu0 %v1000
      %v1348 = vpop.f32.mrf.mxu0
      %v1349 = vadd.f32 0.0, %v1348
      %v1350 = vpop.f32.mrf.mxu0
      %v1351 = vadd.f32 0.0, %v1350
      %1352 = vmatmul.bf16.gmra.mxu0 %v1002
      %v1353 = vpop.f32.mrf.mxu0
      %v1354 = vadd.f32 0.0, %v1353
      %v1355 = vpop.f32.mrf.mxu0
      %v1356 = vadd.f32 0.0, %v1355
      %1357 = vmatmul.bf16.gmra.mxu0 %v1004
      %v1358 = vpop.f32.mrf.mxu0
      %v1359 = vadd.f32 0.0, %v1358
      %v1360 = vpop.f32.mrf.mxu0
      %v1361 = vadd.f32 0.0, %v1360
      %1362 = vdwg.mxu0
      %1363 = vmatpush.bf16.msra.mxu0 %v1157
      %1364 = vmatpush.bf16.msra.mxu0 %v1156
      %1365 = vmatpush.bf16.msra.mxu0 %v1155
      %1366 = vmatpush.bf16.msra.mxu0 %v1154
      %1367 = vmatpush.bf16.msra.mxu0 %v1153
      %1368 = vmatpush.bf16.msra.mxu0 %v1152
      %1369 = vmatpush.bf16.msra.mxu0 %v1151
      %1370 = vmatpush.bf16.msra.mxu0 %v1150
      %1371 = vmatmul.bf16.gmra.mxu0 %v935
      %v1372 = vpop.f32.mrf.mxu0
      %v1373 = vadd.f32 %v1184, %v1372
      %v1374 = vpop.f32.mrf.mxu0
      %v1375 = vadd.f32 %v1186, %v1374
      %1376 = vmatmul.bf16.gmra.mxu0 %v937
      %v1377 = vpop.f32.mrf.mxu0
      %v1378 = vadd.f32 %v1189, %v1377
      %v1379 = vpop.f32.mrf.mxu0
      %v1380 = vadd.f32 %v1191, %v1379
      %1381 = vmatmul.bf16.gmra.mxu0 %v939
      %v1382 = vpop.f32.mrf.mxu0
      %v1383 = vadd.f32 %v1194, %v1382
      %v1384 = vpop.f32.mrf.mxu0
      %v1385 = vadd.f32 %v1196, %v1384
      %1386 = vmatmul.bf16.gmra.mxu0 %v941
      %v1387 = vpop.f32.mrf.mxu0
      %v1388 = vadd.f32 %v1199, %v1387
      %v1389 = vpop.f32.mrf.mxu0
      %v1390 = vadd.f32 %v1201, %v1389
      %1391 = vmatmul.bf16.gmra.mxu0 %v943
      %v1392 = vpop.f32.mrf.mxu0
      %v1393 = vadd.f32 %v1204, %v1392
      %v1394 = vpop.f32.mrf.mxu0
      %v1395 = vadd.f32 %v1206, %v1394
      %1396 = vmatmul.bf16.gmra.mxu0 %v945
      %v1397 = vpop.f32.mrf.mxu0
      %v1398 = vadd.f32 %v1209, %v1397
      %v1399 = vpop.f32.mrf.mxu0
      %v1400 = vadd.f32 %v1211, %v1399
      %1401 = vmatmul.bf16.gmra.mxu0 %v947
      %v1402 = vpop.f32.mrf.mxu0
      %v1403 = vadd.f32 %v1214, %v1402
      %v1404 = vpop.f32.mrf.mxu0
      %v1405 = vadd.f32 %v1216, %v1404
      %1406 = vmatmul.bf16.gmra.mxu0 %v949
      %v1407 = vpop.f32.mrf.mxu0
      %v1408 = vadd.f32 %v1219, %v1407
      %v1409 = vpop.f32.mrf.mxu0
      %v1410 = vadd.f32 %v1221, %v1409
      %1411 = vmatmul.bf16.gmra.mxu0 %v951
      %v1412 = vpop.f32.mrf.mxu0
      %v1413 = vadd.f32 %v1224, %v1412
      %v1414 = vpop.f32.mrf.mxu0
      %v1415 = vadd.f32 %v1226, %v1414
      %1416 = vmatmul.bf16.gmra.mxu0 %v953
      %v1417 = vpop.f32.mrf.mxu0
      %v1418 = vadd.f32 %v1229, %v1417
      %v1419 = vpop.f32.mrf.mxu0
      %v1420 = vadd.f32 %v1231, %v1419
      %1421 = vmatmul.bf16.gmra.mxu0 %v955
      %v1422 = vpop.f32.mrf.mxu0
      %v1423 = vadd.f32 %v1234, %v1422
      %v1424 = vpop.f32.mrf.mxu0
      %v1425 = vadd.f32 %v1236, %v1424
      %1426 = vmatmul.bf16.gmra.mxu0 %v957
      %v1427 = vpop.f32.mrf.mxu0
      %v1428 = vadd.f32 %v1239, %v1427
      %v1429 = vpop.f32.mrf.mxu0
      %v1430 = vadd.f32 %v1241, %v1429
      %1431 = vmatmul.bf16.gmra.mxu0 %v959
      %v1432 = vpop.f32.mrf.mxu0
      %v1433 = vadd.f32 %v1244, %v1432
      %v1434 = vpop.f32.mrf.mxu0
      %v1435 = vadd.f32 %v1246, %v1434
      %1436 = vmatmul.bf16.gmra.mxu0 %v961
      %v1437 = vpop.f32.mrf.mxu0
      %v1438 = vadd.f32 %v1249, %v1437
      %v1439 = vpop.f32.mrf.mxu0
      %v1440 = vadd.f32 %v1251, %v1439
      %1441 = vmatmul.bf16.gmra.mxu0 %v963
      %v1442 = vpop.f32.mrf.mxu0
      %v1443 = vadd.f32 %v1254, %v1442
      %v1444 = vpop.f32.mrf.mxu0
      %v1445 = vadd.f32 %v1256, %v1444
      %1446 = vmatmul.bf16.gmra.mxu0 %v965
      %v1447 = vpop.f32.mrf.mxu0
      %v1448 = vadd.f32 %v1259, %v1447
      %v1449 = vpop.f32.mrf.mxu0
      %v1450 = vadd.f32 %v1261, %v1449
      %1451 = vmatmul.bf16.gmra.mxu0 %v967
      %v1452 = vpop.f32.mrf.mxu0
      %v1453 = vadd.f32 %v1264, %v1452
      %v1454 = vpop.f32.mrf.mxu0
      %v1455 = vadd.f32 %v1266, %v1454
      %1456 = vmatmul.bf16.gmra.mxu0 %v969
      %v1457 = vpop.f32.mrf.mxu0
      %v1458 = vadd.f32 %v1269, %v1457
      %v1459 = vpop.f32.mrf.mxu0
      %v1460 = vadd.f32 %v1271, %v1459
      %1461 = vmatmul.bf16.gmra.mxu0 %v971
      %v1462 = vpop.f32.mrf.mxu0
      %v1463 = vadd.f32 %v1274, %v1462
      %v1464 = vpop.f32.mrf.mxu0
      %v1465 = vadd.f32 %v1276, %v1464
      %1466 = vmatmul.bf16.gmra.mxu0 %v973
      %v1467 = vpop.f32.mrf.mxu0
      %v1468 = vadd.f32 %v1279, %v1467
      %v1469 = vpop.f32.mrf.mxu0
      %v1470 = vadd.f32 %v1281, %v1469
      %1471 = vmatmul.bf16.gmra.mxu0 %v975
      %v1472 = vpop.f32.mrf.mxu0
      %v1473 = vadd.f32 %v1284, %v1472
      %v1474 = vpop.f32.mrf.mxu0
      %v1475 = vadd.f32 %v1286, %v1474
      %1476 = vmatmul.bf16.gmra.mxu0 %v977
      %v1477 = vpop.f32.mrf.mxu0
      %v1478 = vadd.f32 %v1289, %v1477
      %v1479 = vpop.f32.mrf.mxu0
      %v1480 = vadd.f32 %v1291, %v1479
      %1481 = vmatmul.bf16.gmra.mxu0 %v979
      %v1482 = vpop.f32.mrf.mxu0
      %v1483 = vadd.f32 %v1294, %v1482
      %v1484 = vpop.f32.mrf.mxu0
      %v1485 = vadd.f32 %v1296, %v1484
      %1486 = vmatmul.bf16.gmra.mxu0 %v981
      %v1487 = vpop.f32.mrf.mxu0
      %v1488 = vadd.f32 %v1299, %v1487
      %v1489 = vpop.f32.mrf.mxu0
      %v1490 = vadd.f32 %v1301, %v1489
      %1491 = vmatmul.bf16.gmra.mxu0 %v983
      %v1492 = vpop.f32.mrf.mxu0
      %v1493 = vadd.f32 %v1304, %v1492
      %v1494 = vpop.f32.mrf.mxu0
      %v1495 = vadd.f32 %v1306, %v1494
      %1496 = vmatmul.bf16.gmra.mxu0 %v985
      %v1497 = vpop.f32.mrf.mxu0
      %v1498 = vadd.f32 %v1309, %v1497
      %v1499 = vpop.f32.mrf.mxu0
      %v1500 = vadd.f32 %v1311, %v1499
      %1501 = vmatmul.bf16.gmra.mxu0 %v987
      %v1502 = vpop.f32.mrf.mxu0
      %v1503 = vadd.f32 %v1314, %v1502
      %v1504 = vpop.f32.mrf.mxu0
      %v1505 = vadd.f32 %v1316, %v1504
      %1506 = vmatmul.bf16.gmra.mxu0 %v989
      %v1507 = vpop.f32.mrf.mxu0
      %v1508 = vadd.f32 %v1319, %v1507
      %v1509 = vpop.f32.mrf.mxu0
      %v1510 = vadd.f32 %v1321, %v1509
      %1511 = vmatmul.bf16.gmra.mxu0 %v991
      %v1512 = vpop.f32.mrf.mxu0
      %v1513 = vadd.f32 %v1324, %v1512
      %v1514 = vpop.f32.mrf.mxu0
      %v1515 = vadd.f32 %v1326, %v1514
      %1516 = vmatmul.bf16.gmra.mxu0 %v993
      %v1517 = vpop.f32.mrf.mxu0
      %v1518 = vadd.f32 %v1329, %v1517
      %v1519 = vpop.f32.mrf.mxu0
      %v1520 = vadd.f32 %v1331, %v1519
      %1521 = vmatmul.bf16.gmra.mxu0 %v995
      %v1522 = vpop.f32.mrf.mxu0
      %v1523 = vadd.f32 %v1334, %v1522
      %v1524 = vpop.f32.mrf.mxu0
      %v1525 = vadd.f32 %v1336, %v1524
      %1526 = vmatmul.bf16.gmra.mxu0 %v997
      %v1527 = vpop.f32.mrf.mxu0
      %v1528 = vadd.f32 %v1339, %v1527
      %v1529 = vpop.f32.mrf.mxu0
      %v1530 = vadd.f32 %v1341, %v1529
      %1531 = vmatmul.bf16.gmra.mxu0 %v999
      %v1532 = vpop.f32.mrf.mxu0
      %v1533 = vadd.f32 %v1344, %v1532
      %v1534 = vpop.f32.mrf.mxu0
      %v1535 = vadd.f32 %v1346, %v1534
      %1536 = vmatmul.bf16.gmra.mxu0 %v1001
      %v1537 = vpop.f32.mrf.mxu0
      %v1538 = vadd.f32 %v1349, %v1537
      %v1539 = vpop.f32.mrf.mxu0
      %v1540 = vadd.f32 %v1351, %v1539
      %1541 = vmatmul.bf16.gmra.mxu0 %v1003
      %v1542 = vpop.f32.mrf.mxu0
      %v1543 = vadd.f32 %v1354, %v1542
      %v1544 = vpop.f32.mrf.mxu0
      %v1545 = vadd.f32 %v1356, %v1544
      %1546 = vmatmul.bf16.gmra.mxu0 %v1005
      %v1547 = vpop.f32.mrf.mxu0
      %v1548 = vadd.f32 %v1359, %v1547
      %v1549 = vpop.f32.mrf.mxu0
      %v1550 = vadd.f32 %v1361, %v1549
      %1551 = vdwg.mxu0
      %v1552 = vpack.c.bf16 %v1373, %v1373
      %v1553 = vpack.c.bf16 %v1375, %v1375
      %v1554 = vpack.c.bf16 %v1378, %v1378
      %v1555 = vpack.c.bf16 %v1380, %v1380
      %v1556 = vpack.c.bf16 %v1383, %v1383
      %v1557 = vpack.c.bf16 %v1385, %v1385
      %v1558 = vpack.c.bf16 %v1388, %v1388
      %v1559 = vpack.c.bf16 %v1390, %v1390
      %v1560 = vpack.c.bf16 %v1393, %v1393
      %v1561 = vpack.c.bf16 %v1395, %v1395
      %v1562 = vpack.c.bf16 %v1398, %v1398
      %v1563 = vpack.c.bf16 %v1400, %v1400
      %v1564 = vpack.c.bf16 %v1403, %v1403
      %v1565 = vpack.c.bf16 %v1405, %v1405
      %v1566 = vpack.c.bf16 %v1408, %v1408
      %v1567 = vpack.c.bf16 %v1410, %v1410
      %v1568 = vpack.c.bf16 %v1413, %v1413
      %v1569 = vpack.c.bf16 %v1415, %v1415
      %v1570 = vpack.c.bf16 %v1418, %v1418
      %v1571 = vpack.c.bf16 %v1420, %v1420
      %v1572 = vpack.c.bf16 %v1423, %v1423
      %v1573 = vpack.c.bf16 %v1425, %v1425
      %v1574 = vpack.c.bf16 %v1428, %v1428
      %v1575 = vpack.c.bf16 %v1430, %v1430
      %v1576 = vpack.c.bf16 %v1433, %v1433
      %v1577 = vpack.c.bf16 %v1435, %v1435
      %v1578 = vpack.c.bf16 %v1438, %v1438
      %v1579 = vpack.c.bf16 %v1440, %v1440
      %v1580 = vpack.c.bf16 %v1443, %v1443
      %v1581 = vpack.c.bf16 %v1445, %v1445
      %v1582 = vpack.c.bf16 %v1448, %v1448
      %v1583 = vpack.c.bf16 %v1450, %v1450
      %v1584 = vpack.c.bf16 %v1453, %v1453
      %v1585 = vpack.c.bf16 %v1455, %v1455
      %v1586 = vpack.c.bf16 %v1458, %v1458
      %v1587 = vpack.c.bf16 %v1460, %v1460
      %v1588 = vpack.c.bf16 %v1463, %v1463
      %v1589 = vpack.c.bf16 %v1465, %v1465
      %v1590 = vpack.c.bf16 %v1468, %v1468
      %v1591 = vpack.c.bf16 %v1470, %v1470
      %v1592 = vpack.c.bf16 %v1473, %v1473
      %v1593 = vpack.c.bf16 %v1475, %v1475
      %v1594 = vpack.c.bf16 %v1478, %v1478
      %v1595 = vpack.c.bf16 %v1480, %v1480
      %v1596 = vpack.c.bf16 %v1483, %v1483
      %v1597 = vpack.c.bf16 %v1485, %v1485
      %v1598 = vpack.c.bf16 %v1488, %v1488
      %v1599 = vpack.c.bf16 %v1490, %v1490
      %v1600 = vpack.c.bf16 %v1493, %v1493
      %v1601 = vpack.c.bf16 %v1495, %v1495
      %v1602 = vpack.c.bf16 %v1498, %v1498
      %v1603 = vpack.c.bf16 %v1500, %v1500
      %v1604 = vpack.c.bf16 %v1503, %v1503
      %v1605 = vpack.c.bf16 %v1505, %v1505
      %v1606 = vpack.c.bf16 %v1508, %v1508
      %v1607 = vpack.c.bf16 %v1510, %v1510
      %v1608 = vpack.c.bf16 %v1513, %v1513
      %v1609 = vpack.c.bf16 %v1515, %v1515
      %v1610 = vpack.c.bf16 %v1518, %v1518
      %v1611 = vpack.c.bf16 %v1520, %v1520
      %v1612 = vpack.c.bf16 %v1523, %v1523
      %v1613 = vpack.c.bf16 %v1525, %v1525
      %v1614 = vpack.c.bf16 %v1528, %v1528
      %v1615 = vpack.c.bf16 %v1530, %v1530
      %v1616 = vpack.c.bf16 %v1533, %v1533
      %v1617 = vpack.c.bf16 %v1535, %v1535
      %v1618 = vpack.c.bf16 %v1538, %v1538
      %v1619 = vpack.c.bf16 %v1540, %v1540
      %v1620 = vpack.c.bf16 %v1543, %v1543
      %v1621 = vpack.c.bf16 %v1545, %v1545
      %v1622 = vpack.c.bf16 %v1548, %v1548
      %v1623 = vpack.c.bf16 %v1550, %v1550
      %v1624 = vld [vmem:[%s2] sm:$0x3]
      %s1625 = scalar_lea.vmem %s2, 2
      %v1626 = vld [vmem:[%s1625] sm:$0x3]
      %v1635 = vunpack.c.l.b16 %v1560
      %v1636 = vunpack.c.l.b16 %v1561
      %v1637 = vunpack.c.l.b16 %v1562
      %v1638 = vunpack.c.l.b16 %v1563
      %v1639 = vunpack.c.l.b16 %v1564
      %v1640 = vunpack.c.l.b16 %v1565
      %v1641 = vunpack.c.l.b16 %v1566
      %v1642 = vunpack.c.l.b16 %v1567
      %v1643 = vpack.c.b16 %v1636, %v1635
      %v1644 = vpack.c.b16 %v1638, %v1637
      %v1645 = vpack.c.b16 %v1640, %v1639
      %v1646 = vpack.c.b16 %v1642, %v1641
      %vm1647 = vcmask 31744
      %v1649 = vsel %vm1647, %v1643, 0
      %v1652 = vsel %vm1647, %v1644, 0
      %v1655 = vsel %vm1647, %v1645, 0
      %v1658 = vsel %vm1647, %v1646, 0
      %vm1660 = vcmask 1041408
      %v1662 = vsel %vm1660, %v1626, 0
      %1664 = vmatpush.bf16.msra.mxu0 0
      %1665 = vmatpush.bf16.msra.mxu0 0
      %1666 = vmatpush.bf16.msra.mxu0 0
      %1667 = vmatpush.bf16.msra.mxu0 0
      %1668 = vmatpush.bf16.msra.mxu0 0
      %1669 = vmatpush.bf16.msra.mxu0 0
      %1670 = vmatpush.bf16.msra.mxu0 0
      %1671 = vmatpush.bf16.msra.mxu0 %v1662
      %1672 = vmatmul.bf16.gmra.mxu0 %v1649
      %v1673 = vpop.f32.mrf.mxu0
      %v1674 = vadd.f32 0.0, %v1673
      %v1675 = vpop.f32.mrf.mxu0
      %v1676 = vadd.f32 0.0, %v1675
      %1677 = vmatmul.bf16.gmra.mxu0 %v1652
      %v1678 = vpop.f32.mrf.mxu0
      %v1679 = vadd.f32 0.0, %v1678
      %v1680 = vpop.f32.mrf.mxu0
      %v1681 = vadd.f32 0.0, %v1680
      %1682 = vmatmul.bf16.gmra.mxu0 %v1655
      %v1683 = vpop.f32.mrf.mxu0
      %v1684 = vadd.f32 0.0, %v1683
      %v1685 = vpop.f32.mrf.mxu0
      %v1686 = vadd.f32 0.0, %v1685
      %1687 = vmatmul.bf16.gmra.mxu0 %v1658
      %v1688 = vpop.f32.mrf.mxu0
      %v1689 = vadd.f32 0.0, %v1688
      %v1690 = vpop.f32.mrf.mxu0
      %v1691 = vadd.f32 0.0, %v1690
      %1692 = vdwg.mxu0
      %v1701 = vunpack.c.l.b16 %v1552
      %v1702 = vunpack.c.l.b16 %v1553
      %v1703 = vunpack.c.l.b16 %v1554
      %v1704 = vunpack.c.l.b16 %v1555
      %v1705 = vunpack.c.l.b16 %v1556
      %v1706 = vunpack.c.l.b16 %v1557
      %v1707 = vunpack.c.l.b16 %v1558
      %v1708 = vunpack.c.l.b16 %v1559
      %v1709 = vpack.c.b16 %v1702, %v1701
      %v1710 = vpack.c.b16 %v1704, %v1703
      %v1711 = vpack.c.b16 %v1706, %v1705
      %v1712 = vpack.c.b16 %v1708, %v1707
      %v1714 = vsel %vm1647, %v1709, 0
      %v1717 = vsel %vm1647, %v1710, 0
      %v1720 = vsel %vm1647, %v1711, 0
      %v1723 = vsel %vm1647, %v1712, 0
      %v1726 = vsel %vm1660, %v1624, 0
      %1728 = vmatpush.bf16.msra.mxu0 0
      %1729 = vmatpush.bf16.msra.mxu0 0
      %1730 = vmatpush.bf16.msra.mxu0 0
      %1731 = vmatpush.bf16.msra.mxu0 0
      %1732 = vmatpush.bf16.msra.mxu0 0
      %1733 = vmatpush.bf16.msra.mxu0 0
      %1734 = vmatpush.bf16.msra.mxu0 0
      %1735 = vmatpush.bf16.msra.mxu0 %v1726
      %1736 = vmatmul.bf16.gmra.mxu0 %v1714
      %v1737 = vpop.f32.mrf.mxu0
      %v1738 = vadd.f32 %v1674, %v1737
      %v1739 = vpop.f32.mrf.mxu0
      %v1740 = vadd.f32 %v1676, %v1739
      %1741 = vmatmul.bf16.gmra.mxu0 %v1717
      %v1742 = vpop.f32.mrf.mxu0
      %v1743 = vadd.f32 %v1679, %v1742
      %v1744 = vpop.f32.mrf.mxu0
      %v1745 = vadd.f32 %v1681, %v1744
      %1746 = vmatmul.bf16.gmra.mxu0 %v1720
      %v1747 = vpop.f32.mrf.mxu0
      %v1748 = vadd.f32 %v1684, %v1747
      %v1749 = vpop.f32.mrf.mxu0
      %v1750 = vadd.f32 %v1686, %v1749
      %1751 = vmatmul.bf16.gmra.mxu0 %v1723
      %v1752 = vpop.f32.mrf.mxu0
      %v1753 = vadd.f32 %v1689, %v1752
      %v1754 = vpop.f32.mrf.mxu0
      %v1755 = vadd.f32 %v1691, %v1754
      %1756 = vdwg.mxu0
      %s1757 = scalar_lea.vmem %s2, 4
      %v1758 = vld [vmem:[%s1757] sm:$0x3]
      %v1767 = vunpack.c.l.b16 %v1568
      %v1768 = vunpack.c.l.b16 %v1569
      %v1769 = vunpack.c.l.b16 %v1570
      %v1770 = vunpack.c.l.b16 %v1571
      %v1771 = vunpack.c.l.b16 %v1572
      %v1772 = vunpack.c.l.b16 %v1573
      %v1773 = vunpack.c.l.b16 %v1574
      %v1774 = vunpack.c.l.b16 %v1575
      %v1775 = vpack.c.b16 %v1768, %v1767
      %v1776 = vpack.c.b16 %v1770, %v1769
      %v1777 = vpack.c.b16 %v1772, %v1771
      %v1778 = vpack.c.b16 %v1774, %v1773
      %v1780 = vsel %vm1647, %v1775, 0
      %v1783 = vsel %vm1647, %v1776, 0
      %v1786 = vsel %vm1647, %v1777, 0
      %v1789 = vsel %vm1647, %v1778, 0
      %v1792 = vsel %vm1660, %v1758, 0
      %1794 = vmatpush.bf16.msra.mxu0 0
      %1795 = vmatpush.bf16.msra.mxu0 0
      %1796 = vmatpush.bf16.msra.mxu0 0
      %1797 = vmatpush.bf16.msra.mxu0 0
      %1798 = vmatpush.bf16.msra.mxu0 0
      %1799 = vmatpush.bf16.msra.mxu0 0
      %1800 = vmatpush.bf16.msra.mxu0 0
      %1801 = vmatpush.bf16.msra.mxu0 %v1792
      %1802 = vmatmul.bf16.gmra.mxu0 %v1780
      %v1803 = vpop.f32.mrf.mxu0
      %v1804 = vadd.f32 0.0, %v1803
      %v1805 = vpop.f32.mrf.mxu0
      %v1806 = vadd.f32 0.0, %v1805
      %1807 = vmatmul.bf16.gmra.mxu0 %v1783
      %v1808 = vpop.f32.mrf.mxu0
      %v1809 = vadd.f32 0.0, %v1808
      %v1810 = vpop.f32.mrf.mxu0
      %v1811 = vadd.f32 0.0, %v1810
      %1812 = vmatmul.bf16.gmra.mxu0 %v1786
      %v1813 = vpop.f32.mrf.mxu0
      %v1814 = vadd.f32 0.0, %v1813
      %v1815 = vpop.f32.mrf.mxu0
      %v1816 = vadd.f32 0.0, %v1815
      %1817 = vmatmul.bf16.gmra.mxu0 %v1789
      %v1818 = vpop.f32.mrf.mxu0
      %v1819 = vadd.f32 0.0, %v1818
      %v1820 = vpop.f32.mrf.mxu0
      %v1821 = vadd.f32 0.0, %v1820
      %1822 = vdwg.mxu0
      %v1823 = vadd.f32 %v1738, %v1804
      %v1824 = vadd.f32 %v1740, %v1806
      %v1825 = vadd.f32 %v1743, %v1809
      %v1826 = vadd.f32 %v1745, %v1811
      %v1827 = vadd.f32 %v1748, %v1814
      %v1828 = vadd.f32 %v1750, %v1816
      %v1829 = vadd.f32 %v1753, %v1819
      %v1830 = vadd.f32 %v1755, %v1821
      %s1831 = scalar_lea.vmem %s2, 6
      %v1832 = vld [vmem:[%s1831] sm:$0x3]
      %v1841 = vunpack.c.l.b16 %v1576
      %v1842 = vunpack.c.l.b16 %v1577
      %v1843 = vunpack.c.l.b16 %v1578
      %v1844 = vunpack.c.l.b16 %v1579
      %v1845 = vunpack.c.l.b16 %v1580
      %v1846 = vunpack.c.l.b16 %v1581
      %v1847 = vunpack.c.l.b16 %v1582
      %v1848 = vunpack.c.l.b16 %v1583
      %v1849 = vpack.c.b16 %v1842, %v1841
      %v1850 = vpack.c.b16 %v1844, %v1843
      %v1851 = vpack.c.b16 %v1846, %v1845
      %v1852 = vpack.c.b16 %v1848, %v1847
      %v1854 = vsel %vm1647, %v1849, 0
      %v1857 = vsel %vm1647, %v1850, 0
      %v1860 = vsel %vm1647, %v1851, 0
      %v1863 = vsel %vm1647, %v1852, 0
      %v1866 = vsel %vm1660, %v1832, 0
      %1868 = vmatpush.bf16.msra.mxu0 0
      %1869 = vmatpush.bf16.msra.mxu0 0
      %1870 = vmatpush.bf16.msra.mxu0 0
      %1871 = vmatpush.bf16.msra.mxu0 0
      %1872 = vmatpush.bf16.msra.mxu0 0
      %1873 = vmatpush.bf16.msra.mxu0 0
      %1874 = vmatpush.bf16.msra.mxu0 0
      %1875 = vmatpush.bf16.msra.mxu0 %v1866
      %1876 = vmatmul.bf16.gmra.mxu0 %v1854
      %v1877 = vpop.f32.mrf.mxu0
      %v1878 = vadd.f32 0.0, %v1877
      %v1879 = vpop.f32.mrf.mxu0
      %v1880 = vadd.f32 0.0, %v1879
      %1881 = vmatmul.bf16.gmra.mxu0 %v1857
      %v1882 = vpop.f32.mrf.mxu0
      %v1883 = vadd.f32 0.0, %v1882
      %v1884 = vpop.f32.mrf.mxu0
      %v1885 = vadd.f32 0.0, %v1884
      %1886 = vmatmul.bf16.gmra.mxu0 %v1860
      %v1887 = vpop.f32.mrf.mxu0
      %v1888 = vadd.f32 0.0, %v1887
      %v1889 = vpop.f32.mrf.mxu0
      %v1890 = vadd.f32 0.0, %v1889
      %1891 = vmatmul.bf16.gmra.mxu0 %v1863
      %v1892 = vpop.f32.mrf.mxu0
      %v1893 = vadd.f32 0.0, %v1892
      %v1894 = vpop.f32.mrf.mxu0
      %v1895 = vadd.f32 0.0, %v1894
      %1896 = vdwg.mxu0
      %v1897 = vadd.f32 %v1823, %v1878
      %v1898 = vadd.f32 %v1824, %v1880
      %v1899 = vadd.f32 %v1825, %v1883
      %v1900 = vadd.f32 %v1826, %v1885
      %v1901 = vadd.f32 %v1827, %v1888
      %v1902 = vadd.f32 %v1828, %v1890
      %v1903 = vadd.f32 %v1829, %v1893
      %v1904 = vadd.f32 %v1830, %v1895
      %s1905 = scalar_lea.vmem %s2, 8
      %v1906 = vld [vmem:[%s1905] sm:$0x3]
      %v1915 = vunpack.c.l.b16 %v1584
      %v1916 = vunpack.c.l.b16 %v1585
      %v1917 = vunpack.c.l.b16 %v1586
      %v1918 = vunpack.c.l.b16 %v1587
      %v1919 = vunpack.c.l.b16 %v1588
      %v1920 = vunpack.c.l.b16 %v1589
      %v1921 = vunpack.c.l.b16 %v1590
      %v1922 = vunpack.c.l.b16 %v1591
      %v1923 = vpack.c.b16 %v1916, %v1915
      %v1924 = vpack.c.b16 %v1918, %v1917
      %v1925 = vpack.c.b16 %v1920, %v1919
      %v1926 = vpack.c.b16 %v1922, %v1921
      %v1928 = vsel %vm1647, %v1923, 0
      %v1931 = vsel %vm1647, %v1924, 0
      %v1934 = vsel %vm1647, %v1925, 0
      %v1937 = vsel %vm1647, %v1926, 0
      %v1940 = vsel %vm1660, %v1906, 0
      %1942 = vmatpush.bf16.msra.mxu0 0
      %1943 = vmatpush.bf16.msra.mxu0 0
      %1944 = vmatpush.bf16.msra.mxu0 0
      %1945 = vmatpush.bf16.msra.mxu0 0
      %1946 = vmatpush.bf16.msra.mxu0 0
      %1947 = vmatpush.bf16.msra.mxu0 0
      %1948 = vmatpush.bf16.msra.mxu0 0
      %1949 = vmatpush.bf16.msra.mxu0 %v1940
      %1950 = vmatmul.bf16.gmra.mxu0 %v1928
      %v1951 = vpop.f32.mrf.mxu0
      %v1952 = vadd.f32 0.0, %v1951
      %v1953 = vpop.f32.mrf.mxu0
      %v1954 = vadd.f32 0.0, %v1953
      %1955 = vmatmul.bf16.gmra.mxu0 %v1931
      %v1956 = vpop.f32.mrf.mxu0
      %v1957 = vadd.f32 0.0, %v1956
      %v1958 = vpop.f32.mrf.mxu0
      %v1959 = vadd.f32 0.0, %v1958
      %1960 = vmatmul.bf16.gmra.mxu0 %v1934
      %v1961 = vpop.f32.mrf.mxu0
      %v1962 = vadd.f32 0.0, %v1961
      %v1963 = vpop.f32.mrf.mxu0
      %v1964 = vadd.f32 0.0, %v1963
      %1965 = vmatmul.bf16.gmra.mxu0 %v1937
      %v1966 = vpop.f32.mrf.mxu0
      %v1967 = vadd.f32 0.0, %v1966
      %v1968 = vpop.f32.mrf.mxu0
      %v1969 = vadd.f32 0.0, %v1968
      %1970 = vdwg.mxu0
      %v1971 = vadd.f32 %v1897, %v1952
      %v1972 = vadd.f32 %v1898, %v1954
      %v1973 = vadd.f32 %v1899, %v1957
      %v1974 = vadd.f32 %v1900, %v1959
      %v1975 = vadd.f32 %v1901, %v1962
      %v1976 = vadd.f32 %v1902, %v1964
      %v1977 = vadd.f32 %v1903, %v1967
      %v1978 = vadd.f32 %v1904, %v1969
      %s1979 = scalar_lea.vmem %s2, 10
      %v1980 = vld [vmem:[%s1979] sm:$0x3]
      %v1989 = vunpack.c.l.b16 %v1592
      %v1990 = vunpack.c.l.b16 %v1593
      %v1991 = vunpack.c.l.b16 %v1594
      %v1992 = vunpack.c.l.b16 %v1595
      %v1993 = vunpack.c.l.b16 %v1596
      %v1994 = vunpack.c.l.b16 %v1597
      %v1995 = vunpack.c.l.b16 %v1598
      %v1996 = vunpack.c.l.b16 %v1599
      %v1997 = vpack.c.b16 %v1990, %v1989
      %v1998 = vpack.c.b16 %v1992, %v1991
      %v1999 = vpack.c.b16 %v1994, %v1993
      %v2000 = vpack.c.b16 %v1996, %v1995
      %v2002 = vsel %vm1647, %v1997, 0
      %v2005 = vsel %vm1647, %v1998, 0
      %v2008 = vsel %vm1647, %v1999, 0
      %v2011 = vsel %vm1647, %v2000, 0
      %v2014 = vsel %vm1660, %v1980, 0
      %2016 = vmatpush.bf16.msra.mxu0 0
      %2017 = vmatpush.bf16.msra.mxu0 0
      %2018 = vmatpush.bf16.msra.mxu0 0
      %2019 = vmatpush.bf16.msra.mxu0 0
      %2020 = vmatpush.bf16.msra.mxu0 0
      %2021 = vmatpush.bf16.msra.mxu0 0
      %2022 = vmatpush.bf16.msra.mxu0 0
      %2023 = vmatpush.bf16.msra.mxu0 %v2014
      %2024 = vmatmul.bf16.gmra.mxu0 %v2002
      %v2025 = vpop.f32.mrf.mxu0
      %v2026 = vadd.f32 0.0, %v2025
      %v2027 = vpop.f32.mrf.mxu0
      %v2028 = vadd.f32 0.0, %v2027
      %2029 = vmatmul.bf16.gmra.mxu0 %v2005
      %v2030 = vpop.f32.mrf.mxu0
      %v2031 = vadd.f32 0.0, %v2030
      %v2032 = vpop.f32.mrf.mxu0
      %v2033 = vadd.f32 0.0, %v2032
      %2034 = vmatmul.bf16.gmra.mxu0 %v2008
      %v2035 = vpop.f32.mrf.mxu0
      %v2036 = vadd.f32 0.0, %v2035
      %v2037 = vpop.f32.mrf.mxu0
      %v2038 = vadd.f32 0.0, %v2037
      %2039 = vmatmul.bf16.gmra.mxu0 %v2011
      %v2040 = vpop.f32.mrf.mxu0
      %v2041 = vadd.f32 0.0, %v2040
      %v2042 = vpop.f32.mrf.mxu0
      %v2043 = vadd.f32 0.0, %v2042
      %2044 = vdwg.mxu0
      %v2045 = vadd.f32 %v1971, %v2026
      %v2046 = vadd.f32 %v1972, %v2028
      %v2047 = vadd.f32 %v1973, %v2031
      %v2048 = vadd.f32 %v1974, %v2033
      %v2049 = vadd.f32 %v1975, %v2036
      %v2050 = vadd.f32 %v1976, %v2038
      %v2051 = vadd.f32 %v1977, %v2041
      %v2052 = vadd.f32 %v1978, %v2043
      %s2053 = scalar_lea.vmem %s2, 12
      %v2054 = vld [vmem:[%s2053] sm:$0x3]
      %v2063 = vunpack.c.l.b16 %v1600
      %v2064 = vunpack.c.l.b16 %v1601
      %v2065 = vunpack.c.l.b16 %v1602
      %v2066 = vunpack.c.l.b16 %v1603
      %v2067 = vunpack.c.l.b16 %v1604
      %v2068 = vunpack.c.l.b16 %v1605
      %v2069 = vunpack.c.l.b16 %v1606
      %v2070 = vunpack.c.l.b16 %v1607
      %v2071 = vpack.c.b16 %v2064, %v2063
      %v2072 = vpack.c.b16 %v2066, %v2065
      %v2073 = vpack.c.b16 %v2068, %v2067
      %v2074 = vpack.c.b16 %v2070, %v2069
      %v2076 = vsel %vm1647, %v2071, 0
      %v2079 = vsel %vm1647, %v2072, 0
      %v2082 = vsel %vm1647, %v2073, 0
      %v2085 = vsel %vm1647, %v2074, 0
      %v2088 = vsel %vm1660, %v2054, 0
      %2090 = vmatpush.bf16.msra.mxu0 0
      %2091 = vmatpush.bf16.msra.mxu0 0
      %2092 = vmatpush.bf16.msra.mxu0 0
      %2093 = vmatpush.bf16.msra.mxu0 0
      %2094 = vmatpush.bf16.msra.mxu0 0
      %2095 = vmatpush.bf16.msra.mxu0 0
      %2096 = vmatpush.bf16.msra.mxu0 0
      %2097 = vmatpush.bf16.msra.mxu0 %v2088
      %2098 = vmatmul.bf16.gmra.mxu0 %v2076
      %v2099 = vpop.f32.mrf.mxu0
      %v2100 = vadd.f32 0.0, %v2099
      %v2101 = vpop.f32.mrf.mxu0
      %v2102 = vadd.f32 0.0, %v2101
      %2103 = vmatmul.bf16.gmra.mxu0 %v2079
      %v2104 = vpop.f32.mrf.mxu0
      %v2105 = vadd.f32 0.0, %v2104
      %v2106 = vpop.f32.mrf.mxu0
      %v2107 = vadd.f32 0.0, %v2106
      %2108 = vmatmul.bf16.gmra.mxu0 %v2082
      %v2109 = vpop.f32.mrf.mxu0
      %v2110 = vadd.f32 0.0, %v2109
      %v2111 = vpop.f32.mrf.mxu0
      %v2112 = vadd.f32 0.0, %v2111
      %2113 = vmatmul.bf16.gmra.mxu0 %v2085
      %v2114 = vpop.f32.mrf.mxu0
      %v2115 = vadd.f32 0.0, %v2114
      %v2116 = vpop.f32.mrf.mxu0
      %v2117 = vadd.f32 0.0, %v2116
      %2118 = vdwg.mxu0
      %v2119 = vadd.f32 %v2045, %v2100
      %v2120 = vadd.f32 %v2046, %v2102
      %v2121 = vadd.f32 %v2047, %v2105
      %v2122 = vadd.f32 %v2048, %v2107
      %v2123 = vadd.f32 %v2049, %v2110
      %v2124 = vadd.f32 %v2050, %v2112
      %v2125 = vadd.f32 %v2051, %v2115
      %v2126 = vadd.f32 %v2052, %v2117
      %s2127 = scalar_lea.vmem %s2, 14
      %v2128 = vld [vmem:[%s2127] sm:$0x3]
      %v2137 = vunpack.c.l.b16 %v1608
      %v2138 = vunpack.c.l.b16 %v1609
      %v2139 = vunpack.c.l.b16 %v1610
      %v2140 = vunpack.c.l.b16 %v1611
      %v2141 = vunpack.c.l.b16 %v1612
      %v2142 = vunpack.c.l.b16 %v1613
      %v2143 = vunpack.c.l.b16 %v1614
      %v2144 = vunpack.c.l.b16 %v1615
      %v2145 = vpack.c.b16 %v2138, %v2137
      %v2146 = vpack.c.b16 %v2140, %v2139
      %v2147 = vpack.c.b16 %v2142, %v2141
      %v2148 = vpack.c.b16 %v2144, %v2143
      %v2150 = vsel %vm1647, %v2145, 0
      %v2153 = vsel %vm1647, %v2146, 0
      %v2156 = vsel %vm1647, %v2147, 0
      %v2159 = vsel %vm1647, %v2148, 0
      %v2162 = vsel %vm1660, %v2128, 0
      %2164 = vmatpush.bf16.msra.mxu0 0
      %2165 = vmatpush.bf16.msra.mxu0 0
      %2166 = vmatpush.bf16.msra.mxu0 0
      %2167 = vmatpush.bf16.msra.mxu0 0
      %2168 = vmatpush.bf16.msra.mxu0 0
      %2169 = vmatpush.bf16.msra.mxu0 0
      %2170 = vmatpush.bf16.msra.mxu0 0
      %2171 = vmatpush.bf16.msra.mxu0 %v2162
      %2172 = vmatmul.bf16.gmra.mxu0 %v2150
      %v2173 = vpop.f32.mrf.mxu0
      %v2174 = vadd.f32 0.0, %v2173
      %v2175 = vpop.f32.mrf.mxu0
      %v2176 = vadd.f32 0.0, %v2175
      %2177 = vmatmul.bf16.gmra.mxu0 %v2153
      %v2178 = vpop.f32.mrf.mxu0
      %v2179 = vadd.f32 0.0, %v2178
      %v2180 = vpop.f32.mrf.mxu0
      %v2181 = vadd.f32 0.0, %v2180
      %2182 = vmatmul.bf16.gmra.mxu0 %v2156
      %v2183 = vpop.f32.mrf.mxu0
      %v2184 = vadd.f32 0.0, %v2183
      %v2185 = vpop.f32.mrf.mxu0
      %v2186 = vadd.f32 0.0, %v2185
      %2187 = vmatmul.bf16.gmra.mxu0 %v2159
      %v2188 = vpop.f32.mrf.mxu0
      %v2189 = vadd.f32 0.0, %v2188
      %v2190 = vpop.f32.mrf.mxu0
      %v2191 = vadd.f32 0.0, %v2190
      %2192 = vdwg.mxu0
      %v2193 = vadd.f32 %v2119, %v2174
      %v2194 = vadd.f32 %v2120, %v2176
      %v2195 = vadd.f32 %v2121, %v2179
      %v2196 = vadd.f32 %v2122, %v2181
      %v2197 = vadd.f32 %v2123, %v2184
      %v2198 = vadd.f32 %v2124, %v2186
      %v2199 = vadd.f32 %v2125, %v2189
      %v2200 = vadd.f32 %v2126, %v2191
      %s2201 = scalar_lea.vmem %s2, 16
      %v2202 = vld [vmem:[%s2201] sm:$0x3]
      %v2211 = vunpack.c.l.b16 %v1616
      %v2212 = vunpack.c.l.b16 %v1617
      %v2213 = vunpack.c.l.b16 %v1618
      %v2214 = vunpack.c.l.b16 %v1619
      %v2215 = vunpack.c.l.b16 %v1620
      %v2216 = vunpack.c.l.b16 %v1621
      %v2217 = vunpack.c.l.b16 %v1622
      %v2218 = vunpack.c.l.b16 %v1623
      %v2219 = vpack.c.b16 %v2212, %v2211
      %v2220 = vpack.c.b16 %v2214, %v2213
      %v2221 = vpack.c.b16 %v2216, %v2215
      %v2222 = vpack.c.b16 %v2218, %v2217
      %v2224 = vsel %vm1647, %v2219, 0
      %v2227 = vsel %vm1647, %v2220, 0
      %v2230 = vsel %vm1647, %v2221, 0
      %v2233 = vsel %vm1647, %v2222, 0
      %v2236 = vsel %vm1660, %v2202, 0
      %2238 = vmatpush.bf16.msra.mxu0 0
      %2239 = vmatpush.bf16.msra.mxu0 0
      %2240 = vmatpush.bf16.msra.mxu0 0
      %2241 = vmatpush.bf16.msra.mxu0 0
      %2242 = vmatpush.bf16.msra.mxu0 0
      %2243 = vmatpush.bf16.msra.mxu0 0
      %2244 = vmatpush.bf16.msra.mxu0 0
      %2245 = vmatpush.bf16.msra.mxu0 %v2236
      %2246 = vmatmul.bf16.gmra.mxu0 %v2224
      %v2247 = vpop.f32.mrf.mxu0
      %v2248 = vadd.f32 0.0, %v2247
      %v2249 = vpop.f32.mrf.mxu0
      %v2250 = vadd.f32 0.0, %v2249
      %2251 = vmatmul.bf16.gmra.mxu0 %v2227
      %v2252 = vpop.f32.mrf.mxu0
      %v2253 = vadd.f32 0.0, %v2252
      %v2254 = vpop.f32.mrf.mxu0
      %v2255 = vadd.f32 0.0, %v2254
      %2256 = vmatmul.bf16.gmra.mxu0 %v2230
      %v2257 = vpop.f32.mrf.mxu0
      %v2258 = vadd.f32 0.0, %v2257
      %v2259 = vpop.f32.mrf.mxu0
      %v2260 = vadd.f32 0.0, %v2259
      %2261 = vmatmul.bf16.gmra.mxu0 %v2233
      %v2262 = vpop.f32.mrf.mxu0
      %v2263 = vadd.f32 0.0, %v2262
      %v2264 = vpop.f32.mrf.mxu0
      %v2265 = vadd.f32 0.0, %v2264
      %2266 = vdwg.mxu0
      %v2267 = vadd.f32 %v2193, %v2248
      %v2268 = vadd.f32 %v2194, %v2250
      %v2269 = vadd.f32 %v2195, %v2253
      %v2270 = vadd.f32 %v2196, %v2255
      %v2271 = vadd.f32 %v2197, %v2258
      %v2272 = vadd.f32 %v2198, %v2260
      %v2273 = vadd.f32 %v2199, %v2263
      %v2274 = vadd.f32 %v2200, %v2265
      %v2276 = vperm.slane %v717, 0
      %v2278 = vadd.f32 %v2267, %v2276
      %v2279 = vadd.f32 %v2268, %v2276
      %v2280 = vadd.f32 %v2269, %v2276
      %v2281 = vadd.f32 %v2270, %v2276
      %v2282 = vadd.f32 %v2271, %v2276
      %v2283 = vadd.f32 %v2272, %v2276
      %v2284 = vadd.f32 %v2273, %v2276
      %v2285 = vadd.f32 %v2274, %v2276
      %vm2286 = vcmp.ge.f32.partialorder %v2278, 0.0
      %vm2287 = vcmp.ge.f32.partialorder %v2279, 0.0
      %vm2288 = vcmp.ge.f32.partialorder %v2280, 0.0
      %vm2289 = vcmp.ge.f32.partialorder %v2281, 0.0
      %vm2290 = vcmp.ge.f32.partialorder %v2282, 0.0
      %vm2291 = vcmp.ge.f32.partialorder %v2283, 0.0
      %vm2292 = vcmp.ge.f32.partialorder %v2284, 0.0
      %vm2293 = vcmp.ge.f32.partialorder %v2285, 0.0
      %v2294 = vmul.f32 %v2278, 0.2
      %v2295 = vmul.f32 %v2279, 0.2
      %v2296 = vmul.f32 %v2280, 0.2
      %v2297 = vmul.f32 %v2281, 0.2
      %v2298 = vmul.f32 %v2282, 0.2
      %v2299 = vmul.f32 %v2283, 0.2
      %v2300 = vmul.f32 %v2284, 0.2
      %v2301 = vmul.f32 %v2285, 0.2
      %v2302 = vsel %vm2286, %v2278, %v2294
      %v2303 = vsel %vm2287, %v2279, %v2295
      %v2304 = vsel %vm2288, %v2280, %v2296
      %v2305 = vsel %vm2289, %v2281, %v2297
      %v2306 = vsel %vm2290, %v2282, %v2298
      %v2307 = vsel %vm2291, %v2283, %v2299
      %v2308 = vsel %vm2292, %v2284, %v2300
      %v2309 = vsel %vm2293, %v2285, %v2301
      %v2310 = vpack.c.bf16 %v2303, %v2302
      %v2311 = vpack.c.bf16 %v2305, %v2304
      %v2312 = vpack.c.bf16 %v2307, %v2306
      %v2313 = vpack.c.bf16 %v2309, %v2308
      %v2346 = vunpack.c.l.b16 %v613
      %v2347 = vunpack.c.l.b16 %v614
      %v2348 = vunpack.c.l.b16 %v615
      %v2349 = vunpack.c.l.b16 %v616
      %v2350 = vunpack.c.l.b16 %v617
      %v2351 = vunpack.c.l.b16 %v618
      %v2352 = vunpack.c.l.b16 %v619
      %v2353 = vunpack.c.l.b16 %v620
      %v2354 = vunpack.c.l.b16 %v621
      %v2355 = vunpack.c.l.b16 %v622
      %v2356 = vunpack.c.l.b16 %v623
      %v2357 = vunpack.c.l.b16 %v624
      %v2358 = vunpack.c.l.b16 %v625
      %v2359 = vunpack.c.l.b16 %v626
      %v2360 = vunpack.c.l.b16 %v627
      %v2361 = vunpack.c.l.b16 %v628
      %v2362 = vunpack.c.l.b16 %v629
      %v2363 = vunpack.c.l.b16 %v630
      %v2364 = vunpack.c.l.b16 %v631
      %v2365 = vunpack.c.l.b16 %v632
      %v2366 = vunpack.c.l.b16 %v633
      %v2367 = vunpack.c.l.b16 %v634
      %v2368 = vunpack.c.l.b16 %v635
      %v2369 = vunpack.c.l.b16 %v636
      %v2370 = vunpack.c.l.b16 %v637
      %v2371 = vunpack.c.l.b16 %v638
      %v2372 = vunpack.c.l.b16 %v639
      %v2373 = vunpack.c.l.b16 %v640
      %v2374 = vunpack.c.l.b16 %v641
      %v2375 = vunpack.c.l.b16 %v642
      %v2376 = vunpack.c.l.b16 %v643
      %v2377 = vunpack.c.l.b16 %v644
      %v2378 = vpack.c.b16 %v2347, %v2346
      %v2379 = vpack.c.b16 %v2349, %v2348
      %v2380 = vpack.c.b16 %v2351, %v2350
      %v2381 = vpack.c.b16 %v2353, %v2352
      %v2382 = vpack.c.b16 %v2355, %v2354
      %v2383 = vpack.c.b16 %v2357, %v2356
      %v2384 = vpack.c.b16 %v2359, %v2358
      %v2385 = vpack.c.b16 %v2361, %v2360
      %v2386 = vpack.c.b16 %v2363, %v2362
      %v2387 = vpack.c.b16 %v2365, %v2364
      %v2388 = vpack.c.b16 %v2367, %v2366
      %v2389 = vpack.c.b16 %v2369, %v2368
      %v2390 = vpack.c.b16 %v2371, %v2370
      %v2391 = vpack.c.b16 %v2373, %v2372
      %v2392 = vpack.c.b16 %v2375, %v2374
      %v2393 = vpack.c.b16 %v2377, %v2376
      %2410 = vmatpush.bf16.msra.mxu0 %v2385
      %2411 = vmatpush.bf16.msra.mxu0 %v2384
      %2412 = vmatpush.bf16.msra.mxu0 %v2383
      %2413 = vmatpush.bf16.msra.mxu0 %v2382
      %2414 = vmatpush.bf16.msra.mxu0 %v2381
      %2415 = vmatpush.bf16.msra.mxu0 %v2380
      %2416 = vmatpush.bf16.msra.mxu0 %v2379
      %2417 = vmatpush.bf16.msra.mxu0 %v2378
      %2418 = vmatmul.bf16.gmra.mxu0 %v934
      %v2419 = vpop.f32.mrf.mxu0
      %v2420 = vadd.f32 0.0, %v2419
      %v2421 = vpop.f32.mrf.mxu0
      %v2422 = vadd.f32 0.0, %v2421
      %2423 = vmatmul.bf16.gmra.mxu0 %v936
      %v2424 = vpop.f32.mrf.mxu0
      %v2425 = vadd.f32 0.0, %v2424
      %v2426 = vpop.f32.mrf.mxu0
      %v2427 = vadd.f32 0.0, %v2426
      %2428 = vmatmul.bf16.gmra.mxu0 %v938
      %v2429 = vpop.f32.mrf.mxu0
      %v2430 = vadd.f32 0.0, %v2429
      %v2431 = vpop.f32.mrf.mxu0
      %v2432 = vadd.f32 0.0, %v2431
      %2433 = vmatmul.bf16.gmra.mxu0 %v940
      %v2434 = vpop.f32.mrf.mxu0
      %v2435 = vadd.f32 0.0, %v2434
      %v2436 = vpop.f32.mrf.mxu0
      %v2437 = vadd.f32 0.0, %v2436
      %2438 = vmatmul.bf16.gmra.mxu0 %v942
      %v2439 = vpop.f32.mrf.mxu0
      %v2440 = vadd.f32 0.0, %v2439
      %v2441 = vpop.f32.mrf.mxu0
      %v2442 = vadd.f32 0.0, %v2441
      %2443 = vmatmul.bf16.gmra.mxu0 %v944
      %v2444 = vpop.f32.mrf.mxu0
      %v2445 = vadd.f32 0.0, %v2444
      %v2446 = vpop.f32.mrf.mxu0
      %v2447 = vadd.f32 0.0, %v2446
      %2448 = vmatmul.bf16.gmra.mxu0 %v946
      %v2449 = vpop.f32.mrf.mxu0
      %v2450 = vadd.f32 0.0, %v2449
      %v2451 = vpop.f32.mrf.mxu0
      %v2452 = vadd.f32 0.0, %v2451
      %2453 = vmatmul.bf16.gmra.mxu0 %v948
      %v2454 = vpop.f32.mrf.mxu0
      %v2455 = vadd.f32 0.0, %v2454
      %v2456 = vpop.f32.mrf.mxu0
      %v2457 = vadd.f32 0.0, %v2456
      %2458 = vmatmul.bf16.gmra.mxu0 %v950
      %v2459 = vpop.f32.mrf.mxu0
      %v2460 = vadd.f32 0.0, %v2459
      %v2461 = vpop.f32.mrf.mxu0
      %v2462 = vadd.f32 0.0, %v2461
      %2463 = vmatmul.bf16.gmra.mxu0 %v952
      %v2464 = vpop.f32.mrf.mxu0
      %v2465 = vadd.f32 0.0, %v2464
      %v2466 = vpop.f32.mrf.mxu0
      %v2467 = vadd.f32 0.0, %v2466
      %2468 = vmatmul.bf16.gmra.mxu0 %v954
      %v2469 = vpop.f32.mrf.mxu0
      %v2470 = vadd.f32 0.0, %v2469
      %v2471 = vpop.f32.mrf.mxu0
      %v2472 = vadd.f32 0.0, %v2471
      %2473 = vmatmul.bf16.gmra.mxu0 %v956
      %v2474 = vpop.f32.mrf.mxu0
      %v2475 = vadd.f32 0.0, %v2474
      %v2476 = vpop.f32.mrf.mxu0
      %v2477 = vadd.f32 0.0, %v2476
      %2478 = vmatmul.bf16.gmra.mxu0 %v958
      %v2479 = vpop.f32.mrf.mxu0
      %v2480 = vadd.f32 0.0, %v2479
      %v2481 = vpop.f32.mrf.mxu0
      %v2482 = vadd.f32 0.0, %v2481
      %2483 = vmatmul.bf16.gmra.mxu0 %v960
      %v2484 = vpop.f32.mrf.mxu0
      %v2485 = vadd.f32 0.0, %v2484
      %v2486 = vpop.f32.mrf.mxu0
      %v2487 = vadd.f32 0.0, %v2486
      %2488 = vmatmul.bf16.gmra.mxu0 %v962
      %v2489 = vpop.f32.mrf.mxu0
      %v2490 = vadd.f32 0.0, %v2489
      %v2491 = vpop.f32.mrf.mxu0
      %v2492 = vadd.f32 0.0, %v2491
      %2493 = vmatmul.bf16.gmra.mxu0 %v964
      %v2494 = vpop.f32.mrf.mxu0
      %v2495 = vadd.f32 0.0, %v2494
      %v2496 = vpop.f32.mrf.mxu0
      %v2497 = vadd.f32 0.0, %v2496
      %2498 = vmatmul.bf16.gmra.mxu0 %v966
      %v2499 = vpop.f32.mrf.mxu0
      %v2500 = vadd.f32 0.0, %v2499
      %v2501 = vpop.f32.mrf.mxu0
      %v2502 = vadd.f32 0.0, %v2501
      %2503 = vmatmul.bf16.gmra.mxu0 %v968
      %v2504 = vpop.f32.mrf.mxu0
      %v2505 = vadd.f32 0.0, %v2504
      %v2506 = vpop.f32.mrf.mxu0
      %v2507 = vadd.f32 0.0, %v2506
      %2508 = vmatmul.bf16.gmra.mxu0 %v970
      %v2509 = vpop.f32.mrf.mxu0
      %v2510 = vadd.f32 0.0, %v2509
      %v2511 = vpop.f32.mrf.mxu0
      %v2512 = vadd.f32 0.0, %v2511
      %2513 = vmatmul.bf16.gmra.mxu0 %v972
      %v2514 = vpop.f32.mrf.mxu0
      %v2515 = vadd.f32 0.0, %v2514
      %v2516 = vpop.f32.mrf.mxu0
      %v2517 = vadd.f32 0.0, %v2516
      %2518 = vmatmul.bf16.gmra.mxu0 %v974
      %v2519 = vpop.f32.mrf.mxu0
      %v2520 = vadd.f32 0.0, %v2519
      %v2521 = vpop.f32.mrf.mxu0
      %v2522 = vadd.f32 0.0, %v2521
      %2523 = vmatmul.bf16.gmra.mxu0 %v976
      %v2524 = vpop.f32.mrf.mxu0
      %v2525 = vadd.f32 0.0, %v2524
      %v2526 = vpop.f32.mrf.mxu0
      %v2527 = vadd.f32 0.0, %v2526
      %2528 = vmatmul.bf16.gmra.mxu0 %v978
      %v2529 = vpop.f32.mrf.mxu0
      %v2530 = vadd.f32 0.0, %v2529
      %v2531 = vpop.f32.mrf.mxu0
      %v2532 = vadd.f32 0.0, %v2531
      %2533 = vmatmul.bf16.gmra.mxu0 %v980
      %v2534 = vpop.f32.mrf.mxu0
      %v2535 = vadd.f32 0.0, %v2534
      %v2536 = vpop.f32.mrf.mxu0
      %v2537 = vadd.f32 0.0, %v2536
      %2538 = vmatmul.bf16.gmra.mxu0 %v982
      %v2539 = vpop.f32.mrf.mxu0
      %v2540 = vadd.f32 0.0, %v2539
      %v2541 = vpop.f32.mrf.mxu0
      %v2542 = vadd.f32 0.0, %v2541
      %2543 = vmatmul.bf16.gmra.mxu0 %v984
      %v2544 = vpop.f32.mrf.mxu0
      %v2545 = vadd.f32 0.0, %v2544
      %v2546 = vpop.f32.mrf.mxu0
      %v2547 = vadd.f32 0.0, %v2546
      %2548 = vmatmul.bf16.gmra.mxu0 %v986
      %v2549 = vpop.f32.mrf.mxu0
      %v2550 = vadd.f32 0.0, %v2549
      %v2551 = vpop.f32.mrf.mxu0
      %v2552 = vadd.f32 0.0, %v2551
      %2553 = vmatmul.bf16.gmra.mxu0 %v988
      %v2554 = vpop.f32.mrf.mxu0
      %v2555 = vadd.f32 0.0, %v2554
      %v2556 = vpop.f32.mrf.mxu0
      %v2557 = vadd.f32 0.0, %v2556
      %2558 = vmatmul.bf16.gmra.mxu0 %v990
      %v2559 = vpop.f32.mrf.mxu0
      %v2560 = vadd.f32 0.0, %v2559
      %v2561 = vpop.f32.mrf.mxu0
      %v2562 = vadd.f32 0.0, %v2561
      %2563 = vmatmul.bf16.gmra.mxu0 %v992
      %v2564 = vpop.f32.mrf.mxu0
      %v2565 = vadd.f32 0.0, %v2564
      %v2566 = vpop.f32.mrf.mxu0
      %v2567 = vadd.f32 0.0, %v2566
      %2568 = vmatmul.bf16.gmra.mxu0 %v994
      %v2569 = vpop.f32.mrf.mxu0
      %v2570 = vadd.f32 0.0, %v2569
      %v2571 = vpop.f32.mrf.mxu0
      %v2572 = vadd.f32 0.0, %v2571
      %2573 = vmatmul.bf16.gmra.mxu0 %v996
      %v2574 = vpop.f32.mrf.mxu0
      %v2575 = vadd.f32 0.0, %v2574
      %v2576 = vpop.f32.mrf.mxu0
      %v2577 = vadd.f32 0.0, %v2576
      %2578 = vmatmul.bf16.gmra.mxu0 %v998
      %v2579 = vpop.f32.mrf.mxu0
      %v2580 = vadd.f32 0.0, %v2579
      %v2581 = vpop.f32.mrf.mxu0
      %v2582 = vadd.f32 0.0, %v2581
      %2583 = vmatmul.bf16.gmra.mxu0 %v1000
      %v2584 = vpop.f32.mrf.mxu0
      %v2585 = vadd.f32 0.0, %v2584
      %v2586 = vpop.f32.mrf.mxu0
      %v2587 = vadd.f32 0.0, %v2586
      %2588 = vmatmul.bf16.gmra.mxu0 %v1002
      %v2589 = vpop.f32.mrf.mxu0
      %v2590 = vadd.f32 0.0, %v2589
      %v2591 = vpop.f32.mrf.mxu0
      %v2592 = vadd.f32 0.0, %v2591
      %2593 = vmatmul.bf16.gmra.mxu0 %v1004
      %v2594 = vpop.f32.mrf.mxu0
      %v2595 = vadd.f32 0.0, %v2594
      %v2596 = vpop.f32.mrf.mxu0
      %v2597 = vadd.f32 0.0, %v2596
      %2598 = vdwg.mxu0
      %2599 = vmatpush.bf16.msra.mxu0 %v2393
      %2600 = vmatpush.bf16.msra.mxu0 %v2392
      %2601 = vmatpush.bf16.msra.mxu0 %v2391
      %2602 = vmatpush.bf16.msra.mxu0 %v2390
      %2603 = vmatpush.bf16.msra.mxu0 %v2389
      %2604 = vmatpush.bf16.msra.mxu0 %v2388
      %2605 = vmatpush.bf16.msra.mxu0 %v2387
      %2606 = vmatpush.bf16.msra.mxu0 %v2386
      %2607 = vmatmul.bf16.gmra.mxu0 %v935
      %v2608 = vpop.f32.mrf.mxu0
      %v2609 = vadd.f32 %v2420, %v2608
      %v2610 = vpop.f32.mrf.mxu0
      %v2611 = vadd.f32 %v2422, %v2610
      %2612 = vmatmul.bf16.gmra.mxu0 %v937
      %v2613 = vpop.f32.mrf.mxu0
      %v2614 = vadd.f32 %v2425, %v2613
      %v2615 = vpop.f32.mrf.mxu0
      %v2616 = vadd.f32 %v2427, %v2615
      %2617 = vmatmul.bf16.gmra.mxu0 %v939
      %v2618 = vpop.f32.mrf.mxu0
      %v2619 = vadd.f32 %v2430, %v2618
      %v2620 = vpop.f32.mrf.mxu0
      %v2621 = vadd.f32 %v2432, %v2620
      %2622 = vmatmul.bf16.gmra.mxu0 %v941
      %v2623 = vpop.f32.mrf.mxu0
      %v2624 = vadd.f32 %v2435, %v2623
      %v2625 = vpop.f32.mrf.mxu0
      %v2626 = vadd.f32 %v2437, %v2625
      %2627 = vmatmul.bf16.gmra.mxu0 %v943
      %v2628 = vpop.f32.mrf.mxu0
      %v2629 = vadd.f32 %v2440, %v2628
      %v2630 = vpop.f32.mrf.mxu0
      %v2631 = vadd.f32 %v2442, %v2630
      %2632 = vmatmul.bf16.gmra.mxu0 %v945
      %v2633 = vpop.f32.mrf.mxu0
      %v2634 = vadd.f32 %v2445, %v2633
      %v2635 = vpop.f32.mrf.mxu0
      %v2636 = vadd.f32 %v2447, %v2635
      %2637 = vmatmul.bf16.gmra.mxu0 %v947
      %v2638 = vpop.f32.mrf.mxu0
      %v2639 = vadd.f32 %v2450, %v2638
      %v2640 = vpop.f32.mrf.mxu0
      %v2641 = vadd.f32 %v2452, %v2640
      %2642 = vmatmul.bf16.gmra.mxu0 %v949
      %v2643 = vpop.f32.mrf.mxu0
      %v2644 = vadd.f32 %v2455, %v2643
      %v2645 = vpop.f32.mrf.mxu0
      %v2646 = vadd.f32 %v2457, %v2645
      %2647 = vmatmul.bf16.gmra.mxu0 %v951
      %v2648 = vpop.f32.mrf.mxu0
      %v2649 = vadd.f32 %v2460, %v2648
      %v2650 = vpop.f32.mrf.mxu0
      %v2651 = vadd.f32 %v2462, %v2650
      %2652 = vmatmul.bf16.gmra.mxu0 %v953
      %v2653 = vpop.f32.mrf.mxu0
      %v2654 = vadd.f32 %v2465, %v2653
      %v2655 = vpop.f32.mrf.mxu0
      %v2656 = vadd.f32 %v2467, %v2655
      %2657 = vmatmul.bf16.gmra.mxu0 %v955
      %v2658 = vpop.f32.mrf.mxu0
      %v2659 = vadd.f32 %v2470, %v2658
      %v2660 = vpop.f32.mrf.mxu0
      %v2661 = vadd.f32 %v2472, %v2660
      %2662 = vmatmul.bf16.gmra.mxu0 %v957
      %v2663 = vpop.f32.mrf.mxu0
      %v2664 = vadd.f32 %v2475, %v2663
      %v2665 = vpop.f32.mrf.mxu0
      %v2666 = vadd.f32 %v2477, %v2665
      %2667 = vmatmul.bf16.gmra.mxu0 %v959
      %v2668 = vpop.f32.mrf.mxu0
      %v2669 = vadd.f32 %v2480, %v2668
      %v2670 = vpop.f32.mrf.mxu0
      %v2671 = vadd.f32 %v2482, %v2670
      %2672 = vmatmul.bf16.gmra.mxu0 %v961
      %v2673 = vpop.f32.mrf.mxu0
      %v2674 = vadd.f32 %v2485, %v2673
      %v2675 = vpop.f32.mrf.mxu0
      %v2676 = vadd.f32 %v2487, %v2675
      %2677 = vmatmul.bf16.gmra.mxu0 %v963
      %v2678 = vpop.f32.mrf.mxu0
      %v2679 = vadd.f32 %v2490, %v2678
      %v2680 = vpop.f32.mrf.mxu0
      %v2681 = vadd.f32 %v2492, %v2680
      %2682 = vmatmul.bf16.gmra.mxu0 %v965
      %v2683 = vpop.f32.mrf.mxu0
      %v2684 = vadd.f32 %v2495, %v2683
      %v2685 = vpop.f32.mrf.mxu0
      %v2686 = vadd.f32 %v2497, %v2685
      %2687 = vmatmul.bf16.gmra.mxu0 %v967
      %v2688 = vpop.f32.mrf.mxu0
      %v2689 = vadd.f32 %v2500, %v2688
      %v2690 = vpop.f32.mrf.mxu0
      %v2691 = vadd.f32 %v2502, %v2690
      %2692 = vmatmul.bf16.gmra.mxu0 %v969
      %v2693 = vpop.f32.mrf.mxu0
      %v2694 = vadd.f32 %v2505, %v2693
      %v2695 = vpop.f32.mrf.mxu0
      %v2696 = vadd.f32 %v2507, %v2695
      %2697 = vmatmul.bf16.gmra.mxu0 %v971
      %v2698 = vpop.f32.mrf.mxu0
      %v2699 = vadd.f32 %v2510, %v2698
      %v2700 = vpop.f32.mrf.mxu0
      %v2701 = vadd.f32 %v2512, %v2700
      %2702 = vmatmul.bf16.gmra.mxu0 %v973
      %v2703 = vpop.f32.mrf.mxu0
      %v2704 = vadd.f32 %v2515, %v2703
      %v2705 = vpop.f32.mrf.mxu0
      %v2706 = vadd.f32 %v2517, %v2705
      %2707 = vmatmul.bf16.gmra.mxu0 %v975
      %v2708 = vpop.f32.mrf.mxu0
      %v2709 = vadd.f32 %v2520, %v2708
      %v2710 = vpop.f32.mrf.mxu0
      %v2711 = vadd.f32 %v2522, %v2710
      %2712 = vmatmul.bf16.gmra.mxu0 %v977
      %v2713 = vpop.f32.mrf.mxu0
      %v2714 = vadd.f32 %v2525, %v2713
      %v2715 = vpop.f32.mrf.mxu0
      %v2716 = vadd.f32 %v2527, %v2715
      %2717 = vmatmul.bf16.gmra.mxu0 %v979
      %v2718 = vpop.f32.mrf.mxu0
      %v2719 = vadd.f32 %v2530, %v2718
      %v2720 = vpop.f32.mrf.mxu0
      %v2721 = vadd.f32 %v2532, %v2720
      %2722 = vmatmul.bf16.gmra.mxu0 %v981
      %v2723 = vpop.f32.mrf.mxu0
      %v2724 = vadd.f32 %v2535, %v2723
      %v2725 = vpop.f32.mrf.mxu0
      %v2726 = vadd.f32 %v2537, %v2725
      %2727 = vmatmul.bf16.gmra.mxu0 %v983
      %v2728 = vpop.f32.mrf.mxu0
      %v2729 = vadd.f32 %v2540, %v2728
      %v2730 = vpop.f32.mrf.mxu0
      %v2731 = vadd.f32 %v2542, %v2730
      %2732 = vmatmul.bf16.gmra.mxu0 %v985
      %v2733 = vpop.f32.mrf.mxu0
      %v2734 = vadd.f32 %v2545, %v2733
      %v2735 = vpop.f32.mrf.mxu0
      %v2736 = vadd.f32 %v2547, %v2735
      %2737 = vmatmul.bf16.gmra.mxu0 %v987
      %v2738 = vpop.f32.mrf.mxu0
      %v2739 = vadd.f32 %v2550, %v2738
      %v2740 = vpop.f32.mrf.mxu0
      %v2741 = vadd.f32 %v2552, %v2740
      %2742 = vmatmul.bf16.gmra.mxu0 %v989
      %v2743 = vpop.f32.mrf.mxu0
      %v2744 = vadd.f32 %v2555, %v2743
      %v2745 = vpop.f32.mrf.mxu0
      %v2746 = vadd.f32 %v2557, %v2745
      %2747 = vmatmul.bf16.gmra.mxu0 %v991
      %v2748 = vpop.f32.mrf.mxu0
      %v2749 = vadd.f32 %v2560, %v2748
      %v2750 = vpop.f32.mrf.mxu0
      %v2751 = vadd.f32 %v2562, %v2750
      %2752 = vmatmul.bf16.gmra.mxu0 %v993
      %v2753 = vpop.f32.mrf.mxu0
      %v2754 = vadd.f32 %v2565, %v2753
      %v2755 = vpop.f32.mrf.mxu0
      %v2756 = vadd.f32 %v2567, %v2755
      %2757 = vmatmul.bf16.gmra.mxu0 %v995
      %v2758 = vpop.f32.mrf.mxu0
      %v2759 = vadd.f32 %v2570, %v2758
      %v2760 = vpop.f32.mrf.mxu0
      %v2761 = vadd.f32 %v2572, %v2760
      %2762 = vmatmul.bf16.gmra.mxu0 %v997
      %v2763 = vpop.f32.mrf.mxu0
      %v2764 = vadd.f32 %v2575, %v2763
      %v2765 = vpop.f32.mrf.mxu0
      %v2766 = vadd.f32 %v2577, %v2765
      %2767 = vmatmul.bf16.gmra.mxu0 %v999
      %v2768 = vpop.f32.mrf.mxu0
      %v2769 = vadd.f32 %v2580, %v2768
      %v2770 = vpop.f32.mrf.mxu0
      %v2771 = vadd.f32 %v2582, %v2770
      %2772 = vmatmul.bf16.gmra.mxu0 %v1001
      %v2773 = vpop.f32.mrf.mxu0
      %v2774 = vadd.f32 %v2585, %v2773
      %v2775 = vpop.f32.mrf.mxu0
      %v2776 = vadd.f32 %v2587, %v2775
      %2777 = vmatmul.bf16.gmra.mxu0 %v1003
      %v2778 = vpop.f32.mrf.mxu0
      %v2779 = vadd.f32 %v2590, %v2778
      %v2780 = vpop.f32.mrf.mxu0
      %v2781 = vadd.f32 %v2592, %v2780
      %2782 = vmatmul.bf16.gmra.mxu0 %v1005
      %v2783 = vpop.f32.mrf.mxu0
      %v2784 = vadd.f32 %v2595, %v2783
      %v2785 = vpop.f32.mrf.mxu0
      %v2786 = vadd.f32 %v2597, %v2785
      %2787 = vdwg.mxu0
      %v2788 = vpack.c.bf16 %v2609, %v2609
      %v2789 = vpack.c.bf16 %v2611, %v2611
      %v2790 = vpack.c.bf16 %v2614, %v2614
      %v2791 = vpack.c.bf16 %v2616, %v2616
      %v2792 = vpack.c.bf16 %v2619, %v2619
      %v2793 = vpack.c.bf16 %v2621, %v2621
      %v2794 = vpack.c.bf16 %v2624, %v2624
      %v2795 = vpack.c.bf16 %v2626, %v2626
      %v2796 = vpack.c.bf16 %v2629, %v2629
      %v2797 = vpack.c.bf16 %v2631, %v2631
      %v2798 = vpack.c.bf16 %v2634, %v2634
      %v2799 = vpack.c.bf16 %v2636, %v2636
      %v2800 = vpack.c.bf16 %v2639, %v2639
      %v2801 = vpack.c.bf16 %v2641, %v2641
      %v2802 = vpack.c.bf16 %v2644, %v2644
      %v2803 = vpack.c.bf16 %v2646, %v2646
      %v2804 = vpack.c.bf16 %v2649, %v2649
      %v2805 = vpack.c.bf16 %v2651, %v2651
      %v2806 = vpack.c.bf16 %v2654, %v2654
      %v2807 = vpack.c.bf16 %v2656, %v2656
      %v2808 = vpack.c.bf16 %v2659, %v2659
      %v2809 = vpack.c.bf16 %v2661, %v2661
      %v2810 = vpack.c.bf16 %v2664, %v2664
      %v2811 = vpack.c.bf16 %v2666, %v2666
      %v2812 = vpack.c.bf16 %v2669, %v2669
      %v2813 = vpack.c.bf16 %v2671, %v2671
      %v2814 = vpack.c.bf16 %v2674, %v2674
      %v2815 = vpack.c.bf16 %v2676, %v2676
      %v2816 = vpack.c.bf16 %v2679, %v2679
      %v2817 = vpack.c.bf16 %v2681, %v2681
      %v2818 = vpack.c.bf16 %v2684, %v2684
      %v2819 = vpack.c.bf16 %v2686, %v2686
      %v2820 = vpack.c.bf16 %v2689, %v2689
      %v2821 = vpack.c.bf16 %v2691, %v2691
      %v2822 = vpack.c.bf16 %v2694, %v2694
      %v2823 = vpack.c.bf16 %v2696, %v2696
      %v2824 = vpack.c.bf16 %v2699, %v2699
      %v2825 = vpack.c.bf16 %v2701, %v2701
      %v2826 = vpack.c.bf16 %v2704, %v2704
      %v2827 = vpack.c.bf16 %v2706, %v2706
      %v2828 = vpack.c.bf16 %v2709, %v2709
      %v2829 = vpack.c.bf16 %v2711, %v2711
      %v2830 = vpack.c.bf16 %v2714, %v2714
      %v2831 = vpack.c.bf16 %v2716, %v2716
      %v2832 = vpack.c.bf16 %v2719, %v2719
      %v2833 = vpack.c.bf16 %v2721, %v2721
      %v2834 = vpack.c.bf16 %v2724, %v2724
      %v2835 = vpack.c.bf16 %v2726, %v2726
      %v2836 = vpack.c.bf16 %v2729, %v2729
      %v2837 = vpack.c.bf16 %v2731, %v2731
      %v2838 = vpack.c.bf16 %v2734, %v2734
      %v2839 = vpack.c.bf16 %v2736, %v2736
      %v2840 = vpack.c.bf16 %v2739, %v2739
      %v2841 = vpack.c.bf16 %v2741, %v2741
      %v2842 = vpack.c.bf16 %v2744, %v2744
      %v2843 = vpack.c.bf16 %v2746, %v2746
      %v2844 = vpack.c.bf16 %v2749, %v2749
      %v2845 = vpack.c.bf16 %v2751, %v2751
      %v2846 = vpack.c.bf16 %v2754, %v2754
      %v2847 = vpack.c.bf16 %v2756, %v2756
      %v2848 = vpack.c.bf16 %v2759, %v2759
      %v2849 = vpack.c.bf16 %v2761, %v2761
      %v2850 = vpack.c.bf16 %v2764, %v2764
      %v2851 = vpack.c.bf16 %v2766, %v2766
      %v2852 = vpack.c.bf16 %v2769, %v2769
      %v2853 = vpack.c.bf16 %v2771, %v2771
      %v2854 = vpack.c.bf16 %v2774, %v2774
      %v2855 = vpack.c.bf16 %v2776, %v2776
      %v2856 = vpack.c.bf16 %v2779, %v2779
      %v2857 = vpack.c.bf16 %v2781, %v2781
      %v2858 = vpack.c.bf16 %v2784, %v2784
      %v2859 = vpack.c.bf16 %v2786, %v2786
      %v2868 = vunpack.c.l.b16 %v2796
      %v2869 = vunpack.c.l.b16 %v2797
      %v2870 = vunpack.c.l.b16 %v2798
      %v2871 = vunpack.c.l.b16 %v2799
      %v2872 = vunpack.c.l.b16 %v2800
      %v2873 = vunpack.c.l.b16 %v2801
      %v2874 = vunpack.c.l.b16 %v2802
      %v2875 = vunpack.c.l.b16 %v2803
      %v2876 = vpack.c.b16 %v2869, %v2868
      %v2877 = vpack.c.b16 %v2871, %v2870
      %v2878 = vpack.c.b16 %v2873, %v2872
      %v2879 = vpack.c.b16 %v2875, %v2874
      %v2881 = vsel %vm1647, %v2876, 0
      %v2884 = vsel %vm1647, %v2877, 0
      %v2887 = vsel %vm1647, %v2878, 0
      %v2890 = vsel %vm1647, %v2879, 0
      %2892 = vmatpush.bf16.msra.mxu0 0
      %2893 = vmatpush.bf16.msra.mxu0 0
      %2894 = vmatpush.bf16.msra.mxu0 0
      %2895 = vmatpush.bf16.msra.mxu0 0
      %2896 = vmatpush.bf16.msra.mxu0 0
      %2897 = vmatpush.bf16.msra.mxu0 0
      %2898 = vmatpush.bf16.msra.mxu0 0
      %2899 = vmatpush.bf16.msra.mxu0 %v1662
      %2900 = vmatmul.bf16.gmra.mxu0 %v2881
      %v2901 = vpop.f32.mrf.mxu0
      %v2902 = vadd.f32 0.0, %v2901
      %v2903 = vpop.f32.mrf.mxu0
      %v2904 = vadd.f32 0.0, %v2903
      %2905 = vmatmul.bf16.gmra.mxu0 %v2884
      %v2906 = vpop.f32.mrf.mxu0
      %v2907 = vadd.f32 0.0, %v2906
      %v2908 = vpop.f32.mrf.mxu0
      %v2909 = vadd.f32 0.0, %v2908
      %2910 = vmatmul.bf16.gmra.mxu0 %v2887
      %v2911 = vpop.f32.mrf.mxu0
      %v2912 = vadd.f32 0.0, %v2911
      %v2913 = vpop.f32.mrf.mxu0
      %v2914 = vadd.f32 0.0, %v2913
      %2915 = vmatmul.bf16.gmra.mxu0 %v2890
      %v2916 = vpop.f32.mrf.mxu0
      %v2917 = vadd.f32 0.0, %v2916
      %v2918 = vpop.f32.mrf.mxu0
      %v2919 = vadd.f32 0.0, %v2918
      %2920 = vdwg.mxu0
      %v2929 = vunpack.c.l.b16 %v2788
      %v2930 = vunpack.c.l.b16 %v2789
      %v2931 = vunpack.c.l.b16 %v2790
      %v2932 = vunpack.c.l.b16 %v2791
      %v2933 = vunpack.c.l.b16 %v2792
      %v2934 = vunpack.c.l.b16 %v2793
      %v2935 = vunpack.c.l.b16 %v2794
      %v2936 = vunpack.c.l.b16 %v2795
      %v2937 = vpack.c.b16 %v2930, %v2929
      %v2938 = vpack.c.b16 %v2932, %v2931
      %v2939 = vpack.c.b16 %v2934, %v2933
      %v2940 = vpack.c.b16 %v2936, %v2935
      %v2942 = vsel %vm1647, %v2937, 0
      %v2945 = vsel %vm1647, %v2938, 0
      %v2948 = vsel %vm1647, %v2939, 0
      %v2951 = vsel %vm1647, %v2940, 0
      %2953 = vmatpush.bf16.msra.mxu0 0
      %2954 = vmatpush.bf16.msra.mxu0 0
      %2955 = vmatpush.bf16.msra.mxu0 0
      %2956 = vmatpush.bf16.msra.mxu0 0
      %2957 = vmatpush.bf16.msra.mxu0 0
      %2958 = vmatpush.bf16.msra.mxu0 0
      %2959 = vmatpush.bf16.msra.mxu0 0
      %2960 = vmatpush.bf16.msra.mxu0 %v1726
      %2961 = vmatmul.bf16.gmra.mxu0 %v2942
      %v2962 = vpop.f32.mrf.mxu0
      %v2963 = vadd.f32 %v2902, %v2962
      %v2964 = vpop.f32.mrf.mxu0
      %v2965 = vadd.f32 %v2904, %v2964
      %2966 = vmatmul.bf16.gmra.mxu0 %v2945
      %v2967 = vpop.f32.mrf.mxu0
      %v2968 = vadd.f32 %v2907, %v2967
      %v2969 = vpop.f32.mrf.mxu0
      %v2970 = vadd.f32 %v2909, %v2969
      %2971 = vmatmul.bf16.gmra.mxu0 %v2948
      %v2972 = vpop.f32.mrf.mxu0
      %v2973 = vadd.f32 %v2912, %v2972
      %v2974 = vpop.f32.mrf.mxu0
      %v2975 = vadd.f32 %v2914, %v2974
      %2976 = vmatmul.bf16.gmra.mxu0 %v2951
      %v2977 = vpop.f32.mrf.mxu0
      %v2978 = vadd.f32 %v2917, %v2977
      %v2979 = vpop.f32.mrf.mxu0
      %v2980 = vadd.f32 %v2919, %v2979
      %2981 = vdwg.mxu0
      %v2990 = vunpack.c.l.b16 %v2804
      %v2991 = vunpack.c.l.b16 %v2805
      %v2992 = vunpack.c.l.b16 %v2806
      %v2993 = vunpack.c.l.b16 %v2807
      %v2994 = vunpack.c.l.b16 %v2808
      %v2995 = vunpack.c.l.b16 %v2809
      %v2996 = vunpack.c.l.b16 %v2810
      %v2997 = vunpack.c.l.b16 %v2811
      %v2998 = vpack.c.b16 %v2991, %v2990
      %v2999 = vpack.c.b16 %v2993, %v2992
      %v3000 = vpack.c.b16 %v2995, %v2994
      %v3001 = vpack.c.b16 %v2997, %v2996
      %v3003 = vsel %vm1647, %v2998, 0
      %v3006 = vsel %vm1647, %v2999, 0
      %v3009 = vsel %vm1647, %v3000, 0
      %v3012 = vsel %vm1647, %v3001, 0
      %3014 = vmatpush.bf16.msra.mxu0 0
      %3015 = vmatpush.bf16.msra.mxu0 0
      %3016 = vmatpush.bf16.msra.mxu0 0
      %3017 = vmatpush.bf16.msra.mxu0 0
      %3018 = vmatpush.bf16.msra.mxu0 0
      %3019 = vmatpush.bf16.msra.mxu0 0
      %3020 = vmatpush.bf16.msra.mxu0 0
      %3021 = vmatpush.bf16.msra.mxu0 %v1792
      %3022 = vmatmul.bf16.gmra.mxu0 %v3003
      %v3023 = vpop.f32.mrf.mxu0
      %v3024 = vadd.f32 0.0, %v3023
      %v3025 = vpop.f32.mrf.mxu0
      %v3026 = vadd.f32 0.0, %v3025
      %3027 = vmatmul.bf16.gmra.mxu0 %v3006
      %v3028 = vpop.f32.mrf.mxu0
      %v3029 = vadd.f32 0.0, %v3028
      %v3030 = vpop.f32.mrf.mxu0
      %v3031 = vadd.f32 0.0, %v3030
      %3032 = vmatmul.bf16.gmra.mxu0 %v3009
      %v3033 = vpop.f32.mrf.mxu0
      %v3034 = vadd.f32 0.0, %v3033
      %v3035 = vpop.f32.mrf.mxu0
      %v3036 = vadd.f32 0.0, %v3035
      %3037 = vmatmul.bf16.gmra.mxu0 %v3012
      %v3038 = vpop.f32.mrf.mxu0
      %v3039 = vadd.f32 0.0, %v3038
      %v3040 = vpop.f32.mrf.mxu0
      %v3041 = vadd.f32 0.0, %v3040
      %3042 = vdwg.mxu0
      %v3043 = vadd.f32 %v2963, %v3024
      %v3044 = vadd.f32 %v2965, %v3026
      %v3045 = vadd.f32 %v2968, %v3029
      %v3046 = vadd.f32 %v2970, %v3031
      %v3047 = vadd.f32 %v2973, %v3034
      %v3048 = vadd.f32 %v2975, %v3036
      %v3049 = vadd.f32 %v2978, %v3039
      %v3050 = vadd.f32 %v2980, %v3041
      %v3059 = vunpack.c.l.b16 %v2812
      %v3060 = vunpack.c.l.b16 %v2813
      %v3061 = vunpack.c.l.b16 %v2814
      %v3062 = vunpack.c.l.b16 %v2815
      %v3063 = vunpack.c.l.b16 %v2816
      %v3064 = vunpack.c.l.b16 %v2817
      %v3065 = vunpack.c.l.b16 %v2818
      %v3066 = vunpack.c.l.b16 %v2819
      %v3067 = vpack.c.b16 %v3060, %v3059
      %v3068 = vpack.c.b16 %v3062, %v3061
      %v3069 = vpack.c.b16 %v3064, %v3063
      %v3070 = vpack.c.b16 %v3066, %v3065
      %v3072 = vsel %vm1647, %v3067, 0
      %v3075 = vsel %vm1647, %v3068, 0
      %v3078 = vsel %vm1647, %v3069, 0
      %v3081 = vsel %vm1647, %v3070, 0
      %3083 = vmatpush.bf16.msra.mxu0 0
      %3084 = vmatpush.bf16.msra.mxu0 0
      %3085 = vmatpush.bf16.msra.mxu0 0
      %3086 = vmatpush.bf16.msra.mxu0 0
      %3087 = vmatpush.bf16.msra.mxu0 0
      %3088 = vmatpush.bf16.msra.mxu0 0
      %3089 = vmatpush.bf16.msra.mxu0 0
      %3090 = vmatpush.bf16.msra.mxu0 %v1866
      %3091 = vmatmul.bf16.gmra.mxu0 %v3072
      %v3092 = vpop.f32.mrf.mxu0
      %v3093 = vadd.f32 0.0, %v3092
      %v3094 = vpop.f32.mrf.mxu0
      %v3095 = vadd.f32 0.0, %v3094
      %3096 = vmatmul.bf16.gmra.mxu0 %v3075
      %v3097 = vpop.f32.mrf.mxu0
      %v3098 = vadd.f32 0.0, %v3097
      %v3099 = vpop.f32.mrf.mxu0
      %v3100 = vadd.f32 0.0, %v3099
      %3101 = vmatmul.bf16.gmra.mxu0 %v3078
      %v3102 = vpop.f32.mrf.mxu0
      %v3103 = vadd.f32 0.0, %v3102
      %v3104 = vpop.f32.mrf.mxu0
      %v3105 = vadd.f32 0.0, %v3104
      %3106 = vmatmul.bf16.gmra.mxu0 %v3081
      %v3107 = vpop.f32.mrf.mxu0
      %v3108 = vadd.f32 0.0, %v3107
      %v3109 = vpop.f32.mrf.mxu0
      %v3110 = vadd.f32 0.0, %v3109
      %3111 = vdwg.mxu0
      %v3112 = vadd.f32 %v3043, %v3093
      %v3113 = vadd.f32 %v3044, %v3095
      %v3114 = vadd.f32 %v3045, %v3098
      %v3115 = vadd.f32 %v3046, %v3100
      %v3116 = vadd.f32 %v3047, %v3103
      %v3117 = vadd.f32 %v3048, %v3105
      %v3118 = vadd.f32 %v3049, %v3108
      %v3119 = vadd.f32 %v3050, %v3110
      %v3128 = vunpack.c.l.b16 %v2820
      %v3129 = vunpack.c.l.b16 %v2821
      %v3130 = vunpack.c.l.b16 %v2822
      %v3131 = vunpack.c.l.b16 %v2823
      %v3132 = vunpack.c.l.b16 %v2824
      %v3133 = vunpack.c.l.b16 %v2825
      %v3134 = vunpack.c.l.b16 %v2826
      %v3135 = vunpack.c.l.b16 %v2827
      %v3136 = vpack.c.b16 %v3129, %v3128
      %v3137 = vpack.c.b16 %v3131, %v3130
      %v3138 = vpack.c.b16 %v3133, %v3132
      %v3139 = vpack.c.b16 %v3135, %v3134
      %v3141 = vsel %vm1647, %v3136, 0
      %v3144 = vsel %vm1647, %v3137, 0
      %v3147 = vsel %vm1647, %v3138, 0
      %v3150 = vsel %vm1647, %v3139, 0
      %3152 = vmatpush.bf16.msra.mxu0 0
      %3153 = vmatpush.bf16.msra.mxu0 0
      %3154 = vmatpush.bf16.msra.mxu0 0
      %3155 = vmatpush.bf16.msra.mxu0 0
      %3156 = vmatpush.bf16.msra.mxu0 0
      %3157 = vmatpush.bf16.msra.mxu0 0
      %3158 = vmatpush.bf16.msra.mxu0 0
      %3159 = vmatpush.bf16.msra.mxu0 %v1940
      %3160 = vmatmul.bf16.gmra.mxu0 %v3141
      %v3161 = vpop.f32.mrf.mxu0
      %v3162 = vadd.f32 0.0, %v3161
      %v3163 = vpop.f32.mrf.mxu0
      %v3164 = vadd.f32 0.0, %v3163
      %3165 = vmatmul.bf16.gmra.mxu0 %v3144
      %v3166 = vpop.f32.mrf.mxu0
      %v3167 = vadd.f32 0.0, %v3166
      %v3168 = vpop.f32.mrf.mxu0
      %v3169 = vadd.f32 0.0, %v3168
      %3170 = vmatmul.bf16.gmra.mxu0 %v3147
      %v3171 = vpop.f32.mrf.mxu0
      %v3172 = vadd.f32 0.0, %v3171
      %v3173 = vpop.f32.mrf.mxu0
      %v3174 = vadd.f32 0.0, %v3173
      %3175 = vmatmul.bf16.gmra.mxu0 %v3150
      %v3176 = vpop.f32.mrf.mxu0
      %v3177 = vadd.f32 0.0, %v3176
      %v3178 = vpop.f32.mrf.mxu0
      %v3179 = vadd.f32 0.0, %v3178
      %3180 = vdwg.mxu0
      %v3181 = vadd.f32 %v3112, %v3162
      %v3182 = vadd.f32 %v3113, %v3164
      %v3183 = vadd.f32 %v3114, %v3167
      %v3184 = vadd.f32 %v3115, %v3169
      %v3185 = vadd.f32 %v3116, %v3172
      %v3186 = vadd.f32 %v3117, %v3174
      %v3187 = vadd.f32 %v3118, %v3177
      %v3188 = vadd.f32 %v3119, %v3179
      %v3197 = vunpack.c.l.b16 %v2828
      %v3198 = vunpack.c.l.b16 %v2829
      %v3199 = vunpack.c.l.b16 %v2830
      %v3200 = vunpack.c.l.b16 %v2831
      %v3201 = vunpack.c.l.b16 %v2832
      %v3202 = vunpack.c.l.b16 %v2833
      %v3203 = vunpack.c.l.b16 %v2834
      %v3204 = vunpack.c.l.b16 %v2835
      %v3205 = vpack.c.b16 %v3198, %v3197
      %v3206 = vpack.c.b16 %v3200, %v3199
      %v3207 = vpack.c.b16 %v3202, %v3201
      %v3208 = vpack.c.b16 %v3204, %v3203
      %v3210 = vsel %vm1647, %v3205, 0
      %v3213 = vsel %vm1647, %v3206, 0
      %v3216 = vsel %vm1647, %v3207, 0
      %v3219 = vsel %vm1647, %v3208, 0
      %3221 = vmatpush.bf16.msra.mxu0 0
      %3222 = vmatpush.bf16.msra.mxu0 0
      %3223 = vmatpush.bf16.msra.mxu0 0
      %3224 = vmatpush.bf16.msra.mxu0 0
      %3225 = vmatpush.bf16.msra.mxu0 0
      %3226 = vmatpush.bf16.msra.mxu0 0
      %3227 = vmatpush.bf16.msra.mxu0 0
      %3228 = vmatpush.bf16.msra.mxu0 %v2014
      %3229 = vmatmul.bf16.gmra.mxu0 %v3210
      %v3230 = vpop.f32.mrf.mxu0
      %v3231 = vadd.f32 0.0, %v3230
      %v3232 = vpop.f32.mrf.mxu0
      %v3233 = vadd.f32 0.0, %v3232
      %3234 = vmatmul.bf16.gmra.mxu0 %v3213
      %v3235 = vpop.f32.mrf.mxu0
      %v3236 = vadd.f32 0.0, %v3235
      %v3237 = vpop.f32.mrf.mxu0
      %v3238 = vadd.f32 0.0, %v3237
      %3239 = vmatmul.bf16.gmra.mxu0 %v3216
      %v3240 = vpop.f32.mrf.mxu0
      %v3241 = vadd.f32 0.0, %v3240
      %v3242 = vpop.f32.mrf.mxu0
      %v3243 = vadd.f32 0.0, %v3242
      %3244 = vmatmul.bf16.gmra.mxu0 %v3219
      %v3245 = vpop.f32.mrf.mxu0
      %v3246 = vadd.f32 0.0, %v3245
      %v3247 = vpop.f32.mrf.mxu0
      %v3248 = vadd.f32 0.0, %v3247
      %3249 = vdwg.mxu0
      %v3250 = vadd.f32 %v3181, %v3231
      %v3251 = vadd.f32 %v3182, %v3233
      %v3252 = vadd.f32 %v3183, %v3236
      %v3253 = vadd.f32 %v3184, %v3238
      %v3254 = vadd.f32 %v3185, %v3241
      %v3255 = vadd.f32 %v3186, %v3243
      %v3256 = vadd.f32 %v3187, %v3246
      %v3257 = vadd.f32 %v3188, %v3248
      %v3266 = vunpack.c.l.b16 %v2836
      %v3267 = vunpack.c.l.b16 %v2837
      %v3268 = vunpack.c.l.b16 %v2838
      %v3269 = vunpack.c.l.b16 %v2839
      %v3270 = vunpack.c.l.b16 %v2840
      %v3271 = vunpack.c.l.b16 %v2841
      %v3272 = vunpack.c.l.b16 %v2842
      %v3273 = vunpack.c.l.b16 %v2843
      %v3274 = vpack.c.b16 %v3267, %v3266
      %v3275 = vpack.c.b16 %v3269, %v3268
      %v3276 = vpack.c.b16 %v3271, %v3270
      %v3277 = vpack.c.b16 %v3273, %v3272
      %v3279 = vsel %vm1647, %v3274, 0
      %v3282 = vsel %vm1647, %v3275, 0
      %v3285 = vsel %vm1647, %v3276, 0
      %v3288 = vsel %vm1647, %v3277, 0
      %3290 = vmatpush.bf16.msra.mxu0 0
      %3291 = vmatpush.bf16.msra.mxu0 0
      %3292 = vmatpush.bf16.msra.mxu0 0
      %3293 = vmatpush.bf16.msra.mxu0 0
      %3294 = vmatpush.bf16.msra.mxu0 0
      %3295 = vmatpush.bf16.msra.mxu0 0
      %3296 = vmatpush.bf16.msra.mxu0 0
      %3297 = vmatpush.bf16.msra.mxu0 %v2088
      %3298 = vmatmul.bf16.gmra.mxu0 %v3279
      %v3299 = vpop.f32.mrf.mxu0
      %v3300 = vadd.f32 0.0, %v3299
      %v3301 = vpop.f32.mrf.mxu0
      %v3302 = vadd.f32 0.0, %v3301
      %3303 = vmatmul.bf16.gmra.mxu0 %v3282
      %v3304 = vpop.f32.mrf.mxu0
      %v3305 = vadd.f32 0.0, %v3304
      %v3306 = vpop.f32.mrf.mxu0
      %v3307 = vadd.f32 0.0, %v3306
      %3308 = vmatmul.bf16.gmra.mxu0 %v3285
      %v3309 = vpop.f32.mrf.mxu0
      %v3310 = vadd.f32 0.0, %v3309
      %v3311 = vpop.f32.mrf.mxu0
      %v3312 = vadd.f32 0.0, %v3311
      %3313 = vmatmul.bf16.gmra.mxu0 %v3288
      %v3314 = vpop.f32.mrf.mxu0
      %v3315 = vadd.f32 0.0, %v3314
      %v3316 = vpop.f32.mrf.mxu0
      %v3317 = vadd.f32 0.0, %v3316
      %3318 = vdwg.mxu0
      %v3319 = vadd.f32 %v3250, %v3300
      %v3320 = vadd.f32 %v3251, %v3302
      %v3321 = vadd.f32 %v3252, %v3305
      %v3322 = vadd.f32 %v3253, %v3307
      %v3323 = vadd.f32 %v3254, %v3310
      %v3324 = vadd.f32 %v3255, %v3312
      %v3325 = vadd.f32 %v3256, %v3315
      %v3326 = vadd.f32 %v3257, %v3317
      %v3335 = vunpack.c.l.b16 %v2844
      %v3336 = vunpack.c.l.b16 %v2845
      %v3337 = vunpack.c.l.b16 %v2846
      %v3338 = vunpack.c.l.b16 %v2847
      %v3339 = vunpack.c.l.b16 %v2848
      %v3340 = vunpack.c.l.b16 %v2849
      %v3341 = vunpack.c.l.b16 %v2850
      %v3342 = vunpack.c.l.b16 %v2851
      %v3343 = vpack.c.b16 %v3336, %v3335
      %v3344 = vpack.c.b16 %v3338, %v3337
      %v3345 = vpack.c.b16 %v3340, %v3339
      %v3346 = vpack.c.b16 %v3342, %v3341
      %v3348 = vsel %vm1647, %v3343, 0
      %v3351 = vsel %vm1647, %v3344, 0
      %v3354 = vsel %vm1647, %v3345, 0
      %v3357 = vsel %vm1647, %v3346, 0
      %3359 = vmatpush.bf16.msra.mxu0 0
      %3360 = vmatpush.bf16.msra.mxu0 0
      %3361 = vmatpush.bf16.msra.mxu0 0
      %3362 = vmatpush.bf16.msra.mxu0 0
      %3363 = vmatpush.bf16.msra.mxu0 0
      %3364 = vmatpush.bf16.msra.mxu0 0
      %3365 = vmatpush.bf16.msra.mxu0 0
      %3366 = vmatpush.bf16.msra.mxu0 %v2162
      %3367 = vmatmul.bf16.gmra.mxu0 %v3348
      %v3368 = vpop.f32.mrf.mxu0
      %v3369 = vadd.f32 0.0, %v3368
      %v3370 = vpop.f32.mrf.mxu0
      %v3371 = vadd.f32 0.0, %v3370
      %3372 = vmatmul.bf16.gmra.mxu0 %v3351
      %v3373 = vpop.f32.mrf.mxu0
      %v3374 = vadd.f32 0.0, %v3373
      %v3375 = vpop.f32.mrf.mxu0
      %v3376 = vadd.f32 0.0, %v3375
      %3377 = vmatmul.bf16.gmra.mxu0 %v3354
      %v3378 = vpop.f32.mrf.mxu0
      %v3379 = vadd.f32 0.0, %v3378
      %v3380 = vpop.f32.mrf.mxu0
      %v3381 = vadd.f32 0.0, %v3380
      %3382 = vmatmul.bf16.gmra.mxu0 %v3357
      %v3383 = vpop.f32.mrf.mxu0
      %v3384 = vadd.f32 0.0, %v3383
      %v3385 = vpop.f32.mrf.mxu0
      %v3386 = vadd.f32 0.0, %v3385
      %3387 = vdwg.mxu0
      %v3388 = vadd.f32 %v3319, %v3369
      %v3389 = vadd.f32 %v3320, %v3371
      %v3390 = vadd.f32 %v3321, %v3374
      %v3391 = vadd.f32 %v3322, %v3376
      %v3392 = vadd.f32 %v3323, %v3379
      %v3393 = vadd.f32 %v3324, %v3381
      %v3394 = vadd.f32 %v3325, %v3384
      %v3395 = vadd.f32 %v3326, %v3386
      %v3404 = vunpack.c.l.b16 %v2852
      %v3405 = vunpack.c.l.b16 %v2853
      %v3406 = vunpack.c.l.b16 %v2854
      %v3407 = vunpack.c.l.b16 %v2855
      %v3408 = vunpack.c.l.b16 %v2856
      %v3409 = vunpack.c.l.b16 %v2857
      %v3410 = vunpack.c.l.b16 %v2858
      %v3411 = vunpack.c.l.b16 %v2859
      %v3412 = vpack.c.b16 %v3405, %v3404
      %v3413 = vpack.c.b16 %v3407, %v3406
      %v3414 = vpack.c.b16 %v3409, %v3408
      %v3415 = vpack.c.b16 %v3411, %v3410
      %v3417 = vsel %vm1647, %v3412, 0
      %v3420 = vsel %vm1647, %v3413, 0
      %v3423 = vsel %vm1647, %v3414, 0
      %v3426 = vsel %vm1647, %v3415, 0
      %3428 = vmatpush.bf16.msra.mxu0 0
      %3429 = vmatpush.bf16.msra.mxu0 0
      %3430 = vmatpush.bf16.msra.mxu0 0
      %3431 = vmatpush.bf16.msra.mxu0 0
      %3432 = vmatpush.bf16.msra.mxu0 0
      %3433 = vmatpush.bf16.msra.mxu0 0
      %3434 = vmatpush.bf16.msra.mxu0 0
      %3435 = vmatpush.bf16.msra.mxu0 %v2236
      %3436 = vmatmul.bf16.gmra.mxu0 %v3417
      %v3437 = vpop.f32.mrf.mxu0
      %v3438 = vadd.f32 0.0, %v3437
      %v3439 = vpop.f32.mrf.mxu0
      %v3440 = vadd.f32 0.0, %v3439
      %3441 = vmatmul.bf16.gmra.mxu0 %v3420
      %v3442 = vpop.f32.mrf.mxu0
      %v3443 = vadd.f32 0.0, %v3442
      %v3444 = vpop.f32.mrf.mxu0
      %v3445 = vadd.f32 0.0, %v3444
      %3446 = vmatmul.bf16.gmra.mxu0 %v3423
      %v3447 = vpop.f32.mrf.mxu0
      %v3448 = vadd.f32 0.0, %v3447
      %v3449 = vpop.f32.mrf.mxu0
      %v3450 = vadd.f32 0.0, %v3449
      %3451 = vmatmul.bf16.gmra.mxu0 %v3426
      %v3452 = vpop.f32.mrf.mxu0
      %v3453 = vadd.f32 0.0, %v3452
      %v3454 = vpop.f32.mrf.mxu0
      %v3455 = vadd.f32 0.0, %v3454
      %3456 = vdwg.mxu0
      %v3457 = vadd.f32 %v3388, %v3438
      %v3458 = vadd.f32 %v3389, %v3440
      %v3459 = vadd.f32 %v3390, %v3443
      %v3460 = vadd.f32 %v3391, %v3445
      %v3461 = vadd.f32 %v3392, %v3448
      %v3462 = vadd.f32 %v3393, %v3450
      %v3463 = vadd.f32 %v3394, %v3453
      %v3464 = vadd.f32 %v3395, %v3455
      %v3465 = vadd.f32 %v3457, %v2276
      %v3466 = vadd.f32 %v3458, %v2276
      %v3467 = vadd.f32 %v3459, %v2276
      %v3468 = vadd.f32 %v3460, %v2276
      %v3469 = vadd.f32 %v3461, %v2276
      %v3470 = vadd.f32 %v3462, %v2276
      %v3471 = vadd.f32 %v3463, %v2276
      %v3472 = vadd.f32 %v3464, %v2276
      %vm3473 = vcmp.ge.f32.partialorder %v3465, 0.0
      %vm3474 = vcmp.ge.f32.partialorder %v3466, 0.0
      %vm3475 = vcmp.ge.f32.partialorder %v3467, 0.0
      %vm3476 = vcmp.ge.f32.partialorder %v3468, 0.0
      %vm3477 = vcmp.ge.f32.partialorder %v3469, 0.0
      %vm3478 = vcmp.ge.f32.partialorder %v3470, 0.0
      %vm3479 = vcmp.ge.f32.partialorder %v3471, 0.0
      %vm3480 = vcmp.ge.f32.partialorder %v3472, 0.0
      %v3481 = vmul.f32 %v3465, 0.2
      %v3482 = vmul.f32 %v3466, 0.2
      %v3483 = vmul.f32 %v3467, 0.2
      %v3484 = vmul.f32 %v3468, 0.2
      %v3485 = vmul.f32 %v3469, 0.2
      %v3486 = vmul.f32 %v3470, 0.2
      %v3487 = vmul.f32 %v3471, 0.2
      %v3488 = vmul.f32 %v3472, 0.2
      %v3489 = vsel %vm3473, %v3465, %v3481
      %v3490 = vsel %vm3474, %v3466, %v3482
      %v3491 = vsel %vm3475, %v3467, %v3483
      %v3492 = vsel %vm3476, %v3468, %v3484
      %v3493 = vsel %vm3477, %v3469, %v3485
      %v3494 = vsel %vm3478, %v3470, %v3486
      %v3495 = vsel %vm3479, %v3471, %v3487
      %v3496 = vsel %vm3480, %v3472, %v3488
      %v3497 = vpack.c.bf16 %v3490, %v3489
      %v3498 = vpack.c.bf16 %v3492, %v3491
      %v3499 = vpack.c.bf16 %v3494, %v3493
      %v3500 = vpack.c.bf16 %v3496, %v3495
      %v3501 = vld [vmem:[%s4] sm:$0xf]
      %v3502 = vld [vmem:[%s4 + $0x4] sm:$0xf]
      %v3503 = vld [vmem:[%s4 + $0x8] sm:$0xf]
      %v3504 = vld [vmem:[%s4 + $0xc] sm:$0xf]
      %v3505 = vld [vmem:[%s4 + $0x10] sm:$0xf]
      %v3506 = vld [vmem:[%s4 + $0x14] sm:$0xf]
      %v3507 = vld [vmem:[%s4 + $0x18] sm:$0xf]
      %v3508 = vld [vmem:[%s4 + $0x1c] sm:$0xf]
      %v3509 = vld [vmem:[%s4 + $0x20] sm:$0xf]
      %v3510 = vld [vmem:[%s4 + $0x24] sm:$0xf]
      %v3511 = vld [vmem:[%s4 + $0x28] sm:$0xf]
      %v3512 = vld [vmem:[%s4 + $0x2c] sm:$0xf]
      %v3513 = vld [vmem:[%s4 + $0x30] sm:$0xf]
      %v3514 = vld [vmem:[%s4 + $0x34] sm:$0xf]
      %v3515 = vld [vmem:[%s4 + $0x38] sm:$0xf]
      %v3516 = vld [vmem:[%s4 + $0x3c] sm:$0xf]
      %v3517 = vld [vmem:[%s4 + $0x40] sm:$0xf]
      %v3518 = vld [vmem:[%s4 + $0x44] sm:$0xf]
      %v3519 = vld [vmem:[%s7] sm:$0x1]
      %v3520 = vld [vmem:[%s6] sm:$0x1]
      %v3539 = vunpack.c.l.b16 %v3501
      %v3540 = vunpack.c.l.b16 %v3502
      %v3541 = vunpack.c.l.b16 %v3503
      %v3542 = vunpack.c.l.b16 %v3504
      %v3543 = vunpack.c.l.b16 %v3505
      %v3544 = vunpack.c.l.b16 %v3506
      %v3545 = vunpack.c.l.b16 %v3507
      %v3546 = vunpack.c.l.b16 %v3508
      %v3547 = vunpack.c.l.b16 %v3509
      %v3548 = vunpack.c.l.b16 %v3510
      %v3549 = vunpack.c.l.b16 %v3511
      %v3550 = vunpack.c.l.b16 %v3512
      %v3551 = vunpack.c.l.b16 %v3513
      %v3552 = vunpack.c.l.b16 %v3514
      %v3553 = vunpack.c.l.b16 %v3515
      %v3554 = vunpack.c.l.b16 %v3516
      %v3555 = vunpack.c.l.b16 %v3517
      %v3556 = vunpack.c.l.b16 %v3518
      %v3557 = vpack.c.b16 %v3540, %v3539
      %v3558 = vpack.c.b16 %v3542, %v3541
      %v3559 = vpack.c.b16 %v3544, %v3543
      %v3560 = vpack.c.b16 %v3546, %v3545
      %v3561 = vpack.c.b16 %v3548, %v3547
      %v3562 = vpack.c.b16 %v3550, %v3549
      %v3563 = vpack.c.b16 %v3552, %v3551
      %v3564 = vpack.c.b16 %v3554, %v3553
      %v3565 = vpack.c.b16 %v3556, %v3555
      %vm3566 = vcmask 523264
      %v3568 = vsel %vm3566, %v3557, 0
      %v3571 = vsel %vm3566, %v3558, 0
      %v3574 = vsel %vm3566, %v3559, 0
      %v3577 = vsel %vm3566, %v3560, 0
      %v3580 = vsel %vm3566, %v3561, 0
      %v3583 = vsel %vm3566, %v3562, 0
      %v3586 = vsel %vm3566, %v3563, 0
      %v3589 = vsel %vm3566, %v3564, 0
      %v3592 = vsel %vm3566, %v3565, 0
      %3594 = vmatpush.bf16.msra.mxu0 0
      %3595 = vmatpush.bf16.msra.mxu0 0
      %3596 = vmatpush.bf16.msra.mxu0 0
      %3597 = vmatpush.bf16.msra.mxu0 0
      %3598 = vmatpush.bf16.msra.mxu0 %v2313
      %3599 = vmatpush.bf16.msra.mxu0 %v2312
      %3600 = vmatpush.bf16.msra.mxu0 %v2311
      %3601 = vmatpush.bf16.msra.mxu0 %v2310
      %3602 = vmatmul.bf16.gmra.mxu0 %v3568
      %v3603 = vpop.f32.mrf.mxu0
      %v3604 = vadd.f32 0.0, %v3603
      %v3605 = vpop.f32.mrf.mxu0
      %v3606 = vadd.f32 0.0, %v3605
      %3607 = vmatmul.bf16.gmra.mxu0 %v3571
      %v3608 = vpop.f32.mrf.mxu0
      %v3609 = vadd.f32 0.0, %v3608
      %v3610 = vpop.f32.mrf.mxu0
      %v3611 = vadd.f32 0.0, %v3610
      %3612 = vmatmul.bf16.gmra.mxu0 %v3574
      %v3613 = vpop.f32.mrf.mxu0
      %v3614 = vadd.f32 0.0, %v3613
      %v3615 = vpop.f32.mrf.mxu0
      %v3616 = vadd.f32 0.0, %v3615
      %3617 = vmatmul.bf16.gmra.mxu0 %v3577
      %v3618 = vpop.f32.mrf.mxu0
      %v3619 = vadd.f32 0.0, %v3618
      %v3620 = vpop.f32.mrf.mxu0
      %v3621 = vadd.f32 0.0, %v3620
      %3622 = vmatmul.bf16.gmra.mxu0 %v3580
      %v3623 = vpop.f32.mrf.mxu0
      %v3624 = vadd.f32 0.0, %v3623
      %v3625 = vpop.f32.mrf.mxu0
      %v3626 = vadd.f32 0.0, %v3625
      %3627 = vmatmul.bf16.gmra.mxu0 %v3583
      %v3628 = vpop.f32.mrf.mxu0
      %v3629 = vadd.f32 0.0, %v3628
      %v3630 = vpop.f32.mrf.mxu0
      %v3631 = vadd.f32 0.0, %v3630
      %3632 = vmatmul.bf16.gmra.mxu0 %v3586
      %v3633 = vpop.f32.mrf.mxu0
      %v3634 = vadd.f32 0.0, %v3633
      %v3635 = vpop.f32.mrf.mxu0
      %v3636 = vadd.f32 0.0, %v3635
      %3637 = vmatmul.bf16.gmra.mxu0 %v3589
      %v3638 = vpop.f32.mrf.mxu0
      %v3639 = vadd.f32 0.0, %v3638
      %v3640 = vpop.f32.mrf.mxu0
      %v3641 = vadd.f32 0.0, %v3640
      %3642 = vmatmul.bf16.gmra.mxu0 %v3592
      %v3643 = vpop.f32.mrf.mxu0
      %v3644 = vadd.f32 0.0, %v3643
      %v3645 = vpop.f32.mrf.mxu0
      %v3646 = vadd.f32 0.0, %v3645
      %3647 = vdwg.mxu0
      %v3648 = vpack.c.bf16 %v3604, %v3604
      %v3649 = vpack.c.bf16 %v3606, %v3606
      %v3650 = vpack.c.bf16 %v3609, %v3609
      %v3651 = vpack.c.bf16 %v3611, %v3611
      %v3652 = vpack.c.bf16 %v3614, %v3614
      %v3653 = vpack.c.bf16 %v3616, %v3616
      %v3654 = vpack.c.bf16 %v3619, %v3619
      %v3655 = vpack.c.bf16 %v3621, %v3621
      %v3656 = vpack.c.bf16 %v3624, %v3624
      %v3657 = vpack.c.bf16 %v3626, %v3626
      %v3658 = vpack.c.bf16 %v3629, %v3629
      %v3659 = vpack.c.bf16 %v3631, %v3631
      %v3660 = vpack.c.bf16 %v3634, %v3634
      %v3661 = vpack.c.bf16 %v3636, %v3636
      %v3662 = vpack.c.bf16 %v3639, %v3639
      %v3663 = vpack.c.bf16 %v3641, %v3641
      %v3664 = vpack.c.bf16 %v3644, %v3644
      %v3665 = vpack.c.bf16 %v3646, %v3646
      %v3666 = vld [vmem:[%s5] sm:$0xf]
      %v3667 = vld [vmem:[%s5 + $0x4] sm:$0xf]
      %s3668 = scalar_lea.vmem %s5, 8
      %v3669 = vld [vmem:[%s3668] sm:$0xf]
      %v3670 = vld [vmem:[%s3668 + $0x4] sm:$0xf]
      %v3673 = vunpack.c.l.b16 %v3650
      %v3674 = vunpack.c.l.b16 %v3651
      %v3675 = vpack.c.b16 %v3674, %v3673
      %v3678 = vunpack.c.l.b16 %v3669
      %v3679 = vunpack.c.l.b16 %v3670
      %v3680 = vpack.c.b16 %v3679, %v3678
      %vm3682 = vcmask 130048
      %v3684 = vsel %vm3682, %v3675, 0
      %3686 = vmatpush.bf16.msra.mxu0 0
      %3687 = vmatpush.bf16.msra.mxu0 0
      %3688 = vmatpush.bf16.msra.mxu0 0
      %3689 = vmatpush.bf16.msra.mxu0 0
      %3690 = vmatpush.bf16.msra.mxu0 0
      %3691 = vmatpush.bf16.msra.mxu0 0
      %3692 = vmatpush.bf16.msra.mxu0 0
      %3693 = vmatpush.bf16.msra.mxu0 %v3680
      %3694 = vmatmul.bf16.gmra.mxu0 %v3684
      %v3695 = vpop.f32.mrf.mxu0
      %v3696 = vadd.f32 0.0, %v3695
      %v3697 = vpop.f32.mrf.mxu0
      %v3698 = vadd.f32 0.0, %v3697
      %3699 = vdwg.mxu0
      %v3702 = vunpack.c.l.b16 %v3648
      %v3703 = vunpack.c.l.b16 %v3649
      %v3704 = vpack.c.b16 %v3703, %v3702
      %v3707 = vunpack.c.l.b16 %v3666
      %v3708 = vunpack.c.l.b16 %v3667
      %v3709 = vpack.c.b16 %v3708, %v3707
      %v3712 = vsel %vm3682, %v3704, 0
      %3714 = vmatpush.bf16.msra.mxu0 0
      %3715 = vmatpush.bf16.msra.mxu0 0
      %3716 = vmatpush.bf16.msra.mxu0 0
      %3717 = vmatpush.bf16.msra.mxu0 0
      %3718 = vmatpush.bf16.msra.mxu0 0
      %3719 = vmatpush.bf16.msra.mxu0 0
      %3720 = vmatpush.bf16.msra.mxu0 0
      %3721 = vmatpush.bf16.msra.mxu0 %v3709
      %3722 = vmatmul.bf16.gmra.mxu0 %v3712
      %v3723 = vpop.f32.mrf.mxu0
      %v3724 = vadd.f32 %v3696, %v3723
      %v3725 = vpop.f32.mrf.mxu0
      %v3726 = vadd.f32 %v3698, %v3725
      %3727 = vdwg.mxu0
      %s3728 = scalar_lea.vmem %s5, 16
      %v3729 = vld [vmem:[%s3728] sm:$0xf]
      %v3730 = vld [vmem:[%s3728 + $0x4] sm:$0xf]
      %v3733 = vunpack.c.l.b16 %v3652
      %v3734 = vunpack.c.l.b16 %v3653
      %v3735 = vpack.c.b16 %v3734, %v3733
      %v3738 = vunpack.c.l.b16 %v3729
      %v3739 = vunpack.c.l.b16 %v3730
      %v3740 = vpack.c.b16 %v3739, %v3738
      %v3743 = vsel %vm3682, %v3735, 0
      %3745 = vmatpush.bf16.msra.mxu0 0
      %3746 = vmatpush.bf16.msra.mxu0 0
      %3747 = vmatpush.bf16.msra.mxu0 0
      %3748 = vmatpush.bf16.msra.mxu0 0
      %3749 = vmatpush.bf16.msra.mxu0 0
      %3750 = vmatpush.bf16.msra.mxu0 0
      %3751 = vmatpush.bf16.msra.mxu0 0
      %3752 = vmatpush.bf16.msra.mxu0 %v3740
      %3753 = vmatmul.bf16.gmra.mxu0 %v3743
      %v3754 = vpop.f32.mrf.mxu0
      %v3755 = vadd.f32 0.0, %v3754
      %v3756 = vpop.f32.mrf.mxu0
      %v3757 = vadd.f32 0.0, %v3756
      %3758 = vdwg.mxu0
      %v3759 = vadd.f32 %v3724, %v3755
      %v3760 = vadd.f32 %v3726, %v3757
      %s3761 = scalar_lea.vmem %s5, 24
      %v3762 = vld [vmem:[%s3761] sm:$0xf]
      %v3763 = vld [vmem:[%s3761 + $0x4] sm:$0xf]
      %v3766 = vunpack.c.l.b16 %v3654
      %v3767 = vunpack.c.l.b16 %v3655
      %v3768 = vpack.c.b16 %v3767, %v3766
      %v3771 = vunpack.c.l.b16 %v3762
      %v3772 = vunpack.c.l.b16 %v3763
      %v3773 = vpack.c.b16 %v3772, %v3771
      %v3776 = vsel %vm3682, %v3768, 0
      %3778 = vmatpush.bf16.msra.mxu0 0
      %3779 = vmatpush.bf16.msra.mxu0 0
      %3780 = vmatpush.bf16.msra.mxu0 0
      %3781 = vmatpush.bf16.msra.mxu0 0
      %3782 = vmatpush.bf16.msra.mxu0 0
      %3783 = vmatpush.bf16.msra.mxu0 0
      %3784 = vmatpush.bf16.msra.mxu0 0
      %3785 = vmatpush.bf16.msra.mxu0 %v3773
      %3786 = vmatmul.bf16.gmra.mxu0 %v3776
      %v3787 = vpop.f32.mrf.mxu0
      %v3788 = vadd.f32 0.0, %v3787
      %v3789 = vpop.f32.mrf.mxu0
      %v3790 = vadd.f32 0.0, %v3789
      %3791 = vdwg.mxu0
      %v3792 = vadd.f32 %v3759, %v3788
      %v3793 = vadd.f32 %v3760, %v3790
      %s3794 = scalar_lea.vmem %s5, 32
      %v3795 = vld [vmem:[%s3794] sm:$0xf]
      %v3796 = vld [vmem:[%s3794 + $0x4] sm:$0xf]
      %v3799 = vunpack.c.l.b16 %v3656
      %v3800 = vunpack.c.l.b16 %v3657
      %v3801 = vpack.c.b16 %v3800, %v3799
      %v3804 = vunpack.c.l.b16 %v3795
      %v3805 = vunpack.c.l.b16 %v3796
      %v3806 = vpack.c.b16 %v3805, %v3804
      %v3809 = vsel %vm3682, %v3801, 0
      %3811 = vmatpush.bf16.msra.mxu0 0
      %3812 = vmatpush.bf16.msra.mxu0 0
      %3813 = vmatpush.bf16.msra.mxu0 0
      %3814 = vmatpush.bf16.msra.mxu0 0
      %3815 = vmatpush.bf16.msra.mxu0 0
      %3816 = vmatpush.bf16.msra.mxu0 0
      %3817 = vmatpush.bf16.msra.mxu0 0
      %3818 = vmatpush.bf16.msra.mxu0 %v3806
      %3819 = vmatmul.bf16.gmra.mxu0 %v3809
      %v3820 = vpop.f32.mrf.mxu0
      %v3821 = vadd.f32 0.0, %v3820
      %v3822 = vpop.f32.mrf.mxu0
      %v3823 = vadd.f32 0.0, %v3822
      %3824 = vdwg.mxu0
      %v3825 = vadd.f32 %v3792, %v3821
      %v3826 = vadd.f32 %v3793, %v3823
      %s3827 = scalar_lea.vmem %s5, 40
      %v3828 = vld [vmem:[%s3827] sm:$0xf]
      %v3829 = vld [vmem:[%s3827 + $0x4] sm:$0xf]
      %v3832 = vunpack.c.l.b16 %v3658
      %v3833 = vunpack.c.l.b16 %v3659
      %v3834 = vpack.c.b16 %v3833, %v3832
      %v3837 = vunpack.c.l.b16 %v3828
      %v3838 = vunpack.c.l.b16 %v3829
      %v3839 = vpack.c.b16 %v3838, %v3837
      %v3842 = vsel %vm3682, %v3834, 0
      %3844 = vmatpush.bf16.msra.mxu0 0
      %3845 = vmatpush.bf16.msra.mxu0 0
      %3846 = vmatpush.bf16.msra.mxu0 0
      %3847 = vmatpush.bf16.msra.mxu0 0
      %3848 = vmatpush.bf16.msra.mxu0 0
      %3849 = vmatpush.bf16.msra.mxu0 0
      %3850 = vmatpush.bf16.msra.mxu0 0
      %3851 = vmatpush.bf16.msra.mxu0 %v3839
      %3852 = vmatmul.bf16.gmra.mxu0 %v3842
      %v3853 = vpop.f32.mrf.mxu0
      %v3854 = vadd.f32 0.0, %v3853
      %v3855 = vpop.f32.mrf.mxu0
      %v3856 = vadd.f32 0.0, %v3855
      %3857 = vdwg.mxu0
      %v3858 = vadd.f32 %v3825, %v3854
      %v3859 = vadd.f32 %v3826, %v3856
      %s3860 = scalar_lea.vmem %s5, 48
      %v3861 = vld [vmem:[%s3860] sm:$0xf]
      %v3862 = vld [vmem:[%s3860 + $0x4] sm:$0xf]
      %v3865 = vunpack.c.l.b16 %v3660
      %v3866 = vunpack.c.l.b16 %v3661
      %v3867 = vpack.c.b16 %v3866, %v3865
      %v3870 = vunpack.c.l.b16 %v3861
      %v3871 = vunpack.c.l.b16 %v3862
      %v3872 = vpack.c.b16 %v3871, %v3870
      %v3875 = vsel %vm3682, %v3867, 0
      %3877 = vmatpush.bf16.msra.mxu0 0
      %3878 = vmatpush.bf16.msra.mxu0 0
      %3879 = vmatpush.bf16.msra.mxu0 0
      %3880 = vmatpush.bf16.msra.mxu0 0
      %3881 = vmatpush.bf16.msra.mxu0 0
      %3882 = vmatpush.bf16.msra.mxu0 0
      %3883 = vmatpush.bf16.msra.mxu0 0
      %3884 = vmatpush.bf16.msra.mxu0 %v3872
      %3885 = vmatmul.bf16.gmra.mxu0 %v3875
      %v3886 = vpop.f32.mrf.mxu0
      %v3887 = vadd.f32 0.0, %v3886
      %v3888 = vpop.f32.mrf.mxu0
      %v3889 = vadd.f32 0.0, %v3888
      %3890 = vdwg.mxu0
      %v3891 = vadd.f32 %v3858, %v3887
      %v3892 = vadd.f32 %v3859, %v3889
      %s3893 = scalar_lea.vmem %s5, 56
      %v3894 = vld [vmem:[%s3893] sm:$0xf]
      %v3895 = vld [vmem:[%s3893 + $0x4] sm:$0xf]
      %v3898 = vunpack.c.l.b16 %v3662
      %v3899 = vunpack.c.l.b16 %v3663
      %v3900 = vpack.c.b16 %v3899, %v3898
      %v3903 = vunpack.c.l.b16 %v3894
      %v3904 = vunpack.c.l.b16 %v3895
      %v3905 = vpack.c.b16 %v3904, %v3903
      %v3908 = vsel %vm3682, %v3900, 0
      %3910 = vmatpush.bf16.msra.mxu0 0
      %3911 = vmatpush.bf16.msra.mxu0 0
      %3912 = vmatpush.bf16.msra.mxu0 0
      %3913 = vmatpush.bf16.msra.mxu0 0
      %3914 = vmatpush.bf16.msra.mxu0 0
      %3915 = vmatpush.bf16.msra.mxu0 0
      %3916 = vmatpush.bf16.msra.mxu0 0
      %3917 = vmatpush.bf16.msra.mxu0 %v3905
      %3918 = vmatmul.bf16.gmra.mxu0 %v3908
      %v3919 = vpop.f32.mrf.mxu0
      %v3920 = vadd.f32 0.0, %v3919
      %v3921 = vpop.f32.mrf.mxu0
      %v3922 = vadd.f32 0.0, %v3921
      %3923 = vdwg.mxu0
      %v3924 = vadd.f32 %v3891, %v3920
      %v3925 = vadd.f32 %v3892, %v3922
      %s3926 = scalar_lea.vmem %s5, 64
      %v3927 = vld [vmem:[%s3926] sm:$0xf]
      %v3928 = vld [vmem:[%s3926 + $0x4] sm:$0xf]
      %v3931 = vunpack.c.l.b16 %v3664
      %v3932 = vunpack.c.l.b16 %v3665
      %v3933 = vpack.c.b16 %v3932, %v3931
      %v3936 = vunpack.c.l.b16 %v3927
      %v3937 = vunpack.c.l.b16 %v3928
      %v3938 = vpack.c.b16 %v3937, %v3936
      %v3941 = vsel %vm3682, %v3933, 0
      %3943 = vmatpush.bf16.msra.mxu0 0
      %3944 = vmatpush.bf16.msra.mxu0 0
      %3945 = vmatpush.bf16.msra.mxu0 0
      %3946 = vmatpush.bf16.msra.mxu0 0
      %3947 = vmatpush.bf16.msra.mxu0 0
      %3948 = vmatpush.bf16.msra.mxu0 0
      %3949 = vmatpush.bf16.msra.mxu0 0
      %3950 = vmatpush.bf16.msra.mxu0 %v3938
      %3951 = vmatmul.bf16.gmra.mxu0 %v3941
      %v3952 = vpop.f32.mrf.mxu0
      %v3953 = vadd.f32 0.0, %v3952
      %v3954 = vpop.f32.mrf.mxu0
      %v3955 = vadd.f32 0.0, %v3954
      %3956 = vdwg.mxu0
      %v3957 = vadd.f32 %v3924, %v3953
      %v3958 = vadd.f32 %v3925, %v3955
      %v3960 = vperm.slane %v3520, 0
      %v3962 = vmul.f32 %v3957, %v3960
      %v3963 = vmul.f32 %v3958, %v3960
      %v3965 = vperm.slane %v3519, 0
      %v3967 = vadd.f32 %v3962, %v3965
      %v3968 = vadd.f32 %v3963, %v3965
      %vm3969 = vcmp.ge.f32.partialorder %v3967, 0.0
      %vm3970 = vcmp.ge.f32.partialorder %v3968, 0.0
      %v3971 = vmul.f32 %v3967, 0.2
      %v3972 = vmul.f32 %v3968, 0.2
      %v3973 = vsel %vm3969, %v3967, %v3971
      %v3974 = vsel %vm3970, %v3968, %v3972
      %v3975 = vpack.c.bf16 %v3974, %v3973
      %3976 = vmatpush.bf16.msra.mxu0 0
      %3977 = vmatpush.bf16.msra.mxu0 0
      %3978 = vmatpush.bf16.msra.mxu0 0
      %3979 = vmatpush.bf16.msra.mxu0 0
      %3980 = vmatpush.bf16.msra.mxu0 %v3500
      %3981 = vmatpush.bf16.msra.mxu0 %v3499
      %3982 = vmatpush.bf16.msra.mxu0 %v3498
      %3983 = vmatpush.bf16.msra.mxu0 %v3497
      %3984 = vmatmul.bf16.gmra.mxu0 %v3568
      %v3985 = vpop.f32.mrf.mxu0
      %v3986 = vadd.f32 0.0, %v3985
      %v3987 = vpop.f32.mrf.mxu0
      %v3988 = vadd.f32 0.0, %v3987
      %3989 = vmatmul.bf16.gmra.mxu0 %v3571
      %v3990 = vpop.f32.mrf.mxu0
      %v3991 = vadd.f32 0.0, %v3990
      %v3992 = vpop.f32.mrf.mxu0
      %v3993 = vadd.f32 0.0, %v3992
      %3994 = vmatmul.bf16.gmra.mxu0 %v3574
      %v3995 = vpop.f32.mrf.mxu0
      %v3996 = vadd.f32 0.0, %v3995
      %v3997 = vpop.f32.mrf.mxu0
      %v3998 = vadd.f32 0.0, %v3997
      %3999 = vmatmul.bf16.gmra.mxu0 %v3577
      %v4000 = vpop.f32.mrf.mxu0
      %v4001 = vadd.f32 0.0, %v4000
      %v4002 = vpop.f32.mrf.mxu0
      %v4003 = vadd.f32 0.0, %v4002
      %4004 = vmatmul.bf16.gmra.mxu0 %v3580
      %v4005 = vpop.f32.mrf.mxu0
      %v4006 = vadd.f32 0.0, %v4005
      %v4007 = vpop.f32.mrf.mxu0
      %v4008 = vadd.f32 0.0, %v4007
      %4009 = vmatmul.bf16.gmra.mxu0 %v3583
      %v4010 = vpop.f32.mrf.mxu0
      %v4011 = vadd.f32 0.0, %v4010
      %v4012 = vpop.f32.mrf.mxu0
      %v4013 = vadd.f32 0.0, %v4012
      %4014 = vmatmul.bf16.gmra.mxu0 %v3586
      %v4015 = vpop.f32.mrf.mxu0
      %v4016 = vadd.f32 0.0, %v4015
      %v4017 = vpop.f32.mrf.mxu0
      %v4018 = vadd.f32 0.0, %v4017
      %4019 = vmatmul.bf16.gmra.mxu0 %v3589
      %v4020 = vpop.f32.mrf.mxu0
      %v4021 = vadd.f32 0.0, %v4020
      %v4022 = vpop.f32.mrf.mxu0
      %v4023 = vadd.f32 0.0, %v4022
      %4024 = vmatmul.bf16.gmra.mxu0 %v3592
      %v4025 = vpop.f32.mrf.mxu0
      %v4026 = vadd.f32 0.0, %v4025
      %v4027 = vpop.f32.mrf.mxu0
      %v4028 = vadd.f32 0.0, %v4027
      %4029 = vdwg.mxu0
      %v4030 = vpack.c.bf16 %v3986, %v3986
      %v4031 = vpack.c.bf16 %v3988, %v3988
      %v4032 = vpack.c.bf16 %v3991, %v3991
      %v4033 = vpack.c.bf16 %v3993, %v3993
      %v4034 = vpack.c.bf16 %v3996, %v3996
      %v4035 = vpack.c.bf16 %v3998, %v3998
      %v4036 = vpack.c.bf16 %v4001, %v4001
      %v4037 = vpack.c.bf16 %v4003, %v4003
      %v4038 = vpack.c.bf16 %v4006, %v4006
      %v4039 = vpack.c.bf16 %v4008, %v4008
      %v4040 = vpack.c.bf16 %v4011, %v4011
      %v4041 = vpack.c.bf16 %v4013, %v4013
      %v4042 = vpack.c.bf16 %v4016, %v4016
      %v4043 = vpack.c.bf16 %v4018, %v4018
      %v4044 = vpack.c.bf16 %v4021, %v4021
      %v4045 = vpack.c.bf16 %v4023, %v4023
      %v4046 = vpack.c.bf16 %v4026, %v4026
      %v4047 = vpack.c.bf16 %v4028, %v4028
      %v4050 = vunpack.c.l.b16 %v4032
      %v4051 = vunpack.c.l.b16 %v4033
      %v4052 = vpack.c.b16 %v4051, %v4050
      %v4054 = vsel %vm3682, %v4052, 0
      %4056 = vmatpush.bf16.msra.mxu0 0
      %4057 = vmatpush.bf16.msra.mxu0 0
      %4058 = vmatpush.bf16.msra.mxu0 0
      %4059 = vmatpush.bf16.msra.mxu0 0
      %4060 = vmatpush.bf16.msra.mxu0 0
      %4061 = vmatpush.bf16.msra.mxu0 0
      %4062 = vmatpush.bf16.msra.mxu0 0
      %4063 = vmatpush.bf16.msra.mxu0 %v3680
      %4064 = vmatmul.bf16.gmra.mxu0 %v4054
      %v4065 = vpop.f32.mrf.mxu0
      %v4066 = vadd.f32 0.0, %v4065
      %v4067 = vpop.f32.mrf.mxu0
      %v4068 = vadd.f32 0.0, %v4067
      %4069 = vdwg.mxu0
      %v4072 = vunpack.c.l.b16 %v4030
      %v4073 = vunpack.c.l.b16 %v4031
      %v4074 = vpack.c.b16 %v4073, %v4072
      %v4076 = vsel %vm3682, %v4074, 0
      %4078 = vmatpush.bf16.msra.mxu0 0
      %4079 = vmatpush.bf16.msra.mxu0 0
      %4080 = vmatpush.bf16.msra.mxu0 0
      %4081 = vmatpush.bf16.msra.mxu0 0
      %4082 = vmatpush.bf16.msra.mxu0 0
      %4083 = vmatpush.bf16.msra.mxu0 0
      %4084 = vmatpush.bf16.msra.mxu0 0
      %4085 = vmatpush.bf16.msra.mxu0 %v3709
      %4086 = vmatmul.bf16.gmra.mxu0 %v4076
      %v4087 = vpop.f32.mrf.mxu0
      %v4088 = vadd.f32 %v4066, %v4087
      %v4089 = vpop.f32.mrf.mxu0
      %v4090 = vadd.f32 %v4068, %v4089
      %4091 = vdwg.mxu0
      %v4094 = vunpack.c.l.b16 %v4034
      %v4095 = vunpack.c.l.b16 %v4035
      %v4096 = vpack.c.b16 %v4095, %v4094
      %v4098 = vsel %vm3682, %v4096, 0
      %4100 = vmatpush.bf16.msra.mxu0 0
      %4101 = vmatpush.bf16.msra.mxu0 0
      %4102 = vmatpush.bf16.msra.mxu0 0
      %4103 = vmatpush.bf16.msra.mxu0 0
      %4104 = vmatpush.bf16.msra.mxu0 0
      %4105 = vmatpush.bf16.msra.mxu0 0
      %4106 = vmatpush.bf16.msra.mxu0 0
      %4107 = vmatpush.bf16.msra.mxu0 %v3740
      %4108 = vmatmul.bf16.gmra.mxu0 %v4098
      %v4109 = vpop.f32.mrf.mxu0
      %v4110 = vadd.f32 0.0, %v4109
      %v4111 = vpop.f32.mrf.mxu0
      %v4112 = vadd.f32 0.0, %v4111
      %4113 = vdwg.mxu0
      %v4114 = vadd.f32 %v4088, %v4110
      %v4115 = vadd.f32 %v4090, %v4112
      %v4118 = vunpack.c.l.b16 %v4036
      %v4119 = vunpack.c.l.b16 %v4037
      %v4120 = vpack.c.b16 %v4119, %v4118
      %v4122 = vsel %vm3682, %v4120, 0
      %4124 = vmatpush.bf16.msra.mxu0 0
      %4125 = vmatpush.bf16.msra.mxu0 0
      %4126 = vmatpush.bf16.msra.mxu0 0
      %4127 = vmatpush.bf16.msra.mxu0 0
      %4128 = vmatpush.bf16.msra.mxu0 0
      %4129 = vmatpush.bf16.msra.mxu0 0
      %4130 = vmatpush.bf16.msra.mxu0 0
      %4131 = vmatpush.bf16.msra.mxu0 %v3773
      %4132 = vmatmul.bf16.gmra.mxu0 %v4122
      %v4133 = vpop.f32.mrf.mxu0
      %v4134 = vadd.f32 0.0, %v4133
      %v4135 = vpop.f32.mrf.mxu0
      %v4136 = vadd.f32 0.0, %v4135
      %4137 = vdwg.mxu0
      %v4138 = vadd.f32 %v4114, %v4134
      %v4139 = vadd.f32 %v4115, %v4136
      %v4142 = vunpack.c.l.b16 %v4038
      %v4143 = vunpack.c.l.b16 %v4039
      %v4144 = vpack.c.b16 %v4143, %v4142
      %v4146 = vsel %vm3682, %v4144, 0
      %4148 = vmatpush.bf16.msra.mxu0 0
      %4149 = vmatpush.bf16.msra.mxu0 0
      %4150 = vmatpush.bf16.msra.mxu0 0
      %4151 = vmatpush.bf16.msra.mxu0 0
      %4152 = vmatpush.bf16.msra.mxu0 0
      %4153 = vmatpush.bf16.msra.mxu0 0
      %4154 = vmatpush.bf16.msra.mxu0 0
      %4155 = vmatpush.bf16.msra.mxu0 %v3806
      %4156 = vmatmul.bf16.gmra.mxu0 %v4146
      %v4157 = vpop.f32.mrf.mxu0
      %v4158 = vadd.f32 0.0, %v4157
      %v4159 = vpop.f32.mrf.mxu0
      %v4160 = vadd.f32 0.0, %v4159
      %4161 = vdwg.mxu0
      %v4162 = vadd.f32 %v4138, %v4158
      %v4163 = vadd.f32 %v4139, %v4160
      %v4166 = vunpack.c.l.b16 %v4040
      %v4167 = vunpack.c.l.b16 %v4041
      %v4168 = vpack.c.b16 %v4167, %v4166
      %v4170 = vsel %vm3682, %v4168, 0
      %4172 = vmatpush.bf16.msra.mxu0 0
      %4173 = vmatpush.bf16.msra.mxu0 0
      %4174 = vmatpush.bf16.msra.mxu0 0
      %4175 = vmatpush.bf16.msra.mxu0 0
      %4176 = vmatpush.bf16.msra.mxu0 0
      %4177 = vmatpush.bf16.msra.mxu0 0
      %4178 = vmatpush.bf16.msra.mxu0 0
      %4179 = vmatpush.bf16.msra.mxu0 %v3839
      %4180 = vmatmul.bf16.gmra.mxu0 %v4170
      %v4181 = vpop.f32.mrf.mxu0
      %v4182 = vadd.f32 0.0, %v4181
      %v4183 = vpop.f32.mrf.mxu0
      %v4184 = vadd.f32 0.0, %v4183
      %4185 = vdwg.mxu0
      %v4186 = vadd.f32 %v4162, %v4182
      %v4187 = vadd.f32 %v4163, %v4184
      %v4190 = vunpack.c.l.b16 %v4042
      %v4191 = vunpack.c.l.b16 %v4043
      %v4192 = vpack.c.b16 %v4191, %v4190
      %v4194 = vsel %vm3682, %v4192, 0
      %4196 = vmatpush.bf16.msra.mxu0 0
      %4197 = vmatpush.bf16.msra.mxu0 0
      %4198 = vmatpush.bf16.msra.mxu0 0
      %4199 = vmatpush.bf16.msra.mxu0 0
      %4200 = vmatpush.bf16.msra.mxu0 0
      %4201 = vmatpush.bf16.msra.mxu0 0
      %4202 = vmatpush.bf16.msra.mxu0 0
      %4203 = vmatpush.bf16.msra.mxu0 %v3872
      %4204 = vmatmul.bf16.gmra.mxu0 %v4194
      %v4205 = vpop.f32.mrf.mxu0
      %v4206 = vadd.f32 0.0, %v4205
      %v4207 = vpop.f32.mrf.mxu0
      %v4208 = vadd.f32 0.0, %v4207
      %4209 = vdwg.mxu0
      %v4210 = vadd.f32 %v4186, %v4206
      %v4211 = vadd.f32 %v4187, %v4208
      %v4214 = vunpack.c.l.b16 %v4044
      %v4215 = vunpack.c.l.b16 %v4045
      %v4216 = vpack.c.b16 %v4215, %v4214
      %v4218 = vsel %vm3682, %v4216, 0
      %4220 = vmatpush.bf16.msra.mxu0 0
      %4221 = vmatpush.bf16.msra.mxu0 0
      %4222 = vmatpush.bf16.msra.mxu0 0
      %4223 = vmatpush.bf16.msra.mxu0 0
      %4224 = vmatpush.bf16.msra.mxu0 0
      %4225 = vmatpush.bf16.msra.mxu0 0
      %4226 = vmatpush.bf16.msra.mxu0 0
      %4227 = vmatpush.bf16.msra.mxu0 %v3905
      %4228 = vmatmul.bf16.gmra.mxu0 %v4218
      %v4229 = vpop.f32.mrf.mxu0
      %v4230 = vadd.f32 0.0, %v4229
      %v4231 = vpop.f32.mrf.mxu0
      %v4232 = vadd.f32 0.0, %v4231
      %4233 = vdwg.mxu0
      %v4234 = vadd.f32 %v4210, %v4230
      %v4235 = vadd.f32 %v4211, %v4232
      %v4238 = vunpack.c.l.b16 %v4046
      %v4239 = vunpack.c.l.b16 %v4047
      %v4240 = vpack.c.b16 %v4239, %v4238
      %v4242 = vsel %vm3682, %v4240, 0
      %4244 = vmatpush.bf16.msra.mxu0 0
      %4245 = vmatpush.bf16.msra.mxu0 0
      %4246 = vmatpush.bf16.msra.mxu0 0
      %4247 = vmatpush.bf16.msra.mxu0 0
      %4248 = vmatpush.bf16.msra.mxu0 0
      %4249 = vmatpush.bf16.msra.mxu0 0
      %4250 = vmatpush.bf16.msra.mxu0 0
      %4251 = vmatpush.bf16.msra.mxu0 %v3938
      %4252 = vmatmul.bf16.gmra.mxu0 %v4242
      %v4253 = vpop.f32.mrf.mxu0
      %v4254 = vadd.f32 0.0, %v4253
      %v4255 = vpop.f32.mrf.mxu0
      %v4256 = vadd.f32 0.0, %v4255
      %4257 = vdwg.mxu0
      %v4258 = vadd.f32 %v4234, %v4254
      %v4259 = vadd.f32 %v4235, %v4256
      %v4260 = vmul.f32 %v4258, %v3960
      %v4261 = vmul.f32 %v4259, %v3960
      %v4262 = vadd.f32 %v4260, %v3965
      %v4263 = vadd.f32 %v4261, %v3965
      %vm4264 = vcmp.ge.f32.partialorder %v4262, 0.0
      %vm4265 = vcmp.ge.f32.partialorder %v4263, 0.0
      %v4266 = vmul.f32 %v4262, 0.2
      %v4267 = vmul.f32 %v4263, 0.2
      %v4268 = vsel %vm4264, %v4262, %v4266
      %v4269 = vsel %vm4265, %v4263, %v4267
      %v4270 = vpack.c.bf16 %v4269, %v4268
      %v4271 = vld [vmem:[%s8] sm:$0xf]
      %v4272 = vld [vmem:[%s8 + $0x4] sm:$0xf]
      %v4273 = vld [vmem:[%s8 + $0x8] sm:$0xf]
      %v4274 = vld [vmem:[%s8 + $0xc] sm:$0xf]
      %v4275 = vld [vmem:[%s8 + $0x10] sm:$0x3]
      %v4276 = vld [vmem:[%s11] sm:$0x1]
      %v4277 = vld [vmem:[%s10] sm:$0x1]
      %v4283 = vunpack.c.l.b16 %v4271
      %v4284 = vunpack.c.l.b16 %v4272
      %v4285 = vunpack.c.l.b16 %v4273
      %v4286 = vunpack.c.l.b16 %v4274
      %v4287 = vunpack.c.l.b16 %v4275
      %v4288 = vpack.c.b16 %v4284, %v4283
      %v4289 = vpack.c.b16 %v4286, %v4285
      %v4290 = vpack.c.b16 %v4287, %v4287
      %v4292 = vsel %vm3682, %v4288, 0
      %v4295 = vsel %vm3682, %v4289, 0
      %v4298 = vsel %vm3682, %v4290, 0
      %4300 = vmatpush.bf16.msra.mxu0 0
      %4301 = vmatpush.bf16.msra.mxu0 0
      %4302 = vmatpush.bf16.msra.mxu0 0
      %4303 = vmatpush.bf16.msra.mxu0 0
      %4304 = vmatpush.bf16.msra.mxu0 0
      %4305 = vmatpush.bf16.msra.mxu0 0
      %4306 = vmatpush.bf16.msra.mxu0 0
      %4307 = vmatpush.bf16.msra.mxu0 %v3975
      %4308 = vmatmul.bf16.gmra.mxu0 %v4292
      %v4309 = vpop.f32.mrf.mxu0
      %v4310 = vadd.f32 0.0, %v4309
      %v4311 = vpop.f32.mrf.mxu0
      %v4312 = vadd.f32 0.0, %v4311
      %4313 = vmatmul.bf16.gmra.mxu0 %v4295
      %v4314 = vpop.f32.mrf.mxu0
      %v4315 = vadd.f32 0.0, %v4314
      %v4316 = vpop.f32.mrf.mxu0
      %v4317 = vadd.f32 0.0, %v4316
      %4318 = vmatmul.bf16.gmra.mxu0 %v4298
      %v4319 = vpop.f32.mrf.mxu0
      %v4320 = vadd.f32 0.0, %v4319
      %v4321 = vpop.f32.mrf.mxu0
      %4322 = vdwg.mxu0
      %v4323 = vpack.c.bf16 %v4310, %v4310
      %v4324 = vpack.c.bf16 %v4312, %v4312
      %v4325 = vpack.c.bf16 %v4315, %v4315
      %v4326 = vpack.c.bf16 %v4317, %v4317
      %v4327 = vpack.c.bf16 %v4320, %v4320
      %v4328 = vld [vmem:[%s9] sm:$0xf]
      %v4329 = vld [vmem:[%s9 + $0x4] sm:$0xf]
      %v4330 = vld [vmem:[%s9 + $0x8] sm:$0xf]
      %v4331 = vld [vmem:[%s9 + $0xc] sm:$0xf]
      %s4332 = scalar_lea.vmem %s9, 16
      %v4333 = vld [vmem:[%s4332] sm:$0xf]
      %v4334 = vld [vmem:[%s4332 + $0x4] sm:$0xf]
      %v4335 = vld [vmem:[%s4332 + $0x8] sm:$0xf]
      %v4336 = vld [vmem:[%s4332 + $0xc] sm:$0xf]
      %v4338 = vunpack.c.l.b16 %v4323
      %v4339 = vpack.c.b16 %v4338, %v4338
      %v4340 = vrot.slane %v4339, 2
      %v4345 = vunpack.c.l.b16 %v4333
      %v4346 = vunpack.c.l.b16 %v4334
      %v4347 = vunpack.c.l.b16 %v4335
      %v4348 = vunpack.c.l.b16 %v4336
      %v4349 = vpack.c.b16 %v4346, %v4345
      %v4350 = vpack.c.b16 %v4348, %v4347
      %vm4353 = vcmask 261120
      %v4355 = vsel %vm4353, %v4340, 0
      %4357 = vmatpush.bf16.msra.mxu0 0
      %4358 = vmatpush.bf16.msra.mxu0 0
      %4359 = vmatpush.bf16.msra.mxu0 0
      %4360 = vmatpush.bf16.msra.mxu0 0
      %4361 = vmatpush.bf16.msra.mxu0 0
      %4362 = vmatpush.bf16.msra.mxu0 0
      %4363 = vmatpush.bf16.msra.mxu0 %v4350
      %4364 = vmatpush.bf16.msra.mxu0 %v4349
      %4365 = vmatmul.bf16.gmra.mxu0 %v4355
      %v4366 = vpop.f32.mrf.mxu0
      %v4367 = vadd.f32 0.0, %v4366
      %v4368 = vpop.f32.mrf.mxu0
      %4369 = vdwg.mxu0
      %v4374 = vunpack.c.l.b16 %v4328
      %v4375 = vunpack.c.l.b16 %v4329
      %v4376 = vunpack.c.l.b16 %v4330
      %v4377 = vunpack.c.l.b16 %v4331
      %v4378 = vpack.c.b16 %v4375, %v4374
      %v4379 = vpack.c.b16 %v4377, %v4376
      %v4383 = vsel %vm4353, %v4323, 0
      %4385 = vmatpush.bf16.msra.mxu0 0
      %4386 = vmatpush.bf16.msra.mxu0 0
      %4387 = vmatpush.bf16.msra.mxu0 0
      %4388 = vmatpush.bf16.msra.mxu0 0
      %4389 = vmatpush.bf16.msra.mxu0 0
      %4390 = vmatpush.bf16.msra.mxu0 0
      %4391 = vmatpush.bf16.msra.mxu0 %v4379
      %4392 = vmatpush.bf16.msra.mxu0 %v4378
      %4393 = vmatmul.bf16.gmra.mxu0 %v4383
      %v4394 = vpop.f32.mrf.mxu0
      %v4395 = vadd.f32 %v4367, %v4394
      %v4396 = vpop.f32.mrf.mxu0
      %4397 = vdwg.mxu0
      %s4398 = scalar_lea.vmem %s9, 32
      %v4399 = vld [vmem:[%s4398] sm:$0xf]
      %v4400 = vld [vmem:[%s4398 + $0x4] sm:$0xf]
      %v4401 = vld [vmem:[%s4398 + $0x8] sm:$0xf]
      %v4402 = vld [vmem:[%s4398 + $0xc] sm:$0xf]
      %v4407 = vunpack.c.l.b16 %v4399
      %v4408 = vunpack.c.l.b16 %v4400
      %v4409 = vunpack.c.l.b16 %v4401
      %v4410 = vunpack.c.l.b16 %v4402
      %v4411 = vpack.c.b16 %v4408, %v4407
      %v4412 = vpack.c.b16 %v4410, %v4409
      %v4416 = vsel %vm4353, %v4324, 0
      %4418 = vmatpush.bf16.msra.mxu0 0
      %4419 = vmatpush.bf16.msra.mxu0 0
      %4420 = vmatpush.bf16.msra.mxu0 0
      %4421 = vmatpush.bf16.msra.mxu0 0
      %4422 = vmatpush.bf16.msra.mxu0 0
      %4423 = vmatpush.bf16.msra.mxu0 0
      %4424 = vmatpush.bf16.msra.mxu0 %v4412
      %4425 = vmatpush.bf16.msra.mxu0 %v4411
      %4426 = vmatmul.bf16.gmra.mxu0 %v4416
      %v4427 = vpop.f32.mrf.mxu0
      %v4428 = vadd.f32 0.0, %v4427
      %v4429 = vpop.f32.mrf.mxu0
      %4430 = vdwg.mxu0
      %v4431 = vadd.f32 %v4395, %v4428
      %s4432 = scalar_lea.vmem %s9, 48
      %v4433 = vld [vmem:[%s4432] sm:$0xf]
      %v4434 = vld [vmem:[%s4432 + $0x4] sm:$0xf]
      %v4435 = vld [vmem:[%s4432 + $0x8] sm:$0xf]
      %v4436 = vld [vmem:[%s4432 + $0xc] sm:$0xf]
      %v4438 = vunpack.c.l.b16 %v4324
      %v4439 = vpack.c.b16 %v4438, %v4438
      %v4440 = vrot.slane %v4439, 2
      %v4445 = vunpack.c.l.b16 %v4433
      %v4446 = vunpack.c.l.b16 %v4434
      %v4447 = vunpack.c.l.b16 %v4435
      %v4448 = vunpack.c.l.b16 %v4436
      %v4449 = vpack.c.b16 %v4446, %v4445
      %v4450 = vpack.c.b16 %v4448, %v4447
      %v4454 = vsel %vm4353, %v4440, 0
      %4456 = vmatpush.bf16.msra.mxu0 0
      %4457 = vmatpush.bf16.msra.mxu0 0
      %4458 = vmatpush.bf16.msra.mxu0 0
      %4459 = vmatpush.bf16.msra.mxu0 0
      %4460 = vmatpush.bf16.msra.mxu0 0
      %4461 = vmatpush.bf16.msra.mxu0 0
      %4462 = vmatpush.bf16.msra.mxu0 %v4450
      %4463 = vmatpush.bf16.msra.mxu0 %v4449
      %4464 = vmatmul.bf16.gmra.mxu0 %v4454
      %v4465 = vpop.f32.mrf.mxu0
      %v4466 = vadd.f32 0.0, %v4465
      %v4467 = vpop.f32.mrf.mxu0
      %4468 = vdwg.mxu0
      %v4469 = vadd.f32 %v4431, %v4466
      %s4470 = scalar_lea.vmem %s9, 64
      %v4471 = vld [vmem:[%s4470] sm:$0xf]
      %v4472 = vld [vmem:[%s4470 + $0x4] sm:$0xf]
      %v4473 = vld [vmem:[%s4470 + $0x8] sm:$0xf]
      %v4474 = vld [vmem:[%s4470 + $0xc] sm:$0xf]
      %v4479 = vunpack.c.l.b16 %v4471
      %v4480 = vunpack.c.l.b16 %v4472
      %v4481 = vunpack.c.l.b16 %v4473
      %v4482 = vunpack.c.l.b16 %v4474
      %v4483 = vpack.c.b16 %v4480, %v4479
      %v4484 = vpack.c.b16 %v4482, %v4481
      %v4488 = vsel %vm4353, %v4325, 0
      %4490 = vmatpush.bf16.msra.mxu0 0
      %4491 = vmatpush.bf16.msra.mxu0 0
      %4492 = vmatpush.bf16.msra.mxu0 0
      %4493 = vmatpush.bf16.msra.mxu0 0
      %4494 = vmatpush.bf16.msra.mxu0 0
      %4495 = vmatpush.bf16.msra.mxu0 0
      %4496 = vmatpush.bf16.msra.mxu0 %v4484
      %4497 = vmatpush.bf16.msra.mxu0 %v4483
      %4498 = vmatmul.bf16.gmra.mxu0 %v4488
      %v4499 = vpop.f32.mrf.mxu0
      %v4500 = vadd.f32 0.0, %v4499
      %v4501 = vpop.f32.mrf.mxu0
      %4502 = vdwg.mxu0
      %v4503 = vadd.f32 %v4469, %v4500
      %s4504 = scalar_lea.vmem %s9, 80
      %v4505 = vld [vmem:[%s4504] sm:$0xf]
      %v4506 = vld [vmem:[%s4504 + $0x4] sm:$0xf]
      %v4507 = vld [vmem:[%s4504 + $0x8] sm:$0xf]
      %v4508 = vld [vmem:[%s4504 + $0xc] sm:$0xf]
      %v4510 = vunpack.c.l.b16 %v4325
      %v4511 = vpack.c.b16 %v4510, %v4510
      %v4512 = vrot.slane %v4511, 2
      %v4517 = vunpack.c.l.b16 %v4505
      %v4518 = vunpack.c.l.b16 %v4506
      %v4519 = vunpack.c.l.b16 %v4507
      %v4520 = vunpack.c.l.b16 %v4508
      %v4521 = vpack.c.b16 %v4518, %v4517
      %v4522 = vpack.c.b16 %v4520, %v4519
      %v4526 = vsel %vm4353, %v4512, 0
      %4528 = vmatpush.bf16.msra.mxu0 0
      %4529 = vmatpush.bf16.msra.mxu0 0
      %4530 = vmatpush.bf16.msra.mxu0 0
      %4531 = vmatpush.bf16.msra.mxu0 0
      %4532 = vmatpush.bf16.msra.mxu0 0
      %4533 = vmatpush.bf16.msra.mxu0 0
      %4534 = vmatpush.bf16.msra.mxu0 %v4522
      %4535 = vmatpush.bf16.msra.mxu0 %v4521
      %4536 = vmatmul.bf16.gmra.mxu0 %v4526
      %v4537 = vpop.f32.mrf.mxu0
      %v4538 = vadd.f32 0.0, %v4537
      %v4539 = vpop.f32.mrf.mxu0
      %4540 = vdwg.mxu0
      %v4541 = vadd.f32 %v4503, %v4538
      %s4542 = scalar_lea.vmem %s9, 96
      %v4543 = vld [vmem:[%s4542] sm:$0xf]
      %v4544 = vld [vmem:[%s4542 + $0x4] sm:$0xf]
      %v4545 = vld [vmem:[%s4542 + $0x8] sm:$0xf]
      %v4546 = vld [vmem:[%s4542 + $0xc] sm:$0xf]
      %v4551 = vunpack.c.l.b16 %v4543
      %v4552 = vunpack.c.l.b16 %v4544
      %v4553 = vunpack.c.l.b16 %v4545
      %v4554 = vunpack.c.l.b16 %v4546
      %v4555 = vpack.c.b16 %v4552, %v4551
      %v4556 = vpack.c.b16 %v4554, %v4553
      %v4560 = vsel %vm4353, %v4326, 0
      %4562 = vmatpush.bf16.msra.mxu0 0
      %4563 = vmatpush.bf16.msra.mxu0 0
      %4564 = vmatpush.bf16.msra.mxu0 0
      %4565 = vmatpush.bf16.msra.mxu0 0
      %4566 = vmatpush.bf16.msra.mxu0 0
      %4567 = vmatpush.bf16.msra.mxu0 0
      %4568 = vmatpush.bf16.msra.mxu0 %v4556
      %4569 = vmatpush.bf16.msra.mxu0 %v4555
      %4570 = vmatmul.bf16.gmra.mxu0 %v4560
      %v4571 = vpop.f32.mrf.mxu0
      %v4572 = vadd.f32 0.0, %v4571
      %v4573 = vpop.f32.mrf.mxu0
      %4574 = vdwg.mxu0
      %v4575 = vadd.f32 %v4541, %v4572
      %s4576 = scalar_lea.vmem %s9, 112
      %v4577 = vld [vmem:[%s4576] sm:$0xf]
      %v4578 = vld [vmem:[%s4576 + $0x4] sm:$0xf]
      %v4579 = vld [vmem:[%s4576 + $0x8] sm:$0xf]
      %v4580 = vld [vmem:[%s4576 + $0xc] sm:$0xf]
      %v4582 = vunpack.c.l.b16 %v4326
      %v4583 = vpack.c.b16 %v4582, %v4582
      %v4584 = vrot.slane %v4583, 2
      %v4589 = vunpack.c.l.b16 %v4577
      %v4590 = vunpack.c.l.b16 %v4578
      %v4591 = vunpack.c.l.b16 %v4579
      %v4592 = vunpack.c.l.b16 %v4580
      %v4593 = vpack.c.b16 %v4590, %v4589
      %v4594 = vpack.c.b16 %v4592, %v4591
      %v4598 = vsel %vm4353, %v4584, 0
      %4600 = vmatpush.bf16.msra.mxu0 0
      %4601 = vmatpush.bf16.msra.mxu0 0
      %4602 = vmatpush.bf16.msra.mxu0 0
      %4603 = vmatpush.bf16.msra.mxu0 0
      %4604 = vmatpush.bf16.msra.mxu0 0
      %4605 = vmatpush.bf16.msra.mxu0 0
      %4606 = vmatpush.bf16.msra.mxu0 %v4594
      %4607 = vmatpush.bf16.msra.mxu0 %v4593
      %4608 = vmatmul.bf16.gmra.mxu0 %v4598
      %v4609 = vpop.f32.mrf.mxu0
      %v4610 = vadd.f32 0.0, %v4609
      %v4611 = vpop.f32.mrf.mxu0
      %4612 = vdwg.mxu0
      %v4613 = vadd.f32 %v4575, %v4610
      %s4614 = scalar_lea.vmem %s9, 128
      %v4615 = vld [vmem:[%s4614] sm:$0xf]
      %v4616 = vld [vmem:[%s4614 + $0x4] sm:$0xf]
      %v4617 = vld [vmem:[%s4614 + $0x8] sm:$0xf]
      %v4618 = vld [vmem:[%s4614 + $0xc] sm:$0xf]
      %v4623 = vunpack.c.l.b16 %v4615
      %v4624 = vunpack.c.l.b16 %v4616
      %v4625 = vunpack.c.l.b16 %v4617
      %v4626 = vunpack.c.l.b16 %v4618
      %v4627 = vpack.c.b16 %v4624, %v4623
      %v4628 = vpack.c.b16 %v4626, %v4625
      %v4632 = vsel %vm4353, %v4327, 0
      %4634 = vmatpush.bf16.msra.mxu0 0
      %4635 = vmatpush.bf16.msra.mxu0 0
      %4636 = vmatpush.bf16.msra.mxu0 0
      %4637 = vmatpush.bf16.msra.mxu0 0
      %4638 = vmatpush.bf16.msra.mxu0 0
      %4639 = vmatpush.bf16.msra.mxu0 0
      %4640 = vmatpush.bf16.msra.mxu0 %v4628
      %4641 = vmatpush.bf16.msra.mxu0 %v4627
      %4642 = vmatmul.bf16.gmra.mxu0 %v4632
      %v4643 = vpop.f32.mrf.mxu0
      %v4644 = vadd.f32 0.0, %v4643
      %v4645 = vpop.f32.mrf.mxu0
      %4646 = vdwg.mxu0
      %v4647 = vadd.f32 %v4613, %v4644
      %v4649 = vperm.slane %v4277, 0
      %v4651 = vmul.f32 %v4647, %v4649
      %v4653 = vperm.slane %v4276, 0
      %v4655 = vadd.f32 %v4651, %v4653
      %vm4656 = vcmp.ge.f32.partialorder %v4655, 0.0
      %v4657 = vmul.f32 %v4655, 0.2
      %v4658 = vsel %vm4656, %v4655, %v4657
      %v4659 = vpack.c.bf16 %v4658, %v4658
      %4660 = vmatpush.bf16.msra.mxu0 0
      %4661 = vmatpush.bf16.msra.mxu0 0
      %4662 = vmatpush.bf16.msra.mxu0 0
      %4663 = vmatpush.bf16.msra.mxu0 0
      %4664 = vmatpush.bf16.msra.mxu0 0
      %4665 = vmatpush.bf16.msra.mxu0 0
      %4666 = vmatpush.bf16.msra.mxu0 0
      %4667 = vmatpush.bf16.msra.mxu0 %v4270
      %4668 = vmatmul.bf16.gmra.mxu0 %v4292
      %v4669 = vpop.f32.mrf.mxu0
      %v4670 = vadd.f32 0.0, %v4669
      %v4671 = vpop.f32.mrf.mxu0
      %v4672 = vadd.f32 0.0, %v4671
      %4673 = vmatmul.bf16.gmra.mxu0 %v4295
      %v4674 = vpop.f32.mrf.mxu0
      %v4675 = vadd.f32 0.0, %v4674
      %v4676 = vpop.f32.mrf.mxu0
      %v4677 = vadd.f32 0.0, %v4676
      %4678 = vmatmul.bf16.gmra.mxu0 %v4298
      %v4679 = vpop.f32.mrf.mxu0
      %v4680 = vadd.f32 0.0, %v4679
      %v4681 = vpop.f32.mrf.mxu0
      %4682 = vdwg.mxu0
      %v4683 = vpack.c.bf16 %v4670, %v4670
      %v4684 = vpack.c.bf16 %v4672, %v4672
      %v4685 = vpack.c.bf16 %v4675, %v4675
      %v4686 = vpack.c.bf16 %v4677, %v4677
      %v4687 = vpack.c.bf16 %v4680, %v4680
      %v4689 = vunpack.c.l.b16 %v4683
      %v4690 = vpack.c.b16 %v4689, %v4689
      %v4691 = vrot.slane %v4690, 2
      %v4693 = vsel %vm4353, %v4691, 0
      %4695 = vmatpush.bf16.msra.mxu0 0
      %4696 = vmatpush.bf16.msra.mxu0 0
      %4697 = vmatpush.bf16.msra.mxu0 0
      %4698 = vmatpush.bf16.msra.mxu0 0
      %4699 = vmatpush.bf16.msra.mxu0 0
      %4700 = vmatpush.bf16.msra.mxu0 0
      %4701 = vmatpush.bf16.msra.mxu0 %v4350
      %4702 = vmatpush.bf16.msra.mxu0 %v4349
      %4703 = vmatmul.bf16.gmra.mxu0 %v4693
      %v4704 = vpop.f32.mrf.mxu0
      %v4705 = vadd.f32 0.0, %v4704
      %v4706 = vpop.f32.mrf.mxu0
      %4707 = vdwg.mxu0
      %v4709 = vsel %vm4353, %v4683, 0
      %4711 = vmatpush.bf16.msra.mxu0 0
      %4712 = vmatpush.bf16.msra.mxu0 0
      %4713 = vmatpush.bf16.msra.mxu0 0
      %4714 = vmatpush.bf16.msra.mxu0 0
      %4715 = vmatpush.bf16.msra.mxu0 0
      %4716 = vmatpush.bf16.msra.mxu0 0
      %4717 = vmatpush.bf16.msra.mxu0 %v4379
      %4718 = vmatpush.bf16.msra.mxu0 %v4378
      %4719 = vmatmul.bf16.gmra.mxu0 %v4709
      %v4720 = vpop.f32.mrf.mxu0
      %v4721 = vadd.f32 %v4705, %v4720
      %v4722 = vpop.f32.mrf.mxu0
      %4723 = vdwg.mxu0
      %v4725 = vsel %vm4353, %v4684, 0
      %4727 = vmatpush.bf16.msra.mxu0 0
      %4728 = vmatpush.bf16.msra.mxu0 0
      %4729 = vmatpush.bf16.msra.mxu0 0
      %4730 = vmatpush.bf16.msra.mxu0 0
      %4731 = vmatpush.bf16.msra.mxu0 0
      %4732 = vmatpush.bf16.msra.mxu0 0
      %4733 = vmatpush.bf16.msra.mxu0 %v4412
      %4734 = vmatpush.bf16.msra.mxu0 %v4411
      %4735 = vmatmul.bf16.gmra.mxu0 %v4725
      %v4736 = vpop.f32.mrf.mxu0
      %v4737 = vadd.f32 0.0, %v4736
      %v4738 = vpop.f32.mrf.mxu0
      %4739 = vdwg.mxu0
      %v4740 = vadd.f32 %v4721, %v4737
      %v4742 = vunpack.c.l.b16 %v4684
      %v4743 = vpack.c.b16 %v4742, %v4742
      %v4744 = vrot.slane %v4743, 2
      %v4746 = vsel %vm4353, %v4744, 0
      %4748 = vmatpush.bf16.msra.mxu0 0
      %4749 = vmatpush.bf16.msra.mxu0 0
      %4750 = vmatpush.bf16.msra.mxu0 0
      %4751 = vmatpush.bf16.msra.mxu0 0
      %4752 = vmatpush.bf16.msra.mxu0 0
      %4753 = vmatpush.bf16.msra.mxu0 0
      %4754 = vmatpush.bf16.msra.mxu0 %v4450
      %4755 = vmatpush.bf16.msra.mxu0 %v4449
      %4756 = vmatmul.bf16.gmra.mxu0 %v4746
      %v4757 = vpop.f32.mrf.mxu0
      %v4758 = vadd.f32 0.0, %v4757
      %v4759 = vpop.f32.mrf.mxu0
      %4760 = vdwg.mxu0
      %v4761 = vadd.f32 %v4740, %v4758
      %v4763 = vsel %vm4353, %v4685, 0
      %4765 = vmatpush.bf16.msra.mxu0 0
      %4766 = vmatpush.bf16.msra.mxu0 0
      %4767 = vmatpush.bf16.msra.mxu0 0
      %4768 = vmatpush.bf16.msra.mxu0 0
      %4769 = vmatpush.bf16.msra.mxu0 0
      %4770 = vmatpush.bf16.msra.mxu0 0
      %4771 = vmatpush.bf16.msra.mxu0 %v4484
      %4772 = vmatpush.bf16.msra.mxu0 %v4483
      %4773 = vmatmul.bf16.gmra.mxu0 %v4763
      %v4774 = vpop.f32.mrf.mxu0
      %v4775 = vadd.f32 0.0, %v4774
      %v4776 = vpop.f32.mrf.mxu0
      %4777 = vdwg.mxu0
      %v4778 = vadd.f32 %v4761, %v4775
      %v4780 = vunpack.c.l.b16 %v4685
      %v4781 = vpack.c.b16 %v4780, %v4780
      %v4782 = vrot.slane %v4781, 2
      %v4784 = vsel %vm4353, %v4782, 0
      %4786 = vmatpush.bf16.msra.mxu0 0
      %4787 = vmatpush.bf16.msra.mxu0 0
      %4788 = vmatpush.bf16.msra.mxu0 0
      %4789 = vmatpush.bf16.msra.mxu0 0
      %4790 = vmatpush.bf16.msra.mxu0 0
      %4791 = vmatpush.bf16.msra.mxu0 0
      %4792 = vmatpush.bf16.msra.mxu0 %v4522
      %4793 = vmatpush.bf16.msra.mxu0 %v4521
      %4794 = vmatmul.bf16.gmra.mxu0 %v4784
      %v4795 = vpop.f32.mrf.mxu0
      %v4796 = vadd.f32 0.0, %v4795
      %v4797 = vpop.f32.mrf.mxu0
      %4798 = vdwg.mxu0
      %v4799 = vadd.f32 %v4778, %v4796
      %v4801 = vsel %vm4353, %v4686, 0
      %4803 = vmatpush.bf16.msra.mxu0 0
      %4804 = vmatpush.bf16.msra.mxu0 0
      %4805 = vmatpush.bf16.msra.mxu0 0
      %4806 = vmatpush.bf16.msra.mxu0 0
      %4807 = vmatpush.bf16.msra.mxu0 0
      %4808 = vmatpush.bf16.msra.mxu0 0
      %4809 = vmatpush.bf16.msra.mxu0 %v4556
      %4810 = vmatpush.bf16.msra.mxu0 %v4555
      %4811 = vmatmul.bf16.gmra.mxu0 %v4801
      %v4812 = vpop.f32.mrf.mxu0
      %v4813 = vadd.f32 0.0, %v4812
      %v4814 = vpop.f32.mrf.mxu0
      %4815 = vdwg.mxu0
      %v4816 = vadd.f32 %v4799, %v4813
      %v4818 = vunpack.c.l.b16 %v4686
      %v4819 = vpack.c.b16 %v4818, %v4818
      %v4820 = vrot.slane %v4819, 2
      %v4822 = vsel %vm4353, %v4820, 0
      %4824 = vmatpush.bf16.msra.mxu0 0
      %4825 = vmatpush.bf16.msra.mxu0 0
      %4826 = vmatpush.bf16.msra.mxu0 0
      %4827 = vmatpush.bf16.msra.mxu0 0
      %4828 = vmatpush.bf16.msra.mxu0 0
      %4829 = vmatpush.bf16.msra.mxu0 0
      %4830 = vmatpush.bf16.msra.mxu0 %v4594
      %4831 = vmatpush.bf16.msra.mxu0 %v4593
      %4832 = vmatmul.bf16.gmra.mxu0 %v4822
      %v4833 = vpop.f32.mrf.mxu0
      %v4834 = vadd.f32 0.0, %v4833
      %v4835 = vpop.f32.mrf.mxu0
      %4836 = vdwg.mxu0
      %v4837 = vadd.f32 %v4816, %v4834
      %v4839 = vsel %vm4353, %v4687, 0
      %4841 = vmatpush.bf16.msra.mxu0 0
      %4842 = vmatpush.bf16.msra.mxu0 0
      %4843 = vmatpush.bf16.msra.mxu0 0
      %4844 = vmatpush.bf16.msra.mxu0 0
      %4845 = vmatpush.bf16.msra.mxu0 0
      %4846 = vmatpush.bf16.msra.mxu0 0
      %4847 = vmatpush.bf16.msra.mxu0 %v4628
      %4848 = vmatpush.bf16.msra.mxu0 %v4627
      %4849 = vmatmul.bf16.gmra.mxu0 %v4839
      %v4850 = vpop.f32.mrf.mxu0
      %v4851 = vadd.f32 0.0, %v4850
      %v4852 = vpop.f32.mrf.mxu0
      %4853 = vdwg.mxu0
      %v4854 = vadd.f32 %v4837, %v4851
      %v4855 = vmul.f32 %v4854, %v4649
      %v4856 = vadd.f32 %v4855, %v4653
      %vm4857 = vcmp.ge.f32.partialorder %v4856, 0.0
      %v4858 = vmul.f32 %v4856, 0.2
      %v4859 = vsel %vm4857, %v4856, %v4858
      %v4860 = vpack.c.bf16 %v4859, %v4859
      %v4861 = vld [vmem:[%s12] sm:$0xf]
      %v4862 = vld [vmem:[%s12 + $0x4] sm:$0x1]
      %v4863 = vld [vmem:[%s15] sm:$0x1]
      %v4864 = vld [vmem:[%s14] sm:$0x1]
      %v4867 = vunpack.c.l.b16 %v4861
      %v4868 = vunpack.c.l.b16 %v4862
      %v4869 = vpack.c.b16 %v4868, %v4867
      %v4871 = vsel %vm1647, %v4869, 0
      %v4874 = vsel %vm1660, %v4659, 0
      %4876 = vmatpush.bf16.msra.mxu0 0
      %4877 = vmatpush.bf16.msra.mxu0 0
      %4878 = vmatpush.bf16.msra.mxu0 0
      %4879 = vmatpush.bf16.msra.mxu0 0
      %4880 = vmatpush.bf16.msra.mxu0 0
      %4881 = vmatpush.bf16.msra.mxu0 0
      %4882 = vmatpush.bf16.msra.mxu0 0
      %4883 = vmatpush.bf16.msra.mxu0 %v4874
      %4884 = vmatmul.bf16.gmra.mxu0 %v4871
      %v4885 = vpop.f32.mrf.mxu0
      %v4886 = vadd.f32 0.0, %v4885
      %v4887 = vpop.f32.mrf.mxu0
      %v4888 = vadd.f32 0.0, %v4887
      %4889 = vdwg.mxu0
      %v4890 = vpack.c.bf16 %v4886, %v4886
      %v4891 = vpack.c.bf16 %v4888, %v4888
      %v4892 = vld [vmem:[%s13] sm:$0xf]
      %v4893 = vld [vmem:[%s13 + $0x4] sm:$0xf]
      %v4894 = vld [vmem:[%s13 + $0x8] sm:$0xf]
      %v4895 = vld [vmem:[%s13 + $0xc] sm:$0xf]
      %v4896 = vld [vmem:[%s13 + $0x10] sm:$0xf]
      %v4897 = vld [vmem:[%s13 + $0x14] sm:$0xf]
      %v4898 = vld [vmem:[%s13 + $0x18] sm:$0xf]
      %v4899 = vld [vmem:[%s13 + $0x1c] sm:$0xf]
      %s4900 = scalar_lea.vmem %s13, 32
      %v4901 = vld [vmem:[%s4900] sm:$0xf]
      %v4902 = vld [vmem:[%s4900 + $0x4] sm:$0xf]
      %v4903 = vld [vmem:[%s4900 + $0x8] sm:$0xf]
      %v4904 = vld [vmem:[%s4900 + $0xc] sm:$0xf]
      %v4905 = vld [vmem:[%s4900 + $0x10] sm:$0xf]
      %v4906 = vld [vmem:[%s4900 + $0x14] sm:$0xf]
      %v4907 = vld [vmem:[%s4900 + $0x18] sm:$0xf]
      %v4908 = vld [vmem:[%s4900 + $0x1c] sm:$0xf]
      %v4910 = vunpack.c.l.b16 %v4890
      %v4911 = vpack.c.b16 %v4910, %v4910
      %v4913 = vshrl.u32 %v4911, 16
      %v4923 = vunpack.c.l.b16 %v4901
      %v4924 = vunpack.c.l.b16 %v4902
      %v4925 = vunpack.c.l.b16 %v4903
      %v4926 = vunpack.c.l.b16 %v4904
      %v4927 = vunpack.c.l.b16 %v4905
      %v4928 = vunpack.c.l.b16 %v4906
      %v4929 = vunpack.c.l.b16 %v4907
      %v4930 = vunpack.c.l.b16 %v4908
      %v4931 = vpack.c.b16 %v4924, %v4923
      %v4932 = vpack.c.b16 %v4926, %v4925
      %v4933 = vpack.c.b16 %v4928, %v4927
      %v4934 = vpack.c.b16 %v4930, %v4929
      %v4940 = vsel %vm3566, %v4913, 0
      %4942 = vmatpush.bf16.msra.mxu0 0
      %4943 = vmatpush.bf16.msra.mxu0 0
      %4944 = vmatpush.bf16.msra.mxu0 0
      %4945 = vmatpush.bf16.msra.mxu0 0
      %4946 = vmatpush.bf16.msra.mxu0 %v4934
      %4947 = vmatpush.bf16.msra.mxu0 %v4933
      %4948 = vmatpush.bf16.msra.mxu0 %v4932
      %4949 = vmatpush.bf16.msra.mxu0 %v4931
      %4950 = vmatmul.bf16.gmra.mxu0 %v4940
      %v4951 = vpop.f32.mrf.mxu0
      %v4952 = vadd.f32 0.0, %v4951
      %v4953 = vpop.f32.mrf.mxu0
      %4954 = vdwg.mxu0
      %v4963 = vunpack.c.l.b16 %v4892
      %v4964 = vunpack.c.l.b16 %v4893
      %v4965 = vunpack.c.l.b16 %v4894
      %v4966 = vunpack.c.l.b16 %v4895
      %v4967 = vunpack.c.l.b16 %v4896
      %v4968 = vunpack.c.l.b16 %v4897
      %v4969 = vunpack.c.l.b16 %v4898
      %v4970 = vunpack.c.l.b16 %v4899
      %v4971 = vpack.c.b16 %v4964, %v4963
      %v4972 = vpack.c.b16 %v4966, %v4965
      %v4973 = vpack.c.b16 %v4968, %v4967
      %v4974 = vpack.c.b16 %v4970, %v4969
      %v4980 = vsel %vm3566, %v4890, 0
      %4982 = vmatpush.bf16.msra.mxu0 0
      %4983 = vmatpush.bf16.msra.mxu0 0
      %4984 = vmatpush.bf16.msra.mxu0 0
      %4985 = vmatpush.bf16.msra.mxu0 0
      %4986 = vmatpush.bf16.msra.mxu0 %v4974
      %4987 = vmatpush.bf16.msra.mxu0 %v4973
      %4988 = vmatpush.bf16.msra.mxu0 %v4972
      %4989 = vmatpush.bf16.msra.mxu0 %v4971
      %4990 = vmatmul.bf16.gmra.mxu0 %v4980
      %v4991 = vpop.f32.mrf.mxu0
      %v4992 = vadd.f32 %v4952, %v4991
      %v4993 = vpop.f32.mrf.mxu0
      %4994 = vdwg.mxu0
      %s4995 = scalar_lea.vmem %s13, 64
      %v4996 = vld [vmem:[%s4995] sm:$0xf]
      %v4997 = vld [vmem:[%s4995 + $0x4] sm:$0xf]
      %v4998 = vld [vmem:[%s4995 + $0x8] sm:$0xf]
      %v4999 = vld [vmem:[%s4995 + $0xc] sm:$0xf]
      %v5000 = vld [vmem:[%s4995 + $0x10] sm:$0xf]
      %v5001 = vld [vmem:[%s4995 + $0x14] sm:$0xf]
      %v5002 = vld [vmem:[%s4995 + $0x18] sm:$0xf]
      %v5003 = vld [vmem:[%s4995 + $0x1c] sm:$0xf]
      %v5004 = vrot.slane %v4911, 1
      %v5013 = vunpack.c.l.b16 %v4996
      %v5014 = vunpack.c.l.b16 %v4997
      %v5015 = vunpack.c.l.b16 %v4998
      %v5016 = vunpack.c.l.b16 %v4999
      %v5017 = vunpack.c.l.b16 %v5000
      %v5018 = vunpack.c.l.b16 %v5001
      %v5019 = vunpack.c.l.b16 %v5002
      %v5020 = vunpack.c.l.b16 %v5003
      %v5021 = vpack.c.b16 %v5014, %v5013
      %v5022 = vpack.c.b16 %v5016, %v5015
      %v5023 = vpack.c.b16 %v5018, %v5017
      %v5024 = vpack.c.b16 %v5020, %v5019
      %v5030 = vsel %vm3566, %v5004, 0
      %5032 = vmatpush.bf16.msra.mxu0 0
      %5033 = vmatpush.bf16.msra.mxu0 0
      %5034 = vmatpush.bf16.msra.mxu0 0
      %5035 = vmatpush.bf16.msra.mxu0 0
      %5036 = vmatpush.bf16.msra.mxu0 %v5024
      %5037 = vmatpush.bf16.msra.mxu0 %v5023
      %5038 = vmatpush.bf16.msra.mxu0 %v5022
      %5039 = vmatpush.bf16.msra.mxu0 %v5021
      %5040 = vmatmul.bf16.gmra.mxu0 %v5030
      %v5041 = vpop.f32.mrf.mxu0
      %v5042 = vadd.f32 0.0, %v5041
      %v5043 = vpop.f32.mrf.mxu0
      %5044 = vdwg.mxu0
      %v5045 = vadd.f32 %v4992, %v5042
      %s5046 = scalar_lea.vmem %s13, 96
      %v5047 = vld [vmem:[%s5046] sm:$0xf]
      %v5048 = vld [vmem:[%s5046 + $0x4] sm:$0xf]
      %v5049 = vld [vmem:[%s5046 + $0x8] sm:$0xf]
      %v5050 = vld [vmem:[%s5046 + $0xc] sm:$0xf]
      %v5051 = vld [vmem:[%s5046 + $0x10] sm:$0xf]
      %v5052 = vld [vmem:[%s5046 + $0x14] sm:$0xf]
      %v5053 = vld [vmem:[%s5046 + $0x18] sm:$0xf]
      %v5054 = vld [vmem:[%s5046 + $0x1c] sm:$0xf]
      %v5055 = vrot.slane %v4913, 1
      %v5064 = vunpack.c.l.b16 %v5047
      %v5065 = vunpack.c.l.b16 %v5048
      %v5066 = vunpack.c.l.b16 %v5049
      %v5067 = vunpack.c.l.b16 %v5050
      %v5068 = vunpack.c.l.b16 %v5051
      %v5069 = vunpack.c.l.b16 %v5052
      %v5070 = vunpack.c.l.b16 %v5053
      %v5071 = vunpack.c.l.b16 %v5054
      %v5072 = vpack.c.b16 %v5065, %v5064
      %v5073 = vpack.c.b16 %v5067, %v5066
      %v5074 = vpack.c.b16 %v5069, %v5068
      %v5075 = vpack.c.b16 %v5071, %v5070
      %v5081 = vsel %vm3566, %v5055, 0
      %5083 = vmatpush.bf16.msra.mxu0 0
      %5084 = vmatpush.bf16.msra.mxu0 0
      %5085 = vmatpush.bf16.msra.mxu0 0
      %5086 = vmatpush.bf16.msra.mxu0 0
      %5087 = vmatpush.bf16.msra.mxu0 %v5075
      %5088 = vmatpush.bf16.msra.mxu0 %v5074
      %5089 = vmatpush.bf16.msra.mxu0 %v5073
      %5090 = vmatpush.bf16.msra.mxu0 %v5072
      %5091 = vmatmul.bf16.gmra.mxu0 %v5081
      %v5092 = vpop.f32.mrf.mxu0
      %v5093 = vadd.f32 0.0, %v5092
      %v5094 = vpop.f32.mrf.mxu0
      %5095 = vdwg.mxu0
      %v5096 = vadd.f32 %v5045, %v5093
      %s5097 = scalar_lea.vmem %s13, 128
      %v5098 = vld [vmem:[%s5097] sm:$0xf]
      %v5099 = vld [vmem:[%s5097 + $0x4] sm:$0xf]
      %v5100 = vld [vmem:[%s5097 + $0x8] sm:$0xf]
      %v5101 = vld [vmem:[%s5097 + $0xc] sm:$0xf]
      %v5102 = vld [vmem:[%s5097 + $0x10] sm:$0xf]
      %v5103 = vld [vmem:[%s5097 + $0x14] sm:$0xf]
      %v5104 = vld [vmem:[%s5097 + $0x18] sm:$0xf]
      %v5105 = vld [vmem:[%s5097 + $0x1c] sm:$0xf]
      %v5106 = vrot.slane %v4911, 2
      %v5115 = vunpack.c.l.b16 %v5098
      %v5116 = vunpack.c.l.b16 %v5099
      %v5117 = vunpack.c.l.b16 %v5100
      %v5118 = vunpack.c.l.b16 %v5101
      %v5119 = vunpack.c.l.b16 %v5102
      %v5120 = vunpack.c.l.b16 %v5103
      %v5121 = vunpack.c.l.b16 %v5104
      %v5122 = vunpack.c.l.b16 %v5105
      %v5123 = vpack.c.b16 %v5116, %v5115
      %v5124 = vpack.c.b16 %v5118, %v5117
      %v5125 = vpack.c.b16 %v5120, %v5119
      %v5126 = vpack.c.b16 %v5122, %v5121
      %v5132 = vsel %vm3566, %v5106, 0
      %5134 = vmatpush.bf16.msra.mxu0 0
      %5135 = vmatpush.bf16.msra.mxu0 0
      %5136 = vmatpush.bf16.msra.mxu0 0
      %5137 = vmatpush.bf16.msra.mxu0 0
      %5138 = vmatpush.bf16.msra.mxu0 %v5126
      %5139 = vmatpush.bf16.msra.mxu0 %v5125
      %5140 = vmatpush.bf16.msra.mxu0 %v5124
      %5141 = vmatpush.bf16.msra.mxu0 %v5123
      %5142 = vmatmul.bf16.gmra.mxu0 %v5132
      %v5143 = vpop.f32.mrf.mxu0
      %v5144 = vadd.f32 0.0, %v5143
      %v5145 = vpop.f32.mrf.mxu0
      %5146 = vdwg.mxu0
      %v5147 = vadd.f32 %v5096, %v5144
      %s5148 = scalar_lea.vmem %s13, 160
      %v5149 = vld [vmem:[%s5148] sm:$0xf]
      %v5150 = vld [vmem:[%s5148 + $0x4] sm:$0xf]
      %v5151 = vld [vmem:[%s5148 + $0x8] sm:$0xf]
      %v5152 = vld [vmem:[%s5148 + $0xc] sm:$0xf]
      %v5153 = vld [vmem:[%s5148 + $0x10] sm:$0xf]
      %v5154 = vld [vmem:[%s5148 + $0x14] sm:$0xf]
      %v5155 = vld [vmem:[%s5148 + $0x18] sm:$0xf]
      %v5156 = vld [vmem:[%s5148 + $0x1c] sm:$0xf]
      %v5157 = vrot.slane %v4913, 2
      %v5166 = vunpack.c.l.b16 %v5149
      %v5167 = vunpack.c.l.b16 %v5150
      %v5168 = vunpack.c.l.b16 %v5151
      %v5169 = vunpack.c.l.b16 %v5152
      %v5170 = vunpack.c.l.b16 %v5153
      %v5171 = vunpack.c.l.b16 %v5154
      %v5172 = vunpack.c.l.b16 %v5155
      %v5173 = vunpack.c.l.b16 %v5156
      %v5174 = vpack.c.b16 %v5167, %v5166
      %v5175 = vpack.c.b16 %v5169, %v5168
      %v5176 = vpack.c.b16 %v5171, %v5170
      %v5177 = vpack.c.b16 %v5173, %v5172
      %v5183 = vsel %vm3566, %v5157, 0
      %5185 = vmatpush.bf16.msra.mxu0 0
      %5186 = vmatpush.bf16.msra.mxu0 0
      %5187 = vmatpush.bf16.msra.mxu0 0
      %5188 = vmatpush.bf16.msra.mxu0 0
      %5189 = vmatpush.bf16.msra.mxu0 %v5177
      %5190 = vmatpush.bf16.msra.mxu0 %v5176
      %5191 = vmatpush.bf16.msra.mxu0 %v5175
      %5192 = vmatpush.bf16.msra.mxu0 %v5174
      %5193 = vmatmul.bf16.gmra.mxu0 %v5183
      %v5194 = vpop.f32.mrf.mxu0
      %v5195 = vadd.f32 0.0, %v5194
      %v5196 = vpop.f32.mrf.mxu0
      %5197 = vdwg.mxu0
      %v5198 = vadd.f32 %v5147, %v5195
      %s5199 = scalar_lea.vmem %s13, 192
      %v5200 = vld [vmem:[%s5199] sm:$0xf]
      %v5201 = vld [vmem:[%s5199 + $0x4] sm:$0xf]
      %v5202 = vld [vmem:[%s5199 + $0x8] sm:$0xf]
      %v5203 = vld [vmem:[%s5199 + $0xc] sm:$0xf]
      %v5204 = vld [vmem:[%s5199 + $0x10] sm:$0xf]
      %v5205 = vld [vmem:[%s5199 + $0x14] sm:$0xf]
      %v5206 = vld [vmem:[%s5199 + $0x18] sm:$0xf]
      %v5207 = vld [vmem:[%s5199 + $0x1c] sm:$0xf]
      %v5208 = vrot.slane %v4911, 3
      %v5217 = vunpack.c.l.b16 %v5200
      %v5218 = vunpack.c.l.b16 %v5201
      %v5219 = vunpack.c.l.b16 %v5202
      %v5220 = vunpack.c.l.b16 %v5203
      %v5221 = vunpack.c.l.b16 %v5204
      %v5222 = vunpack.c.l.b16 %v5205
      %v5223 = vunpack.c.l.b16 %v5206
      %v5224 = vunpack.c.l.b16 %v5207
      %v5225 = vpack.c.b16 %v5218, %v5217
      %v5226 = vpack.c.b16 %v5220, %v5219
      %v5227 = vpack.c.b16 %v5222, %v5221
      %v5228 = vpack.c.b16 %v5224, %v5223
      %v5234 = vsel %vm3566, %v5208, 0
      %5236 = vmatpush.bf16.msra.mxu0 0
      %5237 = vmatpush.bf16.msra.mxu0 0
      %5238 = vmatpush.bf16.msra.mxu0 0
      %5239 = vmatpush.bf16.msra.mxu0 0
      %5240 = vmatpush.bf16.msra.mxu0 %v5228
      %5241 = vmatpush.bf16.msra.mxu0 %v5227
      %5242 = vmatpush.bf16.msra.mxu0 %v5226
      %5243 = vmatpush.bf16.msra.mxu0 %v5225
      %5244 = vmatmul.bf16.gmra.mxu0 %v5234
      %v5245 = vpop.f32.mrf.mxu0
      %v5246 = vadd.f32 0.0, %v5245
      %v5247 = vpop.f32.mrf.mxu0
      %5248 = vdwg.mxu0
      %v5249 = vadd.f32 %v5198, %v5246
      %s5250 = scalar_lea.vmem %s13, 224
      %v5251 = vld [vmem:[%s5250] sm:$0xf]
      %v5252 = vld [vmem:[%s5250 + $0x4] sm:$0xf]
      %v5253 = vld [vmem:[%s5250 + $0x8] sm:$0xf]
      %v5254 = vld [vmem:[%s5250 + $0xc] sm:$0xf]
      %v5255 = vld [vmem:[%s5250 + $0x10] sm:$0xf]
      %v5256 = vld [vmem:[%s5250 + $0x14] sm:$0xf]
      %v5257 = vld [vmem:[%s5250 + $0x18] sm:$0xf]
      %v5258 = vld [vmem:[%s5250 + $0x1c] sm:$0xf]
      %v5259 = vrot.slane %v4913, 3
      %v5268 = vunpack.c.l.b16 %v5251
      %v5269 = vunpack.c.l.b16 %v5252
      %v5270 = vunpack.c.l.b16 %v5253
      %v5271 = vunpack.c.l.b16 %v5254
      %v5272 = vunpack.c.l.b16 %v5255
      %v5273 = vunpack.c.l.b16 %v5256
      %v5274 = vunpack.c.l.b16 %v5257
      %v5275 = vunpack.c.l.b16 %v5258
      %v5276 = vpack.c.b16 %v5269, %v5268
      %v5277 = vpack.c.b16 %v5271, %v5270
      %v5278 = vpack.c.b16 %v5273, %v5272
      %v5279 = vpack.c.b16 %v5275, %v5274
      %v5285 = vsel %vm3566, %v5259, 0
      %5287 = vmatpush.bf16.msra.mxu0 0
      %5288 = vmatpush.bf16.msra.mxu0 0
      %5289 = vmatpush.bf16.msra.mxu0 0
      %5290 = vmatpush.bf16.msra.mxu0 0
      %5291 = vmatpush.bf16.msra.mxu0 %v5279
      %5292 = vmatpush.bf16.msra.mxu0 %v5278
      %5293 = vmatpush.bf16.msra.mxu0 %v5277
      %5294 = vmatpush.bf16.msra.mxu0 %v5276
      %5295 = vmatmul.bf16.gmra.mxu0 %v5285
      %v5296 = vpop.f32.mrf.mxu0
      %v5297 = vadd.f32 0.0, %v5296
      %v5298 = vpop.f32.mrf.mxu0
      %5299 = vdwg.mxu0
      %v5300 = vadd.f32 %v5249, %v5297
      %s5301 = scalar_lea.vmem %s13, 256
      %v5302 = vld [vmem:[%s5301] sm:$0xf]
      %v5303 = vld [vmem:[%s5301 + $0x4] sm:$0xf]
      %v5304 = vld [vmem:[%s5301 + $0x8] sm:$0xf]
      %v5305 = vld [vmem:[%s5301 + $0xc] sm:$0xf]
      %v5306 = vld [vmem:[%s5301 + $0x10] sm:$0xf]
      %v5307 = vld [vmem:[%s5301 + $0x14] sm:$0xf]
      %v5308 = vld [vmem:[%s5301 + $0x18] sm:$0xf]
      %v5309 = vld [vmem:[%s5301 + $0x1c] sm:$0xf]
      %v5318 = vunpack.c.l.b16 %v5302
      %v5319 = vunpack.c.l.b16 %v5303
      %v5320 = vunpack.c.l.b16 %v5304
      %v5321 = vunpack.c.l.b16 %v5305
      %v5322 = vunpack.c.l.b16 %v5306
      %v5323 = vunpack.c.l.b16 %v5307
      %v5324 = vunpack.c.l.b16 %v5308
      %v5325 = vunpack.c.l.b16 %v5309
      %v5326 = vpack.c.b16 %v5319, %v5318
      %v5327 = vpack.c.b16 %v5321, %v5320
      %v5328 = vpack.c.b16 %v5323, %v5322
      %v5329 = vpack.c.b16 %v5325, %v5324
      %v5335 = vsel %vm3566, %v4891, 0
      %5337 = vmatpush.bf16.msra.mxu0 0
      %5338 = vmatpush.bf16.msra.mxu0 0
      %5339 = vmatpush.bf16.msra.mxu0 0
      %5340 = vmatpush.bf16.msra.mxu0 0
      %5341 = vmatpush.bf16.msra.mxu0 %v5329
      %5342 = vmatpush.bf16.msra.mxu0 %v5328
      %5343 = vmatpush.bf16.msra.mxu0 %v5327
      %5344 = vmatpush.bf16.msra.mxu0 %v5326
      %5345 = vmatmul.bf16.gmra.mxu0 %v5335
      %v5346 = vpop.f32.mrf.mxu0
      %v5347 = vadd.f32 0.0, %v5346
      %v5348 = vpop.f32.mrf.mxu0
      %5349 = vdwg.mxu0
      %v5350 = vadd.f32 %v5300, %v5347
      %v5351 = vmul.f32 %v5350, %v4864
      %v5352 = vadd.f32 %v5351, %v4863
      %vm5353 = vcmp.ge.f32.partialorder %v5352, 0.0
      %v5354 = vmul.f32 %v5352, 0.2
      %v5355 = vsel %vm5353, %v5352, %v5354
      %v5356 = vpack.c.bf16 %v5355, %v5355
      %v5358 = vsel %vm1660, %v4860, 0
      %5360 = vmatpush.bf16.msra.mxu0 0
      %5361 = vmatpush.bf16.msra.mxu0 0
      %5362 = vmatpush.bf16.msra.mxu0 0
      %5363 = vmatpush.bf16.msra.mxu0 0
      %5364 = vmatpush.bf16.msra.mxu0 0
      %5365 = vmatpush.bf16.msra.mxu0 0
      %5366 = vmatpush.bf16.msra.mxu0 0
      %5367 = vmatpush.bf16.msra.mxu0 %v5358
      %5368 = vmatmul.bf16.gmra.mxu0 %v4871
      %v5369 = vpop.f32.mrf.mxu0
      %v5370 = vadd.f32 0.0, %v5369
      %v5371 = vpop.f32.mrf.mxu0
      %v5372 = vadd.f32 0.0, %v5371
      %5373 = vdwg.mxu0
      %v5374 = vpack.c.bf16 %v5370, %v5370
      %v5375 = vpack.c.bf16 %v5372, %v5372
      %v5377 = vunpack.c.l.b16 %v5374
      %v5378 = vpack.c.b16 %v5377, %v5377
      %v5380 = vshrl.u32 %v5378, 16
      %v5383 = vsel %vm3566, %v5380, 0
      %5385 = vmatpush.bf16.msra.mxu0 0
      %5386 = vmatpush.bf16.msra.mxu0 0
      %5387 = vmatpush.bf16.msra.mxu0 0
      %5388 = vmatpush.bf16.msra.mxu0 0
      %5389 = vmatpush.bf16.msra.mxu0 %v4934
      %5390 = vmatpush.bf16.msra.mxu0 %v4933
      %5391 = vmatpush.bf16.msra.mxu0 %v4932
      %5392 = vmatpush.bf16.msra.mxu0 %v4931
      %5393 = vmatmul.bf16.gmra.mxu0 %v5383
      %v5394 = vpop.f32.mrf.mxu0
      %v5395 = vadd.f32 0.0, %v5394
      %v5396 = vpop.f32.mrf.mxu0
      %5397 = vdwg.mxu0
      %v5399 = vsel %vm3566, %v5374, 0
      %5401 = vmatpush.bf16.msra.mxu0 0
      %5402 = vmatpush.bf16.msra.mxu0 0
      %5403 = vmatpush.bf16.msra.mxu0 0
      %5404 = vmatpush.bf16.msra.mxu0 0
      %5405 = vmatpush.bf16.msra.mxu0 %v4974
      %5406 = vmatpush.bf16.msra.mxu0 %v4973
      %5407 = vmatpush.bf16.msra.mxu0 %v4972
      %5408 = vmatpush.bf16.msra.mxu0 %v4971
      %5409 = vmatmul.bf16.gmra.mxu0 %v5399
      %v5410 = vpop.f32.mrf.mxu0
      %v5411 = vadd.f32 %v5395, %v5410
      %v5412 = vpop.f32.mrf.mxu0
      %5413 = vdwg.mxu0
      %v5414 = vrot.slane %v5378, 1
      %v5416 = vsel %vm3566, %v5414, 0
      %5418 = vmatpush.bf16.msra.mxu0 0
      %5419 = vmatpush.bf16.msra.mxu0 0
      %5420 = vmatpush.bf16.msra.mxu0 0
      %5421 = vmatpush.bf16.msra.mxu0 0
      %5422 = vmatpush.bf16.msra.mxu0 %v5024
      %5423 = vmatpush.bf16.msra.mxu0 %v5023
      %5424 = vmatpush.bf16.msra.mxu0 %v5022
      %5425 = vmatpush.bf16.msra.mxu0 %v5021
      %5426 = vmatmul.bf16.gmra.mxu0 %v5416
      %v5427 = vpop.f32.mrf.mxu0
      %v5428 = vadd.f32 0.0, %v5427
      %v5429 = vpop.f32.mrf.mxu0
      %5430 = vdwg.mxu0
      %v5431 = vadd.f32 %v5411, %v5428
      %v5432 = vrot.slane %v5380, 1
      %v5434 = vsel %vm3566, %v5432, 0
      %5436 = vmatpush.bf16.msra.mxu0 0
      %5437 = vmatpush.bf16.msra.mxu0 0
      %5438 = vmatpush.bf16.msra.mxu0 0
      %5439 = vmatpush.bf16.msra.mxu0 0
      %5440 = vmatpush.bf16.msra.mxu0 %v5075
      %5441 = vmatpush.bf16.msra.mxu0 %v5074
      %5442 = vmatpush.bf16.msra.mxu0 %v5073
      %5443 = vmatpush.bf16.msra.mxu0 %v5072
      %5444 = vmatmul.bf16.gmra.mxu0 %v5434
      %v5445 = vpop.f32.mrf.mxu0
      %v5446 = vadd.f32 0.0, %v5445
      %v5447 = vpop.f32.mrf.mxu0
      %5448 = vdwg.mxu0
      %v5449 = vadd.f32 %v5431, %v5446
      %v5450 = vrot.slane %v5378, 2
      %v5452 = vsel %vm3566, %v5450, 0
      %5454 = vmatpush.bf16.msra.mxu0 0
      %5455 = vmatpush.bf16.msra.mxu0 0
      %5456 = vmatpush.bf16.msra.mxu0 0
      %5457 = vmatpush.bf16.msra.mxu0 0
      %5458 = vmatpush.bf16.msra.mxu0 %v5126
      %5459 = vmatpush.bf16.msra.mxu0 %v5125
      %5460 = vmatpush.bf16.msra.mxu0 %v5124
      %5461 = vmatpush.bf16.msra.mxu0 %v5123
      %5462 = vmatmul.bf16.gmra.mxu0 %v5452
      %v5463 = vpop.f32.mrf.mxu0
      %v5464 = vadd.f32 0.0, %v5463
      %v5465 = vpop.f32.mrf.mxu0
      %5466 = vdwg.mxu0
      %v5467 = vadd.f32 %v5449, %v5464
      %v5468 = vrot.slane %v5380, 2
      %v5470 = vsel %vm3566, %v5468, 0
      %5472 = vmatpush.bf16.msra.mxu0 0
      %5473 = vmatpush.bf16.msra.mxu0 0
      %5474 = vmatpush.bf16.msra.mxu0 0
      %5475 = vmatpush.bf16.msra.mxu0 0
      %5476 = vmatpush.bf16.msra.mxu0 %v5177
      %5477 = vmatpush.bf16.msra.mxu0 %v5176
      %5478 = vmatpush.bf16.msra.mxu0 %v5175
      %5479 = vmatpush.bf16.msra.mxu0 %v5174
      %5480 = vmatmul.bf16.gmra.mxu0 %v5470
      %v5481 = vpop.f32.mrf.mxu0
      %v5482 = vadd.f32 0.0, %v5481
      %v5483 = vpop.f32.mrf.mxu0
      %5484 = vdwg.mxu0
      %v5485 = vadd.f32 %v5467, %v5482
      %v5486 = vrot.slane %v5378, 3
      %v5488 = vsel %vm3566, %v5486, 0
      %5490 = vmatpush.bf16.msra.mxu0 0
      %5491 = vmatpush.bf16.msra.mxu0 0
      %5492 = vmatpush.bf16.msra.mxu0 0
      %5493 = vmatpush.bf16.msra.mxu0 0
      %5494 = vmatpush.bf16.msra.mxu0 %v5228
      %5495 = vmatpush.bf16.msra.mxu0 %v5227
      %5496 = vmatpush.bf16.msra.mxu0 %v5226
      %5497 = vmatpush.bf16.msra.mxu0 %v5225
      %5498 = vmatmul.bf16.gmra.mxu0 %v5488
      %v5499 = vpop.f32.mrf.mxu0
      %v5500 = vadd.f32 0.0, %v5499
      %v5501 = vpop.f32.mrf.mxu0
      %5502 = vdwg.mxu0
      %v5503 = vadd.f32 %v5485, %v5500
      %v5504 = vrot.slane %v5380, 3
      %v5506 = vsel %vm3566, %v5504, 0
      %5508 = vmatpush.bf16.msra.mxu0 0
      %5509 = vmatpush.bf16.msra.mxu0 0
      %5510 = vmatpush.bf16.msra.mxu0 0
      %5511 = vmatpush.bf16.msra.mxu0 0
      %5512 = vmatpush.bf16.msra.mxu0 %v5279
      %5513 = vmatpush.bf16.msra.mxu0 %v5278
      %5514 = vmatpush.bf16.msra.mxu0 %v5277
      %5515 = vmatpush.bf16.msra.mxu0 %v5276
      %5516 = vmatmul.bf16.gmra.mxu0 %v5506
      %v5517 = vpop.f32.mrf.mxu0
      %v5518 = vadd.f32 0.0, %v5517
      %v5519 = vpop.f32.mrf.mxu0
      %5520 = vdwg.mxu0
      %v5521 = vadd.f32 %v5503, %v5518
      %v5523 = vsel %vm3566, %v5375, 0
      %5525 = vmatpush.bf16.msra.mxu0 0
      %5526 = vmatpush.bf16.msra.mxu0 0
      %5527 = vmatpush.bf16.msra.mxu0 0
      %5528 = vmatpush.bf16.msra.mxu0 0
      %5529 = vmatpush.bf16.msra.mxu0 %v5329
      %5530 = vmatpush.bf16.msra.mxu0 %v5328
      %5531 = vmatpush.bf16.msra.mxu0 %v5327
      %5532 = vmatpush.bf16.msra.mxu0 %v5326
      %5533 = vmatmul.bf16.gmra.mxu0 %v5523
      %v5534 = vpop.f32.mrf.mxu0
      %v5535 = vadd.f32 0.0, %v5534
      %v5536 = vpop.f32.mrf.mxu0
      %5537 = vdwg.mxu0
      %v5538 = vadd.f32 %v5521, %v5535
      %v5539 = vmul.f32 %v5538, %v4864
      %v5540 = vadd.f32 %v5539, %v4863
      %vm5541 = vcmp.ge.f32.partialorder %v5540, 0.0
      %v5542 = vmul.f32 %v5540, 0.2
      %v5543 = vsel %vm5541, %v5540, %v5542
      %v5544 = vpack.c.bf16 %v5543, %v5543
      %v5545 = vld [vmem:[%s17] sm:$0x1]
      %v5546 = vld [vmem:[%s16] sm:$0xf]
      %v5547 = vld [vmem:[%s16 + $0x4] sm:$0xf]
      %v5548 = vld [vmem:[%s16 + $0x8] sm:$0xf]
      %v5549 = vld [vmem:[%s16 + $0xc] sm:$0xf]
      %v5550 = vld [vmem:[%s16 + $0x10] sm:$0xf]
      %v5551 = vld [vmem:[%s16 + $0x14] sm:$0xf]
      %v5552 = vld [vmem:[%s16 + $0x18] sm:$0xf]
      %v5553 = vld [vmem:[%s16 + $0x1c] sm:$0xf]
      %v5554 = vld [vmem:[%s16 + $0x20] sm:$0xf]
      %v5555 = vld [vmem:[%s16 + $0x24] sm:$0xf]
      %v5556 = vld [vmem:[%s16 + $0x28] sm:$0xf]
      %v5557 = vld [vmem:[%s16 + $0x2c] sm:$0xf]
      %v5558 = vld [vmem:[%s16 + $0x30] sm:$0xf]
      %v5559 = vld [vmem:[%s16 + $0x34] sm:$0xf]
      %v5560 = vld [vmem:[%s16 + $0x38] sm:$0xf]
      %v5561 = vld [vmem:[%s16 + $0x3c] sm:$0xf]
      %v5578 = vunpack.c.l.b16 %v5546
      %v5579 = vunpack.c.l.b16 %v5547
      %v5580 = vunpack.c.l.b16 %v5548
      %v5581 = vunpack.c.l.b16 %v5549
      %v5582 = vunpack.c.l.b16 %v5550
      %v5583 = vunpack.c.l.b16 %v5551
      %v5584 = vunpack.c.l.b16 %v5552
      %v5585 = vunpack.c.l.b16 %v5553
      %v5586 = vunpack.c.l.b16 %v5554
      %v5587 = vunpack.c.l.b16 %v5555
      %v5588 = vunpack.c.l.b16 %v5556
      %v5589 = vunpack.c.l.b16 %v5557
      %v5590 = vunpack.c.l.b16 %v5558
      %v5591 = vunpack.c.l.b16 %v5559
      %v5592 = vunpack.c.l.b16 %v5560
      %v5593 = vunpack.c.l.b16 %v5561
      %v5594 = vpack.c.b16 %v5579, %v5578
      %v5595 = vpack.c.b16 %v5581, %v5580
      %v5596 = vpack.c.b16 %v5583, %v5582
      %v5597 = vpack.c.b16 %v5585, %v5584
      %v5598 = vpack.c.b16 %v5587, %v5586
      %v5599 = vpack.c.b16 %v5589, %v5588
      %v5600 = vpack.c.b16 %v5591, %v5590
      %v5601 = vpack.c.b16 %v5593, %v5592
      %5610 = vmatpush.bf16.msra.mxu0 %v5601
      %5611 = vmatpush.bf16.msra.mxu0 %v5600
      %5612 = vmatpush.bf16.msra.mxu0 %v5599
      %5613 = vmatpush.bf16.msra.mxu0 %v5598
      %5614 = vmatpush.bf16.msra.mxu0 %v5597
      %5615 = vmatpush.bf16.msra.mxu0 %v5596
      %5616 = vmatpush.bf16.msra.mxu0 %v5595
      %5617 = vmatpush.bf16.msra.mxu0 %v5594
      %5618 = vmatmul.bf16.gmra.mxu0 %v5356
      %v5619 = vpop.f32.mrf.mxu0
      %v5620 = vadd.f32 0.0, %v5619
      %v5621 = vpop.f32.mrf.mxu0
      %5622 = vdwg.mxu0
      %v5623 = vadd.f32 %v5545, %v5620
      %5624 = vmatpush.bf16.msra.mxu0 %v5601
      %5625 = vmatpush.bf16.msra.mxu0 %v5600
      %5626 = vmatpush.bf16.msra.mxu0 %v5599
      %5627 = vmatpush.bf16.msra.mxu0 %v5598
      %5628 = vmatpush.bf16.msra.mxu0 %v5597
      %5629 = vmatpush.bf16.msra.mxu0 %v5596
      %5630 = vmatpush.bf16.msra.mxu0 %v5595
      %5631 = vmatpush.bf16.msra.mxu0 %v5594
      %5632 = vmatmul.bf16.gmra.mxu0 %v5544
      %v5633 = vpop.f32.mrf.mxu0
      %v5634 = vadd.f32 0.0, %v5633
      %v5635 = vpop.f32.mrf.mxu0
      %5636 = vdwg.mxu0
      %v5637 = vadd.f32 %v5545, %v5634
      %v5639 = vperm.slane %v5637, 0
      %vm5641 = vcmask 1040384
      %v5642 = vsel %vm5641, %v5623, %v5639
      %vm5643 = vcmask 9216
      %5644 = vst.msk [vmem:[%s578] sm:$0x3] %vm5643, %v5642
      %p5645 = scmp.lt.s32.totalorder %s29, 1
      %s5646 = scalar_select %p5645, %s29, 1
      %s5647 = smul.addr %s5646, 2
      %s5648 = scalar_lea.vmem %s18, %s5647
      // Predicated region
      $region93: #{coupled_discriminators_forward.1} parent=91 // pred_check
        %p5649 = pneg %p430
      $region94: #{coupled_discriminators_forward.1} parent=91 // pred_check_branch
        %5651 = sbr.rel (%p5649) target = $region96
      $region95: #{coupled_discriminators_forward.1} parent=91 // pred_region
        _
      $region96: #{coupled_discriminators_forward.1} parent=91 // pred_fallthru
        _
    $region92: #{coupled_discriminators_forward.1} parent=5 // pred_fallthru
      _
    %p5652 = scmp.le.s32.totalorder 2, %s24
    // Predicated region
    $region97: #{coupled_discriminators_forward.1} parent=5 // pred_check
      %p5653 = pneg %p5652
    $region98: #{coupled_discriminators_forward.1} parent=5 // pred_check_branch
      %5655 = sbr.rel (%p5653) target = $region100
    $region99: #{coupled_discriminators_forward.1} parent=5 // pred_region
      %s5656 = ssub.s32 %s24, 2
      // Predicated region
      $region101: #{coupled_discriminators_forward.1} parent=99 // pred_check
        %p5657 = pneg %p436
      $region102: #{coupled_discriminators_forward.1} parent=99 // pred_check_branch
        %5659 = sbr.rel (%p5657) target = $region104
      $region103: #{coupled_discriminators_forward.1} parent=99 // pred_region
        %p5660 = scmp.lt.s32.totalorder %s30, 1
        %s5661 = scalar_select %p5660, %s30, 1
        %s5662 = smul.addr %s5661, 2
        %s5663 = scalar_lea.vmem %s18, %s5662
      $region104: #{coupled_discriminators_forward.1} parent=99 // pred_fallthru
        _
    $region100: #{coupled_discriminators_forward.1} parent=5 // pred_fallthru
      _
  $region6: #{coupled_discriminators_forward.1} parent=0 // loop_footer
    %s28 = sadd.s32 1, %s24
  $region7: #{coupled_discriminators_forward.1} parent=0 // loop_footer_branch
    %23 = sbr.rel target = $region3
  $region8: #{coupled_discriminators_forward.1} parent=0 // loop_exit
    _

</llo_original>
